<compile_context>
chip_gen: v5e
topology: v5e:2x2
jax: 0.10.0
libtpu: 0.0.40
codegen_flags: <defaults>
</compile_context>

<pallas_src>
import functools

import jax
import jax.numpy as jnp
from jax.experimental import pallas as pl
from jax.experimental.pallas import tpu as pltpu

BN_EPS = 1e-5
LANE = 128


def _round_up(v, m):
    return ((v + m - 1) // m) * m


def _pick_tile_h(h, w, cin_p, cout_p, budget_bytes=24 * 1024 * 1024):
    """Largest row-tile height that divides H and fits a VMEM budget."""
    wp = w + 2
    best = 1
    for th in range(1, h + 1):
        if h % th:
            continue
        vmem = (2 * (th + 2) * wp * cin_p * 4          # double-buffered input window
                + 2 * th * w * cout_p * 4              # double-buffered output block
                + th * w * (3 * cin_p + cout_p) * 4)   # im2col band + f32 accumulator
        if vmem <= budget_bytes:
            best = th
    if best == h and h % 2 == 0 and h > 1:
        best = h // 2   # keep >= 2 row tiles so the input DMA overlaps compute
    return best


def _conv_tile_kernel(xp_hbm, w_ref, scale_ref, shift_ref, y_ref, stats_ref,
                      xbuf, in_sem, *, full_h, apply_input_bn):
    """One (image, row-tile) step: 3x3 conv (pad=1, no bias) + BN partial stats.

    xp_hbm:    (N, H+2, W+2, Cin_p)  spatially zero-padded input, left in HBM.
    w_ref:     (9*Cin_p, Cout_p)     flattened HWIO weights (VMEM resident).
    scale_ref: (1, Cin_p)            BN scale applied to the *input* window
    shift_ref: (1, Cin_p)            (previous block's BN+ReLU, pass 2 only).
    y_ref:     (1, TH, W, Cout_p)    raw (pre-BN) conv output tile.
    stats_ref: (1, 1, 8, Cout_p)     row 0 = per-tile sum, row 1 = centred
                                     sum-of-squares (Chan-combined outside).
    xbuf:      (2, TH+2, W+2, Cin_p) double-buffered haloed input window.
    in_sem:    DMA semaphores, one per buffer slot.
    """
    _, th_p2, wp, cin_p = xbuf.shape
    th = th_p2 - 2
    w_out = wp - 2
    cout_p = w_ref.shape[1]

    n = pl.program_id(0)
    i = pl.program_id(1)
    num_row_tiles = pl.num_programs(1)
    slot = i % 2

    def window_copy(row_tile, slot_idx):
        return pltpu.make_async_copy(
            xp_hbm.at[n, pl.ds(row_tile * th, th + 2)],
            xbuf.at[slot_idx],
            in_sem.at[slot_idx])

    # First row tile of every image: nothing was prefetched yet.
    @pl.when(i == 0)
    def _():
        window_copy(i, slot).start()

    # Wait for this step's window (issued just above if i == 0, otherwise
    # prefetched by the previous row-tile step).
    window_copy(i, slot).wait()

    # Prefetch the next row tile of the same image while we compute.
    @pl.when(i + 1 < num_row_tiles)
    def _():
        window_copy(i + 1, 1 - slot).start()

    xview = xbuf.at[slot]

    if apply_input_bn:
        # The window holds the previous conv's *raw* output: apply BatchNorm
        # (precomputed scale/shift) + ReLU in place, and force this conv's
        # spatial zero-padding ring back to exact zeros.
        tile = xview[...]
        act = jnp.maximum(tile * scale_ref[0] + shift_ref[0], 0.0)
        row = jax.lax.broadcasted_iota(jnp.int32, tile.shape, 0) + i * th
        col = jax.lax.broadcasted_iota(jnp.int32, tile.shape, 1)
        interior = ((row > 0) & (row < full_h + 1) &
                    (col > 0) & (col < wp - 1))
        xview[...] = jnp.where(interior, act, 0.0)

    # 3x3 conv as three row-band im2col matmuls (K = 3*Cin_p each) on the MXU.
    acc = jnp.zeros((th * w_out, cout_p), jnp.float32)
    for dy in range(3):
        band = jnp.concatenate(
            [xview[dy:dy + th, dx:dx + w_out, :].reshape(th * w_out, cin_p)
             for dx in range(3)],
            axis=-1)
        acc = acc + jnp.dot(
            band, w_ref[dy * 3 * cin_p:(dy + 1) * 3 * cin_p, :],
            preferred_element_type=jnp.float32)
        # TODO(synk): optional bf16 matmul inputs (f32 accumulation) would ~2x
        # MXU throughput on v6e/v7x at a small accuracy cost.

    y_ref[...] = acc.reshape(1, th, w_out, cout_p)

    # Per-tile BatchNorm partials: sum and mean-centred sum of squares
    # (avoids E[x^2] - mean^2 cancellation; combined globally with Chan).
    tile_sum = jnp.sum(acc, axis=0)
    tile_mean = tile_sum * (1.0 / (th * w_out))
    tile_ssq = jnp.sum(jnp.square(acc - tile_mean), axis=0)
    stats = jnp.concatenate(
        [tile_sum[None, :], tile_ssq[None, :],
         jnp.zeros((6, cout_p), jnp.float32)], axis=0)
    stats_ref[...] = stats.reshape(1, 1, 8, cout_p)


def _conv_pass(xpad, w_flat, in_scale, in_shift, *, full_h, full_w, tile_h,
               apply_input_bn):
    n_img, _, wp, cin_p = xpad.shape
    k9, cout_p = w_flat.shape
    num_row_tiles = full_h // tile_h

    kernel = functools.partial(_conv_tile_kernel, full_h=full_h,
                               apply_input_bn=apply_input_bn)

    flops = 2 * n_img * full_h * full_w * k9 * cout_p
    bytes_accessed = 4 * (xpad.size + w_flat.size + in_scale.size +
                          in_shift.size + n_img * full_h * full_w * cout_p +
                          n_img * num_row_tiles * 8 * cout_p)

    return pl.pallas_call(
        kernel,
        out_shape=(
            jax.ShapeDtypeStruct((n_img, full_h, full_w, cout_p), jnp.float32),
            jax.ShapeDtypeStruct((n_img, num_row_tiles, 8, cout_p), jnp.float32),
        ),
        grid_spec=pltpu.PrefetchScalarGridSpec(
            num_scalar_prefetch=0,
            grid=(n_img, num_row_tiles),
            in_specs=[
                pl.BlockSpec(memory_space=pl.ANY),                  # input stays in HBM
                pl.BlockSpec((k9, cout_p), lambda n, i: (0, 0)),    # weights (resident)
                pl.BlockSpec((1, cin_p), lambda n, i: (0, 0)),      # input BN scale
                pl.BlockSpec((1, cin_p), lambda n, i: (0, 0)),      # input BN shift
            ],
            out_specs=[
                pl.BlockSpec((1, tile_h, full_w, cout_p),
                             lambda n, i: (n, i, 0, 0)),
                pl.BlockSpec((1, 1, 8, cout_p), lambda n, i: (n, i, 0, 0)),
            ],
            scratch_shapes=[
                pltpu.VMEM((2, tile_h + 2, wp, cin_p), jnp.float32),
                pltpu.SemaphoreType.DMA((2,)),
            ],
        ),
        compiler_params=pltpu.CompilerParams(
            dimension_semantics=("parallel", "arbitrary"),
            vmem_limit_bytes=48 * 1024 * 1024),
        cost_estimate=pl.CostEstimate(flops=flops, transcendentals=0,
                                      bytes_accessed=bytes_accessed),
    )(xpad, w_flat, in_scale, in_shift)


def _bn_scale_shift(stats, pixels_per_tile, gamma, beta):
    """Combine per-tile (sum, centred ssq) partials -> BN scale/shift vectors."""
    cout_p = stats.shape[-1]
    s = stats[..., 0, :].reshape(-1, cout_p)     # per-tile sums
    q = stats[..., 1, :].reshape(-1, cout_p)     # per-tile centred sq-sums
    n_t = float(pixels_per_tile)
    total = n_t * s.shape[0]
    mean = jnp.sum(s, axis=0) / total
    tile_mean = s / n_t
    ssq = jnp.sum(q + n_t * jnp.square(tile_mean - mean[None, :]), axis=0)
    var = jnp.maximum(ssq / total, 0.0)          # biased variance (BN training mode)
    inv_std = jax.lax.rsqrt(var + BN_EPS)
    scale = gamma * inv_std
    shift = beta - mean * scale
    return scale.reshape(1, -1), shift.reshape(1, -1)


def _flatten_weight(w_hwio, cin_p, cout_p):
    kh, kw, cin, cout = w_hwio.shape
    w = jnp.pad(w_hwio.astype(jnp.float32),
                ((0, 0), (0, 0), (0, cin_p - cin), (0, cout_p - cout)))
    return w.reshape(kh * kw * cin_p, cout_p)


@jax.jit
def double_conv(x_nchw, w1, g1, b1, w2, g2, b2):
    """Forward pass of Double_Conv.

    x_nchw: (N, Cin, H, W)      -- PyTorch layout
    w1:     (3, 3, Cin,  Cout)  -- HWIO
    w2:     (3, 3, Cout, Cout)  -- HWIO
    g*, b*: (1, Cout)           -- BN gamma / beta
    returns (N, Cout, H, W)
    """
    n, cin, h, w = x_nchw.shape
    cout = w1.shape[-1]
    cin_p = _round_up(cin, LANE)
    cout_p = _round_up(cout, LANE)

    w1f = _flatten_weight(w1, cin_p, cout_p)
    w2f = _flatten_weight(w2, cout_p, cout_p)
    g1p = jnp.pad(g1.reshape(-1).astype(jnp.float32), (0, cout_p - cout),
                  constant_values=1.0)
    b1p = jnp.pad(b1.reshape(-1).astype(jnp.float32), (0, cout_p - cout))
    g2p = jnp.pad(g2.reshape(-1).astype(jnp.float32), (0, cout_p - cout),
                  constant_values=1.0)
    b2p = jnp.pad(b2.reshape(-1).astype(jnp.float32), (0, cout_p - cout))

    # NCHW -> NHWC (channels on the 128-lane axis); pad channels to a multiple
    # of 128 and H/W by 1 (the first conv's zero padding).
    x = jnp.transpose(x_nchw, (0, 2, 3, 1)).astype(jnp.float32)
    xp = jnp.pad(x, ((0, 0), (1, 1), (1, 1), (0, cin_p - cin)))

    # ---- block 1: conv1 + streamed BN statistics --------------------------
    th1 = _pick_tile_h(h, w, cin_p, cout_p)
    ident_scale = jnp.ones((1, cin_p), jnp.float32)
    ident_shift = jnp.zeros((1, cin_p), jnp.float32)
    y1, st1 = _conv_pass(xp, w1f, ident_scale, ident_shift, full_h=h,
                         full_w=w, tile_h=th1, apply_input_bn=False)
    scale1, shift1 = _bn_scale_shift(st1, th1 * w, g1p, b1p)

    # ---- block 2: BN1 + ReLU1 fused into conv2 -----------------------------
    # TODO(synk): have pass 1 DMA its output directly into a spatially padded
    # layout so this XLA pad copy of the intermediate goes away.
    y1p = jnp.pad(y1, ((0, 0), (1, 1), (1, 1), (0, 0)))
    th2 = _pick_tile_h(h, w, cout_p, cout_p)
    y2, st2 = _conv_pass(y1p, w2f, scale1, shift1, full_h=h, full_w=w,
                         tile_h=th2, apply_input_bn=True)
    scale2, shift2 = _bn_scale_shift(st2, th2 * w, g2p, b2p)

    # ---- BN2 + ReLU2, channel un-pad, back to NCHW (one fused XLA pass) ----
    out = jnp.maximum(y2[..., :cout] * scale2[0, :cout] + shift2[0, :cout], 0.0)
    return jnp.transpose(out, (0, 3, 1, 2))


def _reference_double_conv(x_nchw, w1, g1, b1, w2, g2, b2):
    """Pure-JAX reference (same semantics) for verification."""
    def block(x_nhwc, w, g, b):
        y = jax.lax.conv_general_dilated(
            x_nhwc, w, window_strides=(1, 1), padding="SAME",
            dimension_numbers=("NHWC", "HWIO", "NHWC"))
        mean = jnp.mean(y, axis=(0, 1, 2))
        var = jnp.mean((y - mean) ** 2, axis=(0, 1, 2))
        y = (y - mean) * jax.lax.rsqrt(var + BN_EPS) * g.reshape(-1) + b.reshape(-1)
        return jnp.maximum(y, 0.0)

    x = jnp.transpose(x_nchw, (0, 2, 3, 1)).astype(jnp.float32)
    y = block(x, w1, g1, b1)
    z = block(y, w2, g2, b2)
    return jnp.transpose(z, (0, 3, 1, 2))


if __name__ == "__main__":
    N, Cin, Cout, H, W = 2, 4, 8, 16, 16

    key = jax.random.PRNGKey(0)
    kx, kw1, kw2 = jax.random.split(key, 3)

    # Input in PyTorch NCHW layout.
    x = jax.random.normal(kx, (N, Cin, H, W), dtype=jnp.float32)

    # Conv weights (synthetic, deterministic), stored HWIO for the NHWC kernel.
    w1 = jax.random.normal(kw1, (3, 3, Cin, Cout), dtype=jnp.float32) * 0.2
    w2 = jax.random.normal(kw2, (3, 3, Cout, Cout), dtype=jnp.float32) * 0.2

    # BatchNorm parameters at PyTorch default init: gamma=1, beta=0.
    g1 = jnp.ones((1, Cout), jnp.float32)
    b1 = jnp.zeros((1, Cout), jnp.float32)
    g2 = jnp.ones((1, Cout), jnp.float32)
    b2 = jnp.zeros((1, Cout), jnp.float32)

    out = double_conv(x, w1, g1, b1, w2, g2, b2)
    out = jax.block_until_ready(out)

    ref = _reference_double_conv(x, w1, g1, b1, w2, g2, b2)
    assert out.shape == (N, Cout, H, W), out.shape
    err = float(jnp.max(jnp.abs(out - ref)))
    assert jnp.allclose(out, ref, atol=5e-4, rtol=5e-4), err

    print("KERNEL_OK")
</pallas_src>

<mosaic_0001>
module attributes {stable_mosaic.version = 11 : i64} {
  func.func @_conv_tile_kernel(%arg0: i32, %arg1: i32, %arg2: memref<2x18x18x128xf32, #tpu.memory_space<any>>, %arg3: memref<1152x128xf32, #tpu.memory_space<vmem>>, %arg4: memref<1x128xf32, #tpu.memory_space<vmem>>, %arg5: memref<1x128xf32, #tpu.memory_space<vmem>>, %arg6: memref<1x8x16x128xf32, #tpu.memory_space<vmem>>, %arg7: memref<1x1x8x128xf32, #tpu.memory_space<vmem>>, %arg8: memref<2x10x18x128xf32, #tpu.memory_space<vmem>>, %arg9: memref<2x!tpu.dma_semaphore, #tpu.memory_space<semaphore_mem>>) attributes {dimension_semantics = [#tpu.dimension_semantics<parallel>, #tpu.dimension_semantics<arbitrary>], iteration_bounds = array<i64: 2, 2>, scalar_prefetch = 0 : i64, scratch_operands = 2 : i64, tpu.core_type = #tpu.core_type<tc>, window_params = [{}, {pipeline_mode = #tpu.pipeline_mode<synchronous>, transform_indices = @transform_1, window_bounds = array<i64: 1152, 128>}, {pipeline_mode = #tpu.pipeline_mode<synchronous>, transform_indices = @transform_2, window_bounds = array<i64: 1, 128>}, {pipeline_mode = #tpu.pipeline_mode<synchronous>, transform_indices = @transform_3, window_bounds = array<i64: 1, 128>}, {transform_indices = @transform_4, window_bounds = array<i64: 1, 8, 16, 128>}, {transform_indices = @transform_5, window_bounds = array<i64: 1, 1, 8, 128>}]} {
    %c2_i32 = arith.constant 2 : i32
    %c0_i32 = arith.constant 0 : i32
    %0 = arith.cmpi eq, %c2_i32, %c0_i32 : i32
    %c1_i32 = arith.constant 1 : i32
    %1 = arith.select %0, %c1_i32, %c2_i32 : i32
    %2 = arith.remsi %arg1, %1 : i32
    %c0_i32_0 = arith.constant 0 : i32
    %3 = arith.cmpi ne, %2, %c0_i32_0 : i32
    %c0_i32_1 = arith.constant 0 : i32
    %4 = arith.cmpi slt, %2, %c0_i32_1 : i32
    %c0_i32_2 = arith.constant 0 : i32
    %5 = arith.cmpi slt, %1, %c0_i32_2 : i32
    %6 = arith.xori %4, %5 : i1
    %7 = arith.andi %6, %3 : i1
    %8 = arith.addi %2, %1 : i32
    %9 = arith.select %7, %8, %2 : i32
    %c0_i32_3 = arith.constant 0 : i32
    %10 = arith.cmpi eq, %arg1, %c0_i32_3 : i32
    %11 = arith.extui %10 : i1 to i32
    %c0_i32_4 = arith.constant 0 : i32
    %12 = arith.cmpi ne, %11, %c0_i32_4 : i32
    scf.if %12 {
      %c8_i32_83 = arith.constant 8 : i32
      %89 = arith.muli %arg1, %c8_i32_83 : i32
      %c0_i32_84 = arith.constant 0 : i32
      %c0_i32_85 = arith.constant 0 : i32
      %90 = tpu.memref_slice %arg2[%arg0, %89, %c0_i32_84, %c0_i32_85] : memref<2x18x18x128xf32, #tpu.memory_space<any>> -> memref<1x10x18x128xf32, #tpu.memory_space<any>>
      %91 = tpu.memref_squeeze %90 : memref<1x10x18x128xf32, #tpu.memory_space<any>> -> memref<10x18x128xf32, #tpu.memory_space<any>>
      %c0_i32_86 = arith.constant 0 : i32
      %c0_i32_87 = arith.constant 0 : i32
      %c0_i32_88 = arith.constant 0 : i32
      %92 = tpu.memref_slice %arg8[%9, %c0_i32_86, %c0_i32_87, %c0_i32_88] : memref<2x10x18x128xf32, #tpu.memory_space<vmem>> -> memref<1x10x18x128xf32, #tpu.memory_space<vmem>>
      %93 = tpu.memref_squeeze %92 : memref<1x10x18x128xf32, #tpu.memory_space<vmem>> -> memref<10x18x128xf32, #tpu.memory_space<vmem>>
      %94 = tpu.memref_slice %arg9[%9] : memref<2x!tpu.dma_semaphore, #tpu.memory_space<semaphore_mem>> -> memref<1x!tpu.dma_semaphore, #tpu.memory_space<semaphore_mem>>
      %95 = tpu.memref_squeeze %94 : memref<1x!tpu.dma_semaphore, #tpu.memory_space<semaphore_mem>> -> memref<!tpu.dma_semaphore, #tpu.memory_space<semaphore_mem>>
      tpu.enqueue_dma source(%91 : memref<10x18x128xf32, #tpu.memory_space<any>>) target(%93 : memref<10x18x128xf32, #tpu.memory_space<vmem>>) target_semaphore(%95 : memref<!tpu.dma_semaphore, #tpu.memory_space<semaphore_mem>>)
    } else {
    }
    %c8_i32 = arith.constant 8 : i32
    %13 = arith.muli %arg1, %c8_i32 : i32
    %c0_i32_5 = arith.constant 0 : i32
    %c0_i32_6 = arith.constant 0 : i32
    %14 = tpu.memref_slice %arg2[%arg0, %13, %c0_i32_5, %c0_i32_6] : memref<2x18x18x128xf32, #tpu.memory_space<any>> -> memref<1x10x18x128xf32, #tpu.memory_space<any>>
    %15 = tpu.memref_squeeze %14 : memref<1x10x18x128xf32, #tpu.memory_space<any>> -> memref<10x18x128xf32, #tpu.memory_space<any>>
    %c0_i32_7 = arith.constant 0 : i32
    %c0_i32_8 = arith.constant 0 : i32
    %c0_i32_9 = arith.constant 0 : i32
    %16 = tpu.memref_slice %arg8[%9, %c0_i32_7, %c0_i32_8, %c0_i32_9] : memref<2x10x18x128xf32, #tpu.memory_space<vmem>> -> memref<1x10x18x128xf32, #tpu.memory_space<vmem>>
    %17 = tpu.memref_squeeze %16 : memref<1x10x18x128xf32, #tpu.memory_space<vmem>> -> memref<10x18x128xf32, #tpu.memory_space<vmem>>
    %18 = tpu.memref_slice %arg9[%9] : memref<2x!tpu.dma_semaphore, #tpu.memory_space<semaphore_mem>> -> memref<1x!tpu.dma_semaphore, #tpu.memory_space<semaphore_mem>>
    %19 = tpu.memref_squeeze %18 : memref<1x!tpu.dma_semaphore, #tpu.memory_space<semaphore_mem>> -> memref<!tpu.dma_semaphore, #tpu.memory_space<semaphore_mem>>
    tpu.wait_dma2 semaphore(%19 : memref<!tpu.dma_semaphore, #tpu.memory_space<semaphore_mem>>) src(%15 : memref<10x18x128xf32, #tpu.memory_space<any>>) dst(%17 : memref<10x18x128xf32, #tpu.memory_space<vmem>>)
    %c1_i32_10 = arith.constant 1 : i32
    %20 = arith.addi %arg1, %c1_i32_10 : i32
    %c2_i32_11 = arith.constant 2 : i32
    %21 = arith.cmpi slt, %20, %c2_i32_11 : i32
    %22 = arith.extui %21 : i1 to i32
    %c0_i32_12 = arith.constant 0 : i32
    %23 = arith.cmpi ne, %22, %c0_i32_12 : i32
    scf.if %23 {
      %c1_i32_83 = arith.constant 1 : i32
      %89 = arith.addi %arg1, %c1_i32_83 : i32
      %c1_i32_84 = arith.constant 1 : i32
      %90 = arith.subi %c1_i32_84, %9 : i32
      %c8_i32_85 = arith.constant 8 : i32
      %91 = arith.muli %89, %c8_i32_85 : i32
      %c0_i32_86 = arith.constant 0 : i32
      %c0_i32_87 = arith.constant 0 : i32
      %92 = tpu.memref_slice %arg2[%arg0, %91, %c0_i32_86, %c0_i32_87] : memref<2x18x18x128xf32, #tpu.memory_space<any>> -> memref<1x10x18x128xf32, #tpu.memory_space<any>>
      %93 = tpu.memref_squeeze %92 : memref<1x10x18x128xf32, #tpu.memory_space<any>> -> memref<10x18x128xf32, #tpu.memory_space<any>>
      %c0_i32_88 = arith.constant 0 : i32
      %c0_i32_89 = arith.constant 0 : i32
      %c0_i32_90 = arith.constant 0 : i32
      %94 = tpu.memref_slice %arg8[%90, %c0_i32_88, %c0_i32_89, %c0_i32_90] : memref<2x10x18x128xf32, #tpu.memory_space<vmem>> -> memref<1x10x18x128xf32, #tpu.memory_space<vmem>>
      %95 = tpu.memref_squeeze %94 : memref<1x10x18x128xf32, #tpu.memory_space<vmem>> -> memref<10x18x128xf32, #tpu.memory_space<vmem>>
      %96 = tpu.memref_slice %arg9[%90] : memref<2x!tpu.dma_semaphore, #tpu.memory_space<semaphore_mem>> -> memref<1x!tpu.dma_semaphore, #tpu.memory_space<semaphore_mem>>
      %97 = tpu.memref_squeeze %96 : memref<1x!tpu.dma_semaphore, #tpu.memory_space<semaphore_mem>> -> memref<!tpu.dma_semaphore, #tpu.memory_space<semaphore_mem>>
      tpu.enqueue_dma source(%93 : memref<10x18x128xf32, #tpu.memory_space<any>>) target(%95 : memref<10x18x128xf32, #tpu.memory_space<vmem>>) target_semaphore(%97 : memref<!tpu.dma_semaphore, #tpu.memory_space<semaphore_mem>>)
    } else {
    }
    %cst = arith.constant 0.000000e+00 : f32
    %24 = vector.broadcast %cst : f32 to vector<128x128xf32>
    %c0_i32_13 = arith.constant 0 : i32
    %c0_i32_14 = arith.constant 0 : i32
    %c0_i32_15 = arith.constant 0 : i32
    %25 = tpu.memref_slice %arg8[%9, %c0_i32_13, %c0_i32_14, %c0_i32_15] : memref<2x10x18x128xf32, #tpu.memory_space<vmem>> -> memref<1x10x18x128xf32, #tpu.memory_space<vmem>>
    %26 = tpu.memref_squeeze %25 : memref<1x10x18x128xf32, #tpu.memory_space<vmem>> -> memref<10x18x128xf32, #tpu.memory_space<vmem>>
    %c0 = arith.constant 0 : index
    %c0_16 = arith.constant 0 : index
    %c0_17 = arith.constant 0 : index
    %27 = vector.load %26[%c0, %c0_16, %c0_17] : memref<10x18x128xf32, #tpu.memory_space<vmem>>, vector<8x16x128xf32>
    %28 = vector.shape_cast %27 : vector<8x16x128xf32> to vector<128x128xf32>
    %c0_i32_18 = arith.constant 0 : i32
    %c0_i32_19 = arith.constant 0 : i32
    %c0_i32_20 = arith.constant 0 : i32
    %29 = tpu.memref_slice %arg8[%9, %c0_i32_18, %c0_i32_19, %c0_i32_20] : memref<2x10x18x128xf32, #tpu.memory_space<vmem>> -> memref<1x10x18x128xf32, #tpu.memory_space<vmem>>
    %30 = tpu.memref_squeeze %29 : memref<1x10x18x128xf32, #tpu.memory_space<vmem>> -> memref<10x18x128xf32, #tpu.memory_space<vmem>>
    %c0_21 = arith.constant 0 : index
    %c1 = arith.constant 1 : index
    %c0_22 = arith.constant 0 : index
    %31 = vector.load %30[%c0_21, %c1, %c0_22] : memref<10x18x128xf32, #tpu.memory_space<vmem>>, vector<8x16x128xf32>
    %32 = vector.shape_cast %31 : vector<8x16x128xf32> to vector<128x128xf32>
    %c0_i32_23 = arith.constant 0 : i32
    %c0_i32_24 = arith.constant 0 : i32
    %c0_i32_25 = arith.constant 0 : i32
    %33 = tpu.memref_slice %arg8[%9, %c0_i32_23, %c0_i32_24, %c0_i32_25] : memref<2x10x18x128xf32, #tpu.memory_space<vmem>> -> memref<1x10x18x128xf32, #tpu.memory_space<vmem>>
    %34 = tpu.memref_squeeze %33 : memref<1x10x18x128xf32, #tpu.memory_space<vmem>> -> memref<10x18x128xf32, #tpu.memory_space<vmem>>
    %c0_26 = arith.constant 0 : index
    %c2 = arith.constant 2 : index
    %c0_27 = arith.constant 0 : index
    %35 = vector.load %34[%c0_26, %c2, %c0_27] : memref<10x18x128xf32, #tpu.memory_space<vmem>>, vector<8x16x128xf32>
    %36 = vector.shape_cast %35 : vector<8x16x128xf32> to vector<128x128xf32>
    %37 = tpu.concatenate %28, %32, %36 in 1 : vector<128x128xf32>, vector<128x128xf32>, vector<128x128xf32> -> vector<128x384xf32>
    %c0_28 = arith.constant 0 : index
    %c0_29 = arith.constant 0 : index
    %38 = vector.load %arg3[%c0_28, %c0_29] : memref<1152x128xf32, #tpu.memory_space<vmem>>, vector<384x128xf32>
    %cst_30 = arith.constant dense<0.000000e+00> : vector<128x128xf32>
    %39 = tpu.matmul %37, %38, %cst_30 {dimension_numbers = #tpu.dot_dimension_numbers<[1], [0], [0], [1], [0, 0, 1, 1], [], []>} : vector<128x384xf32>, vector<384x128xf32>, vector<128x128xf32> -> vector<128x128xf32>
    %40 = arith.addf %24, %39 : vector<128x128xf32>
    %c0_i32_31 = arith.constant 0 : i32
    %c0_i32_32 = arith.constant 0 : i32
    %c0_i32_33 = arith.constant 0 : i32
    %41 = tpu.memref_slice %arg8[%9, %c0_i32_31, %c0_i32_32, %c0_i32_33] : memref<2x10x18x128xf32, #tpu.memory_space<vmem>> -> memref<1x10x18x128xf32, #tpu.memory_space<vmem>>
    %42 = tpu.memref_squeeze %41 : memref<1x10x18x128xf32, #tpu.memory_space<vmem>> -> memref<10x18x128xf32, #tpu.memory_space<vmem>>
    %c1_34 = arith.constant 1 : index
    %c0_35 = arith.constant 0 : index
    %c0_36 = arith.constant 0 : index
    %43 = vector.load %42[%c1_34, %c0_35, %c0_36] : memref<10x18x128xf32, #tpu.memory_space<vmem>>, vector<8x16x128xf32>
    %44 = vector.shape_cast %43 : vector<8x16x128xf32> to vector<128x128xf32>
    %c0_i32_37 = arith.constant 0 : i32
    %c0_i32_38 = arith.constant 0 : i32
    %c0_i32_39 = arith.constant 0 : i32
    %45 = tpu.memref_slice %arg8[%9, %c0_i32_37, %c0_i32_38, %c0_i32_39] : memref<2x10x18x128xf32, #tpu.memory_space<vmem>> -> memref<1x10x18x128xf32, #tpu.memory_space<vmem>>
    %46 = tpu.memref_squeeze %45 : memref<1x10x18x128xf32, #tpu.memory_space<vmem>> -> memref<10x18x128xf32, #tpu.memory_space<vmem>>
    %c1_40 = arith.constant 1 : index
    %c1_41 = arith.constant 1 : index
    %c0_42 = arith.constant 0 : index
    %47 = vector.load %46[%c1_40, %c1_41, %c0_42] : memref<10x18x128xf32, #tpu.memory_space<vmem>>, vector<8x16x128xf32>
    %48 = vector.shape_cast %47 : vector<8x16x128xf32> to vector<128x128xf32>
    %c0_i32_43 = arith.constant 0 : i32
    %c0_i32_44 = arith.constant 0 : i32
    %c0_i32_45 = arith.constant 0 : i32
    %49 = tpu.memref_slice %arg8[%9, %c0_i32_43, %c0_i32_44, %c0_i32_45] : memref<2x10x18x128xf32, #tpu.memory_space<vmem>> -> memref<1x10x18x128xf32, #tpu.memory_space<vmem>>
    %50 = tpu.memref_squeeze %49 : memref<1x10x18x128xf32, #tpu.memory_space<vmem>> -> memref<10x18x128xf32, #tpu.memory_space<vmem>>
    %c1_46 = arith.constant 1 : index
    %c2_47 = arith.constant 2 : index
    %c0_48 = arith.constant 0 : index
    %51 = vector.load %50[%c1_46, %c2_47, %c0_48] : memref<10x18x128xf32, #tpu.memory_space<vmem>>, vector<8x16x128xf32>
    %52 = vector.shape_cast %51 : vector<8x16x128xf32> to vector<128x128xf32>
    %53 = tpu.concatenate %44, %48, %52 in 1 : vector<128x128xf32>, vector<128x128xf32>, vector<128x128xf32> -> vector<128x384xf32>
    %c384 = arith.constant 384 : index
    %c0_49 = arith.constant 0 : index
    %54 = vector.load %arg3[%c384, %c0_49] : memref<1152x128xf32, #tpu.memory_space<vmem>>, vector<384x128xf32>
    %cst_50 = arith.constant dense<0.000000e+00> : vector<128x128xf32>
    %55 = tpu.matmul %53, %54, %cst_50 {dimension_numbers = #tpu.dot_dimension_numbers<[1], [0], [0], [1], [0, 0, 1, 1], [], []>} : vector<128x384xf32>, vector<384x128xf32>, vector<128x128xf32> -> vector<128x128xf32>
    %56 = arith.addf %40, %55 : vector<128x128xf32>
    %c0_i32_51 = arith.constant 0 : i32
    %c0_i32_52 = arith.constant 0 : i32
    %c0_i32_53 = arith.constant 0 : i32
    %57 = tpu.memref_slice %arg8[%9, %c0_i32_51, %c0_i32_52, %c0_i32_53] : memref<2x10x18x128xf32, #tpu.memory_space<vmem>> -> memref<1x10x18x128xf32, #tpu.memory_space<vmem>>
    %58 = tpu.memref_squeeze %57 : memref<1x10x18x128xf32, #tpu.memory_space<vmem>> -> memref<10x18x128xf32, #tpu.memory_space<vmem>>
    %c2_54 = arith.constant 2 : index
    %c0_55 = arith.constant 0 : index
    %c0_56 = arith.constant 0 : index
    %59 = vector.load %58[%c2_54, %c0_55, %c0_56] : memref<10x18x128xf32, #tpu.memory_space<vmem>>, vector<8x16x128xf32>
    %60 = vector.shape_cast %59 : vector<8x16x128xf32> to vector<128x128xf32>
    %c0_i32_57 = arith.constant 0 : i32
    %c0_i32_58 = arith.constant 0 : i32
    %c0_i32_59 = arith.constant 0 : i32
    %61 = tpu.memref_slice %arg8[%9, %c0_i32_57, %c0_i32_58, %c0_i32_59] : memref<2x10x18x128xf32, #tpu.memory_space<vmem>> -> memref<1x10x18x128xf32, #tpu.memory_space<vmem>>
    %62 = tpu.memref_squeeze %61 : memref<1x10x18x128xf32, #tpu.memory_space<vmem>> -> memref<10x18x128xf32, #tpu.memory_space<vmem>>
    %c2_60 = arith.constant 2 : index
    %c1_61 = arith.constant 1 : index
    %c0_62 = arith.constant 0 : index
    %63 = vector.load %62[%c2_60, %c1_61, %c0_62] : memref<10x18x128xf32, #tpu.memory_space<vmem>>, vector<8x16x128xf32>
    %64 = vector.shape_cast %63 : vector<8x16x128xf32> to vector<128x128xf32>
    %c0_i32_63 = arith.constant 0 : i32
    %c0_i32_64 = arith.constant 0 : i32
    %c0_i32_65 = arith.constant 0 : i32
    %65 = tpu.memref_slice %arg8[%9, %c0_i32_63, %c0_i32_64, %c0_i32_65] : memref<2x10x18x128xf32, #tpu.memory_space<vmem>> -> memref<1x10x18x128xf32, #tpu.memory_space<vmem>>
    %66 = tpu.memref_squeeze %65 : memref<1x10x18x128xf32, #tpu.memory_space<vmem>> -> memref<10x18x128xf32, #tpu.memory_space<vmem>>
    %c2_66 = arith.constant 2 : index
    %c2_67 = arith.constant 2 : index
    %c0_68 = arith.constant 0 : index
    %67 = vector.load %66[%c2_66, %c2_67, %c0_68] : memref<10x18x128xf32, #tpu.memory_space<vmem>>, vector<8x16x128xf32>
    %68 = vector.shape_cast %67 : vector<8x16x128xf32> to vector<128x128xf32>
    %69 = tpu.concatenate %60, %64, %68 in 1 : vector<128x128xf32>, vector<128x128xf32>, vector<128x128xf32> -> vector<128x384xf32>
    %c768 = arith.constant 768 : index
    %c0_69 = arith.constant 0 : index
    %70 = vector.load %arg3[%c768, %c0_69] : memref<1152x128xf32, #tpu.memory_space<vmem>>, vector<384x128xf32>
    %cst_70 = arith.constant dense<0.000000e+00> : vector<128x128xf32>
    %71 = tpu.matmul %69, %70, %cst_70 {dimension_numbers = #tpu.dot_dimension_numbers<[1], [0], [0], [1], [0, 0, 1, 1], [], []>} : vector<128x384xf32>, vector<384x128xf32>, vector<128x128xf32> -> vector<128x128xf32>
    %72 = arith.addf %56, %71 : vector<128x128xf32>
    %73 = vector.shape_cast %72 : vector<128x128xf32> to vector<1x8x16x128xf32>
    %c0_71 = arith.constant 0 : index
    %c0_72 = arith.constant 0 : index
    %c0_73 = arith.constant 0 : index
    %c0_74 = arith.constant 0 : index
    %74 = vector.load %arg6[%c0_71, %c0_72, %c0_73, %c0_74] : memref<1x8x16x128xf32, #tpu.memory_space<vmem>>, vector<1x8x16x128xf32>
    tpu.vector_store %arg6[%c0_71, %c0_72, %c0_73, %c0_74], %73 {strides = array<i32>} : memref<1x8x16x128xf32, #tpu.memory_space<vmem>>, vector<1x8x16x128xf32>,
    %cst_75 = arith.constant dense<0.000000e+00> : vector<128xf32>
    %75 = vector.multi_reduction <add>, %72, %cst_75 [0] : vector<128x128xf32> to vector<128xf32>
    %cst_76 = arith.constant 7.812500e-03 : f32
    %76 = vector.broadcast %cst_76 : f32 to vector<128xf32>
    %77 = arith.mulf %75, %76 : vector<128xf32>
    %78 = vector.shape_cast %77 : vector<128xf32> to vector<1x128xf32>
    %79 = vector.broadcast %78 : vector<1x128xf32> to vector<128x128xf32>
    %80 = arith.subf %72, %79 : vector<128x128xf32>
    %81 = arith.mulf %80, %80 : vector<128x128xf32>
    %cst_77 = arith.constant dense<0.000000e+00> : vector<128xf32>
    %82 = vector.multi_reduction <add>, %81, %cst_77 [0] : vector<128x128xf32> to vector<128xf32>
    %83 = vector.shape_cast %75 : vector<128xf32> to vector<1x128xf32>
    %84 = vector.shape_cast %82 : vector<128xf32> to vector<1x128xf32>
    %cst_78 = arith.constant 0.000000e+00 : f32
    %85 = vector.broadcast %cst_78 : f32 to vector<6x128xf32>
    %86 = tpu.concatenate %83, %84, %85 in 0 : vector<1x128xf32>, vector<1x128xf32>, vector<6x128xf32> -> vector<8x128xf32>
    %87 = vector.shape_cast %86 : vector<8x128xf32> to vector<1x1x8x128xf32>
    %c0_79 = arith.constant 0 : index
    %c0_80 = arith.constant 0 : index
    %c0_81 = arith.constant 0 : index
    %c0_82 = arith.constant 0 : index
    %88 = vector.load %arg7[%c0_79, %c0_80, %c0_81, %c0_82] : memref<1x1x8x128xf32, #tpu.memory_space<vmem>>, vector<1x1x8x128xf32>
    tpu.vector_store %arg7[%c0_79, %c0_80, %c0_81, %c0_82], %87 {strides = array<i32>} : memref<1x1x8x128xf32, #tpu.memory_space<vmem>>, vector<1x1x8x128xf32>,
    return
  }
  func.func @transform_1(%arg0: i32, %arg1: i32) -> (i32, i32) {
    %c0_i32 = arith.constant 0 : i32
    %c0_i32_0 = arith.constant 0 : i32
    %c0_i32_1 = arith.constant 0 : i32
    return %c0_i32, %c0_i32_0 : i32, i32
  }
  func.func @transform_2(%arg0: i32, %arg1: i32) -> (i32, i32) {
    %c0_i32 = arith.constant 0 : i32
    %c0_i32_0 = arith.constant 0 : i32
    %c0_i32_1 = arith.constant 0 : i32
    return %c0_i32, %c0_i32_0 : i32, i32
  }
  func.func @transform_3(%arg0: i32, %arg1: i32) -> (i32, i32) {
    %c0_i32 = arith.constant 0 : i32
    %c0_i32_0 = arith.constant 0 : i32
    %c0_i32_1 = arith.constant 0 : i32
    return %c0_i32, %c0_i32_0 : i32, i32
  }
  func.func @transform_4(%arg0: i32, %arg1: i32) -> (i32, i32, i32, i32) {
    %c0_i32 = arith.constant 0 : i32
    %c0_i32_0 = arith.constant 0 : i32
    %c0_i32_1 = arith.constant 0 : i32
    return %arg0, %arg1, %c0_i32, %c0_i32_0 : i32, i32, i32, i32
  }
  func.func @transform_5(%arg0: i32, %arg1: i32) -> (i32, i32, i32, i32) {
    %c0_i32 = arith.constant 0 : i32
    %c0_i32_0 = arith.constant 0 : i32
    %c0_i32_1 = arith.constant 0 : i32
    return %arg0, %arg1, %c0_i32, %c0_i32_0 : i32, i32, i32, i32
  }
}

module attributes {stable_mosaic.version = 11 : i64} {
  func.func @_conv_tile_kernel(%arg0: i32, %arg1: i32, %arg2: memref<2x18x18x128xf32, #tpu.memory_space<any>>, %arg3: memref<1152x128xf32, #tpu.memory_space<vmem>>, %arg4: memref<1x128xf32, #tpu.memory_space<vmem>>, %arg5: memref<1x128xf32, #tpu.memory_space<vmem>>, %arg6: memref<1x8x16x128xf32, #tpu.memory_space<vmem>>, %arg7: memref<1x1x8x128xf32, #tpu.memory_space<vmem>>, %arg8: memref<2x10x18x128xf32, #tpu.memory_space<vmem>>, %arg9: memref<2x!tpu.dma_semaphore, #tpu.memory_space<semaphore_mem>>) attributes {dimension_semantics = [#tpu.dimension_semantics<parallel>, #tpu.dimension_semantics<arbitrary>], iteration_bounds = array<i64: 2, 2>, scalar_prefetch = 0 : i64, scratch_operands = 2 : i64, tpu.core_type = #tpu.core_type<tc>, window_params = [{}, {pipeline_mode = #tpu.pipeline_mode<synchronous>, transform_indices = @transform_1, window_bounds = array<i64: 1152, 128>}, {pipeline_mode = #tpu.pipeline_mode<synchronous>, transform_indices = @transform_2, window_bounds = array<i64: 1, 128>}, {pipeline_mode = #tpu.pipeline_mode<synchronous>, transform_indices = @transform_3, window_bounds = array<i64: 1, 128>}, {transform_indices = @transform_4, window_bounds = array<i64: 1, 8, 16, 128>}, {transform_indices = @transform_5, window_bounds = array<i64: 1, 1, 8, 128>}]} {
    %c2_i32 = arith.constant 2 : i32
    %c0_i32 = arith.constant 0 : i32
    %0 = arith.cmpi eq, %c2_i32, %c0_i32 : i32
    %c1_i32 = arith.constant 1 : i32
    %1 = arith.select %0, %c1_i32, %c2_i32 : i32
    %2 = arith.remsi %arg1, %1 : i32
    %c0_i32_0 = arith.constant 0 : i32
    %3 = arith.cmpi ne, %2, %c0_i32_0 : i32
    %c0_i32_1 = arith.constant 0 : i32
    %4 = arith.cmpi slt, %2, %c0_i32_1 : i32
    %c0_i32_2 = arith.constant 0 : i32
    %5 = arith.cmpi slt, %1, %c0_i32_2 : i32
    %6 = arith.xori %4, %5 : i1
    %7 = arith.andi %6, %3 : i1
    %8 = arith.addi %2, %1 : i32
    %9 = arith.select %7, %8, %2 : i32
    %c0_i32_3 = arith.constant 0 : i32
    %10 = arith.cmpi eq, %arg1, %c0_i32_3 : i32
    %11 = arith.extui %10 : i1 to i32
    %c0_i32_4 = arith.constant 0 : i32
    %12 = arith.cmpi ne, %11, %c0_i32_4 : i32
    scf.if %12 {
      %c8_i32_99 = arith.constant 8 : i32
      %126 = arith.muli %arg1, %c8_i32_99 : i32
      %c0_i32_100 = arith.constant 0 : i32
      %c0_i32_101 = arith.constant 0 : i32
      %127 = tpu.memref_slice %arg2[%arg0, %126, %c0_i32_100, %c0_i32_101] : memref<2x18x18x128xf32, #tpu.memory_space<any>> -> memref<1x10x18x128xf32, #tpu.memory_space<any>>
      %128 = tpu.memref_squeeze %127 : memref<1x10x18x128xf32, #tpu.memory_space<any>> -> memref<10x18x128xf32, #tpu.memory_space<any>>
      %c0_i32_102 = arith.constant 0 : i32
      %c0_i32_103 = arith.constant 0 : i32
      %c0_i32_104 = arith.constant 0 : i32
      %129 = tpu.memref_slice %arg8[%9, %c0_i32_102, %c0_i32_103, %c0_i32_104] : memref<2x10x18x128xf32, #tpu.memory_space<vmem>> -> memref<1x10x18x128xf32, #tpu.memory_space<vmem>>
      %130 = tpu.memref_squeeze %129 : memref<1x10x18x128xf32, #tpu.memory_space<vmem>> -> memref<10x18x128xf32, #tpu.memory_space<vmem>>
      %131 = tpu.memref_slice %arg9[%9] : memref<2x!tpu.dma_semaphore, #tpu.memory_space<semaphore_mem>> -> memref<1x!tpu.dma_semaphore, #tpu.memory_space<semaphore_mem>>
      %132 = tpu.memref_squeeze %131 : memref<1x!tpu.dma_semaphore, #tpu.memory_space<semaphore_mem>> -> memref<!tpu.dma_semaphore, #tpu.memory_space<semaphore_mem>>
      tpu.enqueue_dma source(%128 : memref<10x18x128xf32, #tpu.memory_space<any>>) target(%130 : memref<10x18x128xf32, #tpu.memory_space<vmem>>) target_semaphore(%132 : memref<!tpu.dma_semaphore, #tpu.memory_space<semaphore_mem>>)
    } else {
    }
    %c8_i32 = arith.constant 8 : i32
    %13 = arith.muli %arg1, %c8_i32 : i32
    %c0_i32_5 = arith.constant 0 : i32
    %c0_i32_6 = arith.constant 0 : i32
    %14 = tpu.memref_slice %arg2[%arg0, %13, %c0_i32_5, %c0_i32_6] : memref<2x18x18x128xf32, #tpu.memory_space<any>> -> memref<1x10x18x128xf32, #tpu.memory_space<any>>
    %15 = tpu.memref_squeeze %14 : memref<1x10x18x128xf32, #tpu.memory_space<any>> -> memref<10x18x128xf32, #tpu.memory_space<any>>
    %c0_i32_7 = arith.constant 0 : i32
    %c0_i32_8 = arith.constant 0 : i32
    %c0_i32_9 = arith.constant 0 : i32
    %16 = tpu.memref_slice %arg8[%9, %c0_i32_7, %c0_i32_8, %c0_i32_9] : memref<2x10x18x128xf32, #tpu.memory_space<vmem>> -> memref<1x10x18x128xf32, #tpu.memory_space<vmem>>
    %17 = tpu.memref_squeeze %16 : memref<1x10x18x128xf32, #tpu.memory_space<vmem>> -> memref<10x18x128xf32, #tpu.memory_space<vmem>>
    %18 = tpu.memref_slice %arg9[%9] : memref<2x!tpu.dma_semaphore, #tpu.memory_space<semaphore_mem>> -> memref<1x!tpu.dma_semaphore, #tpu.memory_space<semaphore_mem>>
    %19 = tpu.memref_squeeze %18 : memref<1x!tpu.dma_semaphore, #tpu.memory_space<semaphore_mem>> -> memref<!tpu.dma_semaphore, #tpu.memory_space<semaphore_mem>>
    tpu.wait_dma2 semaphore(%19 : memref<!tpu.dma_semaphore, #tpu.memory_space<semaphore_mem>>) src(%15 : memref<10x18x128xf32, #tpu.memory_space<any>>) dst(%17 : memref<10x18x128xf32, #tpu.memory_space<vmem>>)
    %c1_i32_10 = arith.constant 1 : i32
    %20 = arith.addi %arg1, %c1_i32_10 : i32
    %c2_i32_11 = arith.constant 2 : i32
    %21 = arith.cmpi slt, %20, %c2_i32_11 : i32
    %22 = arith.extui %21 : i1 to i32
    %c0_i32_12 = arith.constant 0 : i32
    %23 = arith.cmpi ne, %22, %c0_i32_12 : i32
    scf.if %23 {
      %c1_i32_99 = arith.constant 1 : i32
      %126 = arith.addi %arg1, %c1_i32_99 : i32
      %c1_i32_100 = arith.constant 1 : i32
      %127 = arith.subi %c1_i32_100, %9 : i32
      %c8_i32_101 = arith.constant 8 : i32
      %128 = arith.muli %126, %c8_i32_101 : i32
      %c0_i32_102 = arith.constant 0 : i32
      %c0_i32_103 = arith.constant 0 : i32
      %129 = tpu.memref_slice %arg2[%arg0, %128, %c0_i32_102, %c0_i32_103] : memref<2x18x18x128xf32, #tpu.memory_space<any>> -> memref<1x10x18x128xf32, #tpu.memory_space<any>>
      %130 = tpu.memref_squeeze %129 : memref<1x10x18x128xf32, #tpu.memory_space<any>> -> memref<10x18x128xf32, #tpu.memory_space<any>>
      %c0_i32_104 = arith.constant 0 : i32
      %c0_i32_105 = arith.constant 0 : i32
      %c0_i32_106 = arith.constant 0 : i32
      %131 = tpu.memref_slice %arg8[%127, %c0_i32_104, %c0_i32_105, %c0_i32_106] : memref<2x10x18x128xf32, #tpu.memory_space<vmem>> -> memref<1x10x18x128xf32, #tpu.memory_space<vmem>>
      %132 = tpu.memref_squeeze %131 : memref<1x10x18x128xf32, #tpu.memory_space<vmem>> -> memref<10x18x128xf32, #tpu.memory_space<vmem>>
      %133 = tpu.memref_slice %arg9[%127] : memref<2x!tpu.dma_semaphore, #tpu.memory_space<semaphore_mem>> -> memref<1x!tpu.dma_semaphore, #tpu.memory_space<semaphore_mem>>
      %134 = tpu.memref_squeeze %133 : memref<1x!tpu.dma_semaphore, #tpu.memory_space<semaphore_mem>> -> memref<!tpu.dma_semaphore, #tpu.memory_space<semaphore_mem>>
      tpu.enqueue_dma source(%130 : memref<10x18x128xf32, #tpu.memory_space<any>>) target(%132 : memref<10x18x128xf32, #tpu.memory_space<vmem>>) target_semaphore(%134 : memref<!tpu.dma_semaphore, #tpu.memory_space<semaphore_mem>>)
    } else {
    }
    %24 = arith.index_cast %9 : i32 to index
    %c0 = arith.constant 0 : index
    %c0_13 = arith.constant 0 : index
    %c0_14 = arith.constant 0 : index
    %25 = vector.load %arg8[%24, %c0, %c0_13, %c0_14] : memref<2x10x18x128xf32, #tpu.memory_space<vmem>>, vector<1x10x18x128xf32>
    %26 = vector.shape_cast %25 : vector<1x10x18x128xf32> to vector<10x18x128xf32>
    %c0_15 = arith.constant 0 : index
    %c0_16 = arith.constant 0 : index
    %27 = vector.load %arg4[%c0_15, %c0_16] : memref<1x128xf32, #tpu.memory_space<vmem>>, vector<1x128xf32>
    %28 = vector.shape_cast %27 : vector<1x128xf32> to vector<128xf32>
    %29 = vector.shape_cast %28 : vector<128xf32> to vector<1x1x128xf32>
    %30 = vector.broadcast %29 : vector<1x1x128xf32> to vector<10x18x128xf32>
    %31 = arith.mulf %26, %30 : vector<10x18x128xf32>
    %c0_17 = arith.constant 0 : index
    %c0_18 = arith.constant 0 : index
    %32 = vector.load %arg5[%c0_17, %c0_18] : memref<1x128xf32, #tpu.memory_space<vmem>>, vector<1x128xf32>
    %33 = vector.shape_cast %32 : vector<1x128xf32> to vector<128xf32>
    %34 = vector.shape_cast %33 : vector<128xf32> to vector<1x1x128xf32>
    %35 = vector.broadcast %34 : vector<1x1x128xf32> to vector<10x18x128xf32>
    %36 = arith.addf %31, %35 : vector<10x18x128xf32>
    %cst = arith.constant 0.000000e+00 : f32
    %37 = vector.broadcast %cst : f32 to vector<10x18x128xf32>
    %38 = arith.maximumf %36, %37 : vector<10x18x128xf32>
    %39 = tpu.iota {dimensions = array<i32: 0>} : vector<10x18x128xi32>
    %c8_i32_19 = arith.constant 8 : i32
    %40 = arith.muli %arg1, %c8_i32_19 : i32
    %41 = vector.broadcast %40 : i32 to vector<10x18x128xi32>
    %42 = arith.addi %39, %41 : vector<10x18x128xi32>
    %43 = tpu.iota {dimensions = array<i32: 1>} : vector<10x18x128xi32>
    %c0_i32_20 = arith.constant 0 : i32
    %44 = vector.broadcast %c0_i32_20 : i32 to vector<10x18x128xi32>
    %45 = arith.cmpi sgt, %42, %44 : vector<10x18x128xi32>
    %c17_i32 = arith.constant 17 : i32
    %46 = vector.broadcast %c17_i32 : i32 to vector<10x18x128xi32>
    %47 = arith.cmpi slt, %42, %46 : vector<10x18x128xi32>
    %48 = arith.andi %45, %47 : vector<10x18x128xi1>
    %c0_i32_21 = arith.constant 0 : i32
    %49 = vector.broadcast %c0_i32_21 : i32 to vector<10x18x128xi32>
    %50 = arith.cmpi sgt, %43, %49 : vector<10x18x128xi32>
    %51 = arith.andi %48, %50 : vector<10x18x128xi1>
    %c17_i32_22 = arith.constant 17 : i32
    %52 = vector.broadcast %c17_i32_22 : i32 to vector<10x18x128xi32>
    %53 = arith.cmpi slt, %43, %52 : vector<10x18x128xi32>
    %54 = arith.andi %51, %53 : vector<10x18x128xi1>
    %cst_23 = arith.constant 0.000000e+00 : f32
    %55 = vector.broadcast %cst_23 : f32 to vector<10x18x128xf32>
    %56 = arith.select %54, %38, %55 : vector<10x18x128xi1>, vector<10x18x128xf32>
    %57 = arith.index_cast %9 : i32 to index
    %c0_24 = arith.constant 0 : index
    %c0_25 = arith.constant 0 : index
    %c0_26 = arith.constant 0 : index
    %58 = vector.load %arg8[%57, %c0_24, %c0_25, %c0_26] : memref<2x10x18x128xf32, #tpu.memory_space<vmem>>, vector<1x10x18x128xf32>
    %59 = vector.shape_cast %58 : vector<1x10x18x128xf32> to vector<10x18x128xf32>
    %60 = vector.shape_cast %56 : vector<10x18x128xf32> to vector<1x10x18x128xf32>
    tpu.vector_store %arg8[%57, %c0_24, %c0_25, %c0_26], %60 {strides = array<i32>} : memref<2x10x18x128xf32, #tpu.memory_space<vmem>>, vector<1x10x18x128xf32>,
    %cst_27 = arith.constant 0.000000e+00 : f32
    %61 = vector.broadcast %cst_27 : f32 to vector<128x128xf32>
    %c0_i32_28 = arith.constant 0 : i32
    %c0_i32_29 = arith.constant 0 : i32
    %c0_i32_30 = arith.constant 0 : i32
    %62 = tpu.memref_slice %arg8[%9, %c0_i32_28, %c0_i32_29, %c0_i32_30] : memref<2x10x18x128xf32, #tpu.memory_space<vmem>> -> memref<1x10x18x128xf32, #tpu.memory_space<vmem>>
    %63 = tpu.memref_squeeze %62 : memref<1x10x18x128xf32, #tpu.memory_space<vmem>> -> memref<10x18x128xf32, #tpu.memory_space<vmem>>
    %c0_31 = arith.constant 0 : index
    %c0_32 = arith.constant 0 : index
    %c0_33 = arith.constant 0 : index
    %64 = vector.load %63[%c0_31, %c0_32, %c0_33] : memref<10x18x128xf32, #tpu.memory_space<vmem>>, vector<8x16x128xf32>
    %65 = vector.shape_cast %64 : vector<8x16x128xf32> to vector<128x128xf32>
    %c0_i32_34 = arith.constant 0 : i32
    %c0_i32_35 = arith.constant 0 : i32
    %c0_i32_36 = arith.constant 0 : i32
    %66 = tpu.memref_slice %arg8[%9, %c0_i32_34, %c0_i32_35, %c0_i32_36] : memref<2x10x18x128xf32, #tpu.memory_space<vmem>> -> memref<1x10x18x128xf32, #tpu.memory_space<vmem>>
    %67 = tpu.memref_squeeze %66 : memref<1x10x18x128xf32, #tpu.memory_space<vmem>> -> memref<10x18x128xf32, #tpu.memory_space<vmem>>
    %c0_37 = arith.constant 0 : index
    %c1 = arith.constant 1 : index
    %c0_38 = arith.constant 0 : index
    %68 = vector.load %67[%c0_37, %c1, %c0_38] : memref<10x18x128xf32, #tpu.memory_space<vmem>>, vector<8x16x128xf32>
    %69 = vector.shape_cast %68 : vector<8x16x128xf32> to vector<128x128xf32>
    %c0_i32_39 = arith.constant 0 : i32
    %c0_i32_40 = arith.constant 0 : i32
    %c0_i32_41 = arith.constant 0 : i32
    %70 = tpu.memref_slice %arg8[%9, %c0_i32_39, %c0_i32_40, %c0_i32_41] : memref<2x10x18x128xf32, #tpu.memory_space<vmem>> -> memref<1x10x18x128xf32, #tpu.memory_space<vmem>>
    %71 = tpu.memref_squeeze %70 : memref<1x10x18x128xf32, #tpu.memory_space<vmem>> -> memref<10x18x128xf32, #tpu.memory_space<vmem>>
    %c0_42 = arith.constant 0 : index
    %c2 = arith.constant 2 : index
    %c0_43 = arith.constant 0 : index
    %72 = vector.load %71[%c0_42, %c2, %c0_43] : memref<10x18x128xf32, #tpu.memory_space<vmem>>, vector<8x16x128xf32>
    %73 = vector.shape_cast %72 : vector<8x16x128xf32> to vector<128x128xf32>
    %74 = tpu.concatenate %65, %69, %73 in 1 : vector<128x128xf32>, vector<128x128xf32>, vector<128x128xf32> -> vector<128x384xf32>
    %c0_44 = arith.constant 0 : index
    %c0_45 = arith.constant 0 : index
    %75 = vector.load %arg3[%c0_44, %c0_45] : memref<1152x128xf32, #tpu.memory_space<vmem>>, vector<384x128xf32>
    %cst_46 = arith.constant dense<0.000000e+00> : vector<128x128xf32>
    %76 = tpu.matmul %74, %75, %cst_46 {dimension_numbers = #tpu.dot_dimension_numbers<[1], [0], [0], [1], [0, 0, 1, 1], [], []>} : vector<128x384xf32>, vector<384x128xf32>, vector<128x128xf32> -> vector<128x128xf32>
    %77 = arith.addf %61, %76 : vector<128x128xf32>
    %c0_i32_47 = arith.constant 0 : i32
    %c0_i32_48 = arith.constant 0 : i32
    %c0_i32_49 = arith.constant 0 : i32
    %78 = tpu.memref_slice %arg8[%9, %c0_i32_47, %c0_i32_48, %c0_i32_49] : memref<2x10x18x128xf32, #tpu.memory_space<vmem>> -> memref<1x10x18x128xf32, #tpu.memory_space<vmem>>
    %79 = tpu.memref_squeeze %78 : memref<1x10x18x128xf32, #tpu.memory_space<vmem>> -> memref<10x18x128xf32, #tpu.memory_space<vmem>>
    %c1_50 = arith.constant 1 : index
    %c0_51 = arith.constant 0 : index
    %c0_52 = arith.constant 0 : index
    %80 = vector.load %79[%c1_50, %c0_51, %c0_52] : memref<10x18x128xf32, #tpu.memory_space<vmem>>, vector<8x16x128xf32>
    %81 = vector.shape_cast %80 : vector<8x16x128xf32> to vector<128x128xf32>
    %c0_i32_53 = arith.constant 0 : i32
    %c0_i32_54 = arith.constant 0 : i32
    %c0_i32_55 = arith.constant 0 : i32
    %82 = tpu.memref_slice %arg8[%9, %c0_i32_53, %c0_i32_54, %c0_i32_55] : memref<2x10x18x128xf32, #tpu.memory_space<vmem>> -> memref<1x10x18x128xf32, #tpu.memory_space<vmem>>
    %83 = tpu.memref_squeeze %82 : memref<1x10x18x128xf32, #tpu.memory_space<vmem>> -> memref<10x18x128xf32, #tpu.memory_space<vmem>>
    %c1_56 = arith.constant 1 : index
    %c1_57 = arith.constant 1 : index
    %c0_58 = arith.constant 0 : index
    %84 = vector.load %83[%c1_56, %c1_57, %c0_58] : memref<10x18x128xf32, #tpu.memory_space<vmem>>, vector<8x16x128xf32>
    %85 = vector.shape_cast %84 : vector<8x16x128xf32> to vector<128x128xf32>
    %c0_i32_59 = arith.constant 0 : i32
    %c0_i32_60 = arith.constant 0 : i32
    %c0_i32_61 = arith.constant 0 : i32
    %86 = tpu.memref_slice %arg8[%9, %c0_i32_59, %c0_i32_60, %c0_i32_61] : memref<2x10x18x128xf32, #tpu.memory_space<vmem>> -> memref<1x10x18x128xf32, #tpu.memory_space<vmem>>
    %87 = tpu.memref_squeeze %86 : memref<1x10x18x128xf32, #tpu.memory_space<vmem>> -> memref<10x18x128xf32, #tpu.memory_space<vmem>>
    %c1_62 = arith.constant 1 : index
    %c2_63 = arith.constant 2 : index
    %c0_64 = arith.constant 0 : index
    %88 = vector.load %87[%c1_62, %c2_63, %c0_64] : memref<10x18x128xf32, #tpu.memory_space<vmem>>, vector<8x16x128xf32>
    %89 = vector.shape_cast %88 : vector<8x16x128xf32> to vector<128x128xf32>
    %90 = tpu.concatenate %81, %85, %89 in 1 : vector<128x128xf32>, vector<128x128xf32>, vector<128x128xf32> -> vector<128x384xf32>
    %c384 = arith.constant 384 : index
    %c0_65 = arith.constant 0 : index
    %91 = vector.load %arg3[%c384, %c0_65] : memref<1152x128xf32, #tpu.memory_space<vmem>>, vector<384x128xf32>
    %cst_66 = arith.constant dense<0.000000e+00> : vector<128x128xf32>
    %92 = tpu.matmul %90, %91, %cst_66 {dimension_numbers = #tpu.dot_dimension_numbers<[1], [0], [0], [1], [0, 0, 1, 1], [], []>} : vector<128x384xf32>, vector<384x128xf32>, vector<128x128xf32> -> vector<128x128xf32>
    %93 = arith.addf %77, %92 : vector<128x128xf32>
    %c0_i32_67 = arith.constant 0 : i32
    %c0_i32_68 = arith.constant 0 : i32
    %c0_i32_69 = arith.constant 0 : i32
    %94 = tpu.memref_slice %arg8[%9, %c0_i32_67, %c0_i32_68, %c0_i32_69] : memref<2x10x18x128xf32, #tpu.memory_space<vmem>> -> memref<1x10x18x128xf32, #tpu.memory_space<vmem>>
    %95 = tpu.memref_squeeze %94 : memref<1x10x18x128xf32, #tpu.memory_space<vmem>> -> memref<10x18x128xf32, #tpu.memory_space<vmem>>
    %c2_70 = arith.constant 2 : index
    %c0_71 = arith.constant 0 : index
    %c0_72 = arith.constant 0 : index
    %96 = vector.load %95[%c2_70, %c0_71, %c0_72] : memref<10x18x128xf32, #tpu.memory_space<vmem>>, vector<8x16x128xf32>
    %97 = vector.shape_cast %96 : vector<8x16x128xf32> to vector<128x128xf32>
    %c0_i32_73 = arith.constant 0 : i32
    %c0_i32_74 = arith.constant 0 : i32
    %c0_i32_75 = arith.constant 0 : i32
    %98 = tpu.memref_slice %arg8[%9, %c0_i32_73, %c0_i32_74, %c0_i32_75] : memref<2x10x18x128xf32, #tpu.memory_space<vmem>> -> memref<1x10x18x128xf32, #tpu.memory_space<vmem>>
    %99 = tpu.memref_squeeze %98 : memref<1x10x18x128xf32, #tpu.memory_space<vmem>> -> memref<10x18x128xf32, #tpu.memory_space<vmem>>
    %c2_76 = arith.constant 2 : index
    %c1_77 = arith.constant 1 : index
    %c0_78 = arith.constant 0 : index
    %100 = vector.load %99[%c2_76, %c1_77, %c0_78] : memref<10x18x128xf32, #tpu.memory_space<vmem>>, vector<8x16x128xf32>
    %101 = vector.shape_cast %100 : vector<8x16x128xf32> to vector<128x128xf32>
    %c0_i32_79 = arith.constant 0 : i32
    %c0_i32_80 = arith.constant 0 : i32
    %c0_i32_81 = arith.constant 0 : i32
    %102 = tpu.memref_slice %arg8[%9, %c0_i32_79, %c0_i32_80, %c0_i32_81] : memref<2x10x18x128xf32, #tpu.memory_space<vmem>> -> memref<1x10x18x128xf32, #tpu.memory_space<vmem>>
    %103 = tpu.memref_squeeze %102 : memref<1x10x18x128xf32, #tpu.memory_space<vmem>> -> memref<10x18x128xf32, #tpu.memory_space<vmem>>
    %c2_82 = arith.constant 2 : index
    %c2_83 = arith.constant 2 : index
    %c0_84 = arith.constant 0 : index
    %104 = vector.load %103[%c2_82, %c2_83, %c0_84] : memref<10x18x128xf32, #tpu.memory_space<vmem>>, vector<8x16x128xf32>
    %105 = vector.shape_cast %104 : vector<8x16x128xf32> to vector<128x128xf32>
    %106 = tpu.concatenate %97, %101, %105 in 1 : vector<128x128xf32>, vector<128x128xf32>, vector<128x128xf32> -> vector<128x384xf32>
    %c768 = arith.constant 768 : index
    %c0_85 = arith.constant 0 : index
    %107 = vector.load %arg3[%c768, %c0_85] : memref<1152x128xf32, #tpu.memory_space<vmem>>, vector<384x128xf32>
    %cst_86 = arith.constant dense<0.000000e+00> : vector<128x128xf32>
    %108 = tpu.matmul %106, %107, %cst_86 {dimension_numbers = #tpu.dot_dimension_numbers<[1], [0], [0], [1], [0, 0, 1, 1], [], []>} : vector<128x384xf32>, vector<384x128xf32>, vector<128x128xf32> -> vector<128x128xf32>
    %109 = arith.addf %93, %108 : vector<128x128xf32>
    %110 = vector.shape_cast %109 : vector<128x128xf32> to vector<1x8x16x128xf32>
    %c0_87 = arith.constant 0 : index
    %c0_88 = arith.constant 0 : index
    %c0_89 = arith.constant 0 : index
    %c0_90 = arith.constant 0 : index
    %111 = vector.load %arg6[%c0_87, %c0_88, %c0_89, %c0_90] : memref<1x8x16x128xf32, #tpu.memory_space<vmem>>, vector<1x8x16x128xf32>
    tpu.vector_store %arg6[%c0_87, %c0_88, %c0_89, %c0_90], %110 {strides = array<i32>} : memref<1x8x16x128xf32, #tpu.memory_space<vmem>>, vector<1x8x16x128xf32>,
    %cst_91 = arith.constant dense<0.000000e+00> : vector<128xf32>
    %112 = vector.multi_reduction <add>, %109, %cst_91 [0] : vector<128x128xf32> to vector<128xf32>
    %cst_92 = arith.constant 7.812500e-03 : f32
    %113 = vector.broadcast %cst_92 : f32 to vector<128xf32>
    %114 = arith.mulf %112, %113 : vector<128xf32>
    %115 = vector.shape_cast %114 : vector<128xf32> to vector<1x128xf32>
    %116 = vector.broadcast %115 : vector<1x128xf32> to vector<128x128xf32>
    %117 = arith.subf %109, %116 : vector<128x128xf32>
    %118 = arith.mulf %117, %117 : vector<128x128xf32>
    %cst_93 = arith.constant dense<0.000000e+00> : vector<128xf32>
    %119 = vector.multi_reduction <add>, %118, %cst_93 [0] : vector<128x128xf32> to vector<128xf32>
    %120 = vector.shape_cast %112 : vector<128xf32> to vector<1x128xf32>
    %121 = vector.shape_cast %119 : vector<128xf32> to vector<1x128xf32>
    %cst_94 = arith.constant 0.000000e+00 : f32
    %122 = vector.broadcast %cst_94 : f32 to vector<6x128xf32>
    %123 = tpu.concatenate %120, %121, %122 in 0 : vector<1x128xf32>, vector<1x128xf32>, vector<6x128xf32> -> vector<8x128xf32>
    %124 = vector.shape_cast %123 : vector<8x128xf32> to vector<1x1x8x128xf32>
    %c0_95 = arith.constant 0 : index
    %c0_96 = arith.constant 0 : index
    %c0_97 = arith.constant 0 : index
    %c0_98 = arith.constant 0 : index
    %125 = vector.load %arg7[%c0_95, %c0_96, %c0_97, %c0_98] : memref<1x1x8x128xf32, #tpu.memory_space<vmem>>, vector<1x1x8x128xf32>
    tpu.vector_store %arg7[%c0_95, %c0_96, %c0_97, %c0_98], %124 {strides = array<i32>} : memref<1x1x8x128xf32, #tpu.memory_space<vmem>>, vector<1x1x8x128xf32>,
    return
  }
  func.func @transform_1(%arg0: i32, %arg1: i32) -> (i32, i32) {
    %c0_i32 = arith.constant 0 : i32
    %c0_i32_0 = arith.constant 0 : i32
    %c0_i32_1 = arith.constant 0 : i32
    return %c0_i32, %c0_i32_0 : i32, i32
  }
  func.func @transform_2(%arg0: i32, %arg1: i32) -> (i32, i32) {
    %c0_i32 = arith.constant 0 : i32
    %c0_i32_0 = arith.constant 0 : i32
    %c0_i32_1 = arith.constant 0 : i32
    return %c0_i32, %c0_i32_0 : i32, i32
  }
  func.func @transform_3(%arg0: i32, %arg1: i32) -> (i32, i32) {
    %c0_i32 = arith.constant 0 : i32
    %c0_i32_0 = arith.constant 0 : i32
    %c0_i32_1 = arith.constant 0 : i32
    return %c0_i32, %c0_i32_0 : i32, i32
  }
  func.func @transform_4(%arg0: i32, %arg1: i32) -> (i32, i32, i32, i32) {
    %c0_i32 = arith.constant 0 : i32
    %c0_i32_0 = arith.constant 0 : i32
    %c0_i32_1 = arith.constant 0 : i32
    return %arg0, %arg1, %c0_i32, %c0_i32_0 : i32, i32, i32, i32
  }
  func.func @transform_5(%arg0: i32, %arg1: i32) -> (i32, i32, i32, i32) {
    %c0_i32 = arith.constant 0 : i32
    %c0_i32_0 = arith.constant 0 : i32
    %c0_i32_1 = arith.constant 0 : i32
    return %arg0, %arg1, %c0_i32, %c0_i32_0 : i32, i32, i32, i32
  }
}

</mosaic_0001>

<llo_original>
// kernel: double_conv.2
$region0: #{double_conv.2}
  #allocation0 [shape = 'u32[]', space=smem, size = 0x4, offset = 0x4, fixed_abs, tag = 'smem constant byte address 0x4 - core index']
  #allocation1 [shape = 'u32[72,128]{1,0:T(1,128)}', space=vmem, size = 0x9000, scoped, tag = 'internal scratch']
  #allocation2 [shape = 'f32[2,10,18,128]{3,2,1,0:T(8,128)}', space=vmem, size = 0x3c000, scoped, tag = 'scratch operand']
  #allocation3 [shape = 's32[2]{0}', space=sflag, size = 0x8, scoped, tag = 'scratch operand']
  #allocation4 [shape = 's32[]', space=sflag, size = 0x4, offset = 0, fixed_abs, tag = 'sflag constant byte address 0x0 - dummy sync flag']
  #allocation5 [shape = 's32[]', space=sflag, size = 0x4, offset = 0, fixed_abs, tag = 'sflag constant byte address 0x0 - dummy sync flag']
  %s0 = inlined_call_operand.vmem [shape: f32[2,18,18,128], index: 0, kind: input, shape index: {}]
  %s1 = inlined_call_operand.vmem [shape: f32[1152,128], index: 1, kind: input, shape index: {}]
  %s2 = inlined_call_operand.vmem [shape: f32[1,128], index: 2, kind: input, shape index: {}]
  %s3 = inlined_call_operand.vmem [shape: f32[1,128], index: 3, kind: input, shape index: {}]
  %s4 = inlined_call_operand.vmem [shape: f32[2,16,16,128], index: 4, kind: output, shape index: {0}]
  %s5 = inlined_call_operand.vmem [shape: f32[2,2,8,128], index: 5, kind: output, shape index: {1}]
  %6 = xla_tuple %s4, %s5
  %s7 = sld [smem:[#allocation0]]
  $region105: #{double_conv.2} parent=0
    _
  %s9 = ssub.s32 1, %s7
  %s10 = scalar_select 0, %s9, %s7
  loop: start=0, step=1, limit=6
  $region2: #{double_conv.2} parent=0 // loop_pre_header
    _
  $region3: #{double_conv.2} parent=0 // loop_header
    %s12 = sphi 0, %s16
    %p13 = scmp.ge.s32.totalorder %s12, 6
    %s19 = sphi 0, %s31
    %s20 = sphi 0, %s27
    %s21 = sphi 0, %s19
    %s22 = sphi 0, %s20
    %s23 = sphi 0, %s21
    %s24 = sphi 0, %s22
    %s32 = sphi 0, %s32
    %s34 = sphi 0, %s32
    %s35 = sphi 0, %s34
    %s49 = sphi 0, %s35
    %s53 = sphi 0, %s53
    %s55 = sphi 0, %s53
    %s56 = sphi 0, %s55
    %s70 = sphi 0, %s56
    %s74 = sphi 0, %s74
    %s76 = sphi 0, %s74
    %s77 = sphi 0, %s76
    %s91 = sphi 0, %s77
    %s99 = sphi 0, %s101
    %s102 = sphi 0, %s99
    %s103 = sphi 0, %s102
    %s119 = sphi 0, %s103
    %s127 = sphi 0, %s129
    %s130 = sphi 0, %s127
    %s131 = sphi 0, %s130
    %s147 = sphi 0, %s131
  $region4: #{double_conv.2} parent=0 // loop_header_branch
    %15 = sbr.rel (%p13) target = $region8
  $region5: #{double_conv.2} parent=0 // loop_body
    %s17 = ssub.s32 %s12, 1
    %s18 = ssub.s32 %s12, 2
    %s25 = sadd.s32 1, %s20
    %p26 = scmp.ge.s32.totalorder %s25, 2
    %s27 = scalar_select %p26, 0, %s25
    %s28 = sadd.s32 1, %s19
    %s29 = scalar_select %p26, %s28, %s19
    %p30 = scmp.ge.s32.totalorder %s29, 2
    %s31 = scalar_select %p30, 0, %s29
    %s33 = sadd.s32 %s32, 1
    %p36 = scmp.eq.s32.totalorder %s12, 3
    %p37 = scmp.ne.s32.totalorder %s32, %s34
    %p38 = scmp.eq.s32.totalorder %s12, 0
    %p39 = por %p37, %p38
    %p40 = scmp.ne.s32.totalorder %s32, %s34
    %p41 = scmp.eq.s32.totalorder %s17, 3
    %p42 = por %p40, %p41
    %p43 = scmp.ne.s32.totalorder %s34, %s35
    %p44 = scmp.eq.s32.totalorder %s17, 0
    %p45 = por %p43, %p44
    %p46 = scmp.ne.s32.totalorder %s34, %s35
    %p47 = scmp.eq.s32.totalorder %s18, 3
    %p48 = por %p46, %p47
    %p50 = scmp.ne.s32.totalorder %s35, %s49
    %p51 = scmp.eq.s32.totalorder %s18, 0
    %p52 = por %p50, %p51
    %s54 = sadd.s32 %s53, 1
    %p57 = scmp.eq.s32.totalorder %s12, 3
    %p58 = scmp.ne.s32.totalorder %s53, %s55
    %p59 = scmp.eq.s32.totalorder %s12, 0
    %p60 = por %p58, %p59
    %p61 = scmp.ne.s32.totalorder %s53, %s55
    %p62 = scmp.eq.s32.totalorder %s17, 3
    %p63 = por %p61, %p62
    %p64 = scmp.ne.s32.totalorder %s55, %s56
    %p65 = scmp.eq.s32.totalorder %s17, 0
    %p66 = por %p64, %p65
    %p67 = scmp.ne.s32.totalorder %s55, %s56
    %p68 = scmp.eq.s32.totalorder %s18, 3
    %p69 = por %p67, %p68
    %p71 = scmp.ne.s32.totalorder %s56, %s70
    %p72 = scmp.eq.s32.totalorder %s18, 0
    %p73 = por %p71, %p72
    %s75 = sadd.s32 %s74, 1
    %p78 = scmp.eq.s32.totalorder %s12, 3
    %p79 = scmp.ne.s32.totalorder %s74, %s76
    %p80 = scmp.eq.s32.totalorder %s12, 0
    %p81 = por %p79, %p80
    %p82 = scmp.ne.s32.totalorder %s74, %s76
    %p83 = scmp.eq.s32.totalorder %s17, 3
    %p84 = por %p82, %p83
    %p85 = scmp.ne.s32.totalorder %s76, %s77
    %p86 = scmp.eq.s32.totalorder %s17, 0
    %p87 = por %p85, %p86
    %p88 = scmp.ne.s32.totalorder %s76, %s77
    %p89 = scmp.eq.s32.totalorder %s18, 3
    %p90 = por %p88, %p89
    %p92 = scmp.ne.s32.totalorder %s77, %s91
    %p93 = scmp.eq.s32.totalorder %s18, 0
    %p94 = por %p92, %p93
    %s95 = ssub.s32 %s19, %s31
    %s96 = ssub.s32 %s20, %s27
    %s97 = sor.u32 %s95, %s96
    %p98 = scmp.eq.s32.totalorder %s97, 0
    %s100 = sadd.s32 %s99, 1
    %s101 = scalar_select %p98, %s99, %s100
    %p104 = pneg %p98
    %p105 = scmp.eq.s32.totalorder %s12, 3
    %p106 = por %p104, %p105
    %p107 = scmp.ne.s32.totalorder %s99, %s102
    %p108 = scmp.eq.s32.totalorder %s12, 0
    %p109 = por %p107, %p108
    %p110 = scmp.ne.s32.totalorder %s99, %s102
    %p111 = scmp.eq.s32.totalorder %s17, 3
    %p112 = por %p110, %p111
    %p113 = scmp.ne.s32.totalorder %s102, %s103
    %p114 = scmp.eq.s32.totalorder %s17, 0
    %p115 = por %p113, %p114
    %p116 = scmp.ne.s32.totalorder %s102, %s103
    %p117 = scmp.eq.s32.totalorder %s18, 3
    %p118 = por %p116, %p117
    %p120 = scmp.ne.s32.totalorder %s103, %s119
    %p121 = scmp.eq.s32.totalorder %s18, 0
    %p122 = por %p120, %p121
    %s123 = ssub.s32 %s19, %s31
    %s124 = ssub.s32 %s20, %s27
    %s125 = sor.u32 %s123, %s124
    %p126 = scmp.eq.s32.totalorder %s125, 0
    %s128 = sadd.s32 %s127, 1
    %s129 = scalar_select %p126, %s127, %s128
    %p132 = pneg %p126
    %p133 = scmp.eq.s32.totalorder %s12, 3
    %p134 = por %p132, %p133
    %p135 = scmp.ne.s32.totalorder %s127, %s130
    %p136 = scmp.eq.s32.totalorder %s12, 0
    %p137 = por %p135, %p136
    %p138 = scmp.ne.s32.totalorder %s127, %s130
    %p139 = scmp.eq.s32.totalorder %s17, 3
    %p140 = por %p138, %p139
    %p141 = scmp.ne.s32.totalorder %s130, %s131
    %p142 = scmp.eq.s32.totalorder %s17, 0
    %p143 = por %p141, %p142
    %p144 = scmp.ne.s32.totalorder %s130, %s131
    %p145 = scmp.eq.s32.totalorder %s18, 3
    %p146 = por %p144, %p145
    %p148 = scmp.ne.s32.totalorder %s131, %s147
    %p149 = scmp.eq.s32.totalorder %s18, 0
    %p150 = por %p148, %p149
    %p151 = scmp.le.s32.totalorder 1, %s12
    %p152 = scmp.lt.s32.totalorder %s12, 5
    %p153 = pnand %p151, %p152
    %p154 = pneg %p153
    // Predicated region
    $region9: #{double_conv.2} parent=5 // pred_check
      _
    $region10: #{double_conv.2} parent=5 // pred_check_branch
      %156 = sbr.rel (%p153) target = $region12
    $region11: #{double_conv.2} parent=5 // pred_region
      %s157 = ssub.s32 %s12, 1
      // Predicated region
      $region13: #{double_conv.2} parent=11 // pred_check
        %p158 = pneg %p45
      $region14: #{double_conv.2} parent=11 // pred_check_branch
        %160 = sbr.rel (%p158) target = $region16
      $region15: #{double_conv.2} parent=11 // pred_region
        _
      $region16: #{double_conv.2} parent=11 // pred_fallthru
        _
      // Predicated region
      $region17: #{double_conv.2} parent=11 // pred_check
        %p161 = pneg %p66
      $region18: #{double_conv.2} parent=11 // pred_check_branch
        %163 = sbr.rel (%p161) target = $region20
      $region19: #{double_conv.2} parent=11 // pred_region
        _
      $region20: #{double_conv.2} parent=11 // pred_fallthru
        _
      // Predicated region
      $region21: #{double_conv.2} parent=11 // pred_check
        %p164 = pneg %p87
      $region22: #{double_conv.2} parent=11 // pred_check_branch
        %166 = sbr.rel (%p164) target = $region24
      $region23: #{double_conv.2} parent=11 // pred_region
        _
      $region24: #{double_conv.2} parent=11 // pred_fallthru
        _
    $region12: #{double_conv.2} parent=5 // pred_fallthru
      _
    %p167 = scmp.lt.s32.totalorder %s12, 4
    // Predicated region
    $region25: #{double_conv.2} parent=5 // pred_check
      %p168 = pneg %p167
    $region26: #{double_conv.2} parent=5 // pred_check_branch
      %170 = sbr.rel (%p168) target = $region28
    $region27: #{double_conv.2} parent=5 // pred_region
      _
    $region28: #{double_conv.2} parent=5 // pred_fallthru
      _
    %p171 = scmp.le.s32.totalorder 1, %s12
    %p172 = scmp.lt.s32.totalorder %s12, 5
    %p173 = pnand %p171, %p172
    %p174 = pneg %p173
    // Predicated region
    $region29: #{double_conv.2} parent=5 // pred_check
      _
    $region30: #{double_conv.2} parent=5 // pred_check_branch
      %176 = sbr.rel (%p173) target = $region32
    $region31: #{double_conv.2} parent=5 // pred_region
      %s177 = ssub.s32 %s12, 1
      %p178 = pneg %p45
      %p179 = pneg %p42
      %p180 = pneg %p66
      %p181 = pneg %p63
      %p182 = pneg %p87
      %p183 = pneg %p84
      %p184 = pneg %p115
      %p185 = pneg %p112
      %s186 = smul.u32 8, %s22
      %p187 = scmp.lt.s32.totalorder %s21, 1
      %s188 = scalar_select %p187, %s21, 1
      %p189 = scmp.lt.s32.totalorder %s186, 15
      %s190 = scalar_select %p189, %s186, 15
      %s191 = smul.addr %s190, 2
      %s192 = smul.addr %s188, 32
      %s193 = sadd.s32 %s191, %s192
      %s194 = smul.addr %s193, 8
      %s195 = scalar_lea.vmem %s4, %s194
      %p196 = pneg %p143
      %p197 = pneg %p140
      %p198 = scmp.lt.s32.totalorder %s21, 1
      %s199 = scalar_select %p198, %s21, 1
      %p200 = scmp.lt.s32.totalorder %s22, 1
      %s201 = scalar_select %p200, %s22, 1
      %s202 = smul.addr %s199, 2
      %s203 = sadd.s32 %s201, %s202
      %s204 = smul.addr %s203, 8
      %s205 = scalar_lea.vmem %s5, %s204
      %s206 = smul.u32 8, %s22
      %p207 = scmp.lt.s32.totalorder %s21, 1
      %s208 = scalar_select %p207, %s21, 1
      %p209 = scmp.lt.s32.totalorder %s206, 15
      %s210 = scalar_select %p209, %s206, 15
      %s211 = smul.addr %s210, 2
      %s212 = smul.addr %s208, 32
      %s213 = sadd.s32 %s211, %s212
      %s214 = smul.addr %s213, 8
      %s215 = scalar_lea.vmem %s4, %s214
      %s216 = smul.u32 8, %s22
      %p217 = scmp.lt.s32.totalorder %s21, 1
      %s218 = scalar_select %p217, %s21, 1
      %p219 = scmp.lt.s32.totalorder %s22, 1
      %s220 = scalar_select %p219, %s22, 1
      %s221 = smul.addr %s218, 2
      %s222 = sadd.s32 %s220, %s221
      %s223 = smul.addr %s222, 8
      %s224 = scalar_lea.vmem %s5, %s223
      %p225 = scmp.lt.s32.totalorder %s22, 0
      %s226 = ssub.s32 0, %s22
      %s227 = scalar_select %p225, %s226, %s22
      %s228 = sand.u32 %s227, 1
      %s229 = ssub.s32 0, %s228
      %s230 = scalar_select %p225, %s229, %s228
      %p231 = scmp.ne.s32.totalorder %s230, 0
      %p232 = scmp.lt.s32.totalorder %s230, 0
      %p233 = pnand %p232, %p231
      %p234 = pneg %p233
      %s235 = sadd.s32 %s230, 2
      %s236 = scalar_select %p234, %s235, %s230
      %p237 = scmp.eq.s32.totalorder %s22, 0
      // Predicated region
      $region33: #{double_conv.2} parent=31 // pred_check
        %p238 = pneg %p237
      $region34: #{double_conv.2} parent=31 // pred_check_branch
        %240 = sbr.rel (%p238) target = $region36
      $region35: #{double_conv.2} parent=31 // pred_region
        %s241 = smul.u32 %s22, 8
        %s242 = smul.u32 %s241, 24
        %s243 = smul.u32 %s21, 432
        %s244 = sadd.s32 %s242, %s243
        %s245 = scalar_lea.vmem %s0, %s244
        %s246 = smul.u32 %s236, 240
        %s247 = scalar_lea.vmem [#allocation2], %s246
        %s248 = scalar_lea.sflag [#allocation3], %s236
        // Predicated region
        $region37: #{double_conv.2} parent=35 // pred_check
          _
        $region38: #{double_conv.2} parent=35 // pred_check_branch
          %250 = sbr.rel (0) target = $region40
        $region39: #{double_conv.2} parent=35 // pred_region
          %s251 = scalar_lea.vmem %s245, 16
          %s252 = scalar_lea.vmem %s247, 16 [#allocation2]
          loop: start=0, step=1, limit=1
          $region41: #{double_conv.2} parent=39 // loop_pre_header
            _
          $region42: #{double_conv.2} parent=39 // loop_header
            %s254 = sphi 0, %s258
            %p255 = scmp.ge.s32.totalorder %s254, 1
            %s259 = sphi %s245, %s245
            %s260 = sphi %s247, %s247
          $region43: #{double_conv.2} parent=39 // loop_header_branch
            %257 = sbr.rel (%p255) target = $region47
          $region44: #{double_conv.2} parent=39 // loop_body
            %v261 = vld [vmem:[%s259] sm:$0xff]
            %262 = vst [vmem:[%s260] sm:$0xff] %v261
            %v263 = vld [vmem:[%s259 + $0x8] sm:$0xff]
            %264 = vst [vmem:[%s260 + $0x8] sm:$0xff] %v263
            %v265 = vld [vmem:[%s259 + $0x18] sm:$0xff]
            %266 = vst [vmem:[%s260 + $0x18] sm:$0xff] %v265
            %v267 = vld [vmem:[%s259 + $0x20] sm:$0xff]
            %268 = vst [vmem:[%s260 + $0x20] sm:$0xff] %v267
            %v269 = vld [vmem:[%s259 + $0x30] sm:$0xff]
            %270 = vst [vmem:[%s260 + $0x30] sm:$0xff] %v269
            %v271 = vld [vmem:[%s259 + $0x38] sm:$0xff]
            %272 = vst [vmem:[%s260 + $0x38] sm:$0xff] %v271
            %v273 = vld [vmem:[%s259 + $0x48] sm:$0xff]
            %274 = vst [vmem:[%s260 + $0x48] sm:$0xff] %v273
            %v275 = vld [vmem:[%s259 + $0x50] sm:$0xff]
            %276 = vst [vmem:[%s260 + $0x50] sm:$0xff] %v275
            %v277 = vld [vmem:[%s259 + $0x60] sm:$0xff]
            %278 = vst [vmem:[%s260 + $0x60] sm:$0xff] %v277
            %v279 = vld [vmem:[%s259 + $0x68] sm:$0xff]
            %280 = vst [vmem:[%s260 + $0x68] sm:$0xff] %v279
            %v281 = vld [vmem:[%s259 + $0x78] sm:$0xff]
            %282 = vst [vmem:[%s260 + $0x78] sm:$0xff] %v281
            %v283 = vld [vmem:[%s259 + $0x80] sm:$0xff]
            %284 = vst [vmem:[%s260 + $0x80] sm:$0xff] %v283
            %v285 = vld [vmem:[%s259 + $0x90] sm:$0xff]
            %286 = vst [vmem:[%s260 + $0x90] sm:$0xff] %v285
            %v287 = vld [vmem:[%s259 + $0x98] sm:$0xff]
            %288 = vst [vmem:[%s260 + $0x98] sm:$0xff] %v287
            %v289 = vld [vmem:[%s259 + $0xa8] sm:$0xff]
            %290 = vst [vmem:[%s260 + $0xa8] sm:$0xff] %v289
            %v291 = vld [vmem:[%s259 + $0xb0] sm:$0xff]
            %292 = vst [vmem:[%s260 + $0xb0] sm:$0xff] %v291
            %v293 = vld [vmem:[%s259 + $0xc0] sm:$0xff]
            %294 = vst [vmem:[%s260 + $0xc0] sm:$0xff] %v293
            %v295 = vld [vmem:[%s259 + $0xc8] sm:$0xff]
            %296 = vst [vmem:[%s260 + $0xc8] sm:$0xff] %v295
            %v297 = vld [vmem:[%s259 + $0xd8] sm:$0xff]
            %298 = vst [vmem:[%s260 + $0xd8] sm:$0xff] %v297
            %v299 = vld [vmem:[%s259 + $0xe0] sm:$0xff]
            %300 = vst [vmem:[%s260 + $0xe0] sm:$0xff] %v299
          $region45: #{double_conv.2} parent=39 // loop_footer
            %s258 = sadd.s32 1, %s254
          $region46: #{double_conv.2} parent=39 // loop_footer_branch
            %253 = sbr.rel target = $region42
          $region47: #{double_conv.2} parent=39 // loop_exit
            _
          %s302 = ssub.s32 4, 1
          loop: start=0, step=1, limit=1
          $region48: #{double_conv.2} parent=39 // loop_pre_header
            _
          $region49: #{double_conv.2} parent=39 // loop_header
            %s304 = sphi 0, %s308
            %p305 = scmp.ge.s32.totalorder %s304, 1
            %s309 = sphi %s251, %s251
            %s310 = sphi %s252, %s252
          $region50: #{double_conv.2} parent=39 // loop_header_branch
            %307 = sbr.rel (%p305) target = $region54
          $region51: #{double_conv.2} parent=39 // loop_body
            %v311 = vld [vmem:[%s309] sm:%s302]
            %312 = vst [vmem:[%s310] sm:%s302] %v311
            %v313 = vld [vmem:[%s309 + $0x18] sm:%s302]
            %314 = vst [vmem:[%s310 + $0x18] sm:%s302] %v313
            %v315 = vld [vmem:[%s309 + $0x30] sm:%s302]
            %316 = vst [vmem:[%s310 + $0x30] sm:%s302] %v315
            %v317 = vld [vmem:[%s309 + $0x48] sm:%s302]
            %318 = vst [vmem:[%s310 + $0x48] sm:%s302] %v317
            %v319 = vld [vmem:[%s309 + $0x60] sm:%s302]
            %320 = vst [vmem:[%s310 + $0x60] sm:%s302] %v319
            %v321 = vld [vmem:[%s309 + $0x78] sm:%s302]
            %322 = vst [vmem:[%s310 + $0x78] sm:%s302] %v321
            %v323 = vld [vmem:[%s309 + $0x90] sm:%s302]
            %324 = vst [vmem:[%s310 + $0x90] sm:%s302] %v323
            %v325 = vld [vmem:[%s309 + $0xa8] sm:%s302]
            %326 = vst [vmem:[%s310 + $0xa8] sm:%s302] %v325
            %v327 = vld [vmem:[%s309 + $0xc0] sm:%s302]
            %328 = vst [vmem:[%s310 + $0xc0] sm:%s302] %v327
            %v329 = vld [vmem:[%s309 + $0xd8] sm:%s302]
            %330 = vst [vmem:[%s310 + $0xd8] sm:%s302] %v329
          $region52: #{double_conv.2} parent=39 // loop_footer
            %s308 = sadd.s32 1, %s304
          $region53: #{double_conv.2} parent=39 // loop_footer_branch
            %303 = sbr.rel target = $region49
          $region54: #{double_conv.2} parent=39 // loop_exit
            _
        $region40: #{double_conv.2} parent=35 // pred_fallthru
          _
        // Predicated region
        $region55: #{double_conv.2} parent=35 // pred_check
          _
        $region56: #{double_conv.2} parent=35 // pred_check_branch
          %333 = sbr.rel (0) target = $region58
        $region57: #{double_conv.2} parent=35 // pred_region
          %334 = vsyncadd %s248, 2880
        $region58: #{double_conv.2} parent=35 // pred_fallthru
          _
      $region36: #{double_conv.2} parent=31 // pred_fallthru
        _
      %s335 = smul.u32 %s236, 240
      %s336 = scalar_lea.vmem [#allocation2], %s335
      %s337 = scalar_lea.sflag [#allocation3], %s236
      %s338 = smul.u32 10, 18
      %s339 = smul.u32 %s338, 1
      %s340 = sshll.u32 %s339, 4
      %341 = dma.done %s337, %s340
      %s342 = sadd.s32 %s22, 1
      %p343 = scmp.lt.s32.totalorder %s342, 2
      // Predicated region
      $region59: #{double_conv.2} parent=31 // pred_check
        %p344 = pneg %p343
      $region60: #{double_conv.2} parent=31 // pred_check_branch
        %346 = sbr.rel (%p344) target = $region62
      $region61: #{double_conv.2} parent=31 // pred_region
        %s347 = ssub.s32 1, %s236
        %s348 = smul.u32 %s342, 8
        %s349 = smul.u32 %s348, 24
        %s350 = smul.u32 %s21, 432
        %s351 = sadd.s32 %s349, %s350
        %s352 = scalar_lea.vmem %s0, %s351
        %s353 = smul.u32 %s347, 240
        %s354 = scalar_lea.vmem [#allocation2], %s353
        %s355 = scalar_lea.sflag [#allocation3], %s347
        // Predicated region
        $region63: #{double_conv.2} parent=61 // pred_check
          _
        $region64: #{double_conv.2} parent=61 // pred_check_branch
          %357 = sbr.rel (0) target = $region66
        $region65: #{double_conv.2} parent=61 // pred_region
          %s358 = scalar_lea.vmem %s352, 16
          %s359 = scalar_lea.vmem %s354, 16 [#allocation2]
          loop: start=0, step=1, limit=1
          $region67: #{double_conv.2} parent=65 // loop_pre_header
            _
          $region68: #{double_conv.2} parent=65 // loop_header
            %s361 = sphi 0, %s365
            %p362 = scmp.ge.s32.totalorder %s361, 1
            %s366 = sphi %s352, %s352
            %s367 = sphi %s354, %s354
          $region69: #{double_conv.2} parent=65 // loop_header_branch
            %364 = sbr.rel (%p362) target = $region73
          $region70: #{double_conv.2} parent=65 // loop_body
            %v368 = vld [vmem:[%s366] sm:$0xff]
            %369 = vst [vmem:[%s367] sm:$0xff] %v368
            %v370 = vld [vmem:[%s366 + $0x8] sm:$0xff]
            %371 = vst [vmem:[%s367 + $0x8] sm:$0xff] %v370
            %v372 = vld [vmem:[%s366 + $0x18] sm:$0xff]
            %373 = vst [vmem:[%s367 + $0x18] sm:$0xff] %v372
            %v374 = vld [vmem:[%s366 + $0x20] sm:$0xff]
            %375 = vst [vmem:[%s367 + $0x20] sm:$0xff] %v374
            %v376 = vld [vmem:[%s366 + $0x30] sm:$0xff]
            %377 = vst [vmem:[%s367 + $0x30] sm:$0xff] %v376
            %v378 = vld [vmem:[%s366 + $0x38] sm:$0xff]
            %379 = vst [vmem:[%s367 + $0x38] sm:$0xff] %v378
            %v380 = vld [vmem:[%s366 + $0x48] sm:$0xff]
            %381 = vst [vmem:[%s367 + $0x48] sm:$0xff] %v380
            %v382 = vld [vmem:[%s366 + $0x50] sm:$0xff]
            %383 = vst [vmem:[%s367 + $0x50] sm:$0xff] %v382
            %v384 = vld [vmem:[%s366 + $0x60] sm:$0xff]
            %385 = vst [vmem:[%s367 + $0x60] sm:$0xff] %v384
            %v386 = vld [vmem:[%s366 + $0x68] sm:$0xff]
            %387 = vst [vmem:[%s367 + $0x68] sm:$0xff] %v386
            %v388 = vld [vmem:[%s366 + $0x78] sm:$0xff]
            %389 = vst [vmem:[%s367 + $0x78] sm:$0xff] %v388
            %v390 = vld [vmem:[%s366 + $0x80] sm:$0xff]
            %391 = vst [vmem:[%s367 + $0x80] sm:$0xff] %v390
            %v392 = vld [vmem:[%s366 + $0x90] sm:$0xff]
            %393 = vst [vmem:[%s367 + $0x90] sm:$0xff] %v392
            %v394 = vld [vmem:[%s366 + $0x98] sm:$0xff]
            %395 = vst [vmem:[%s367 + $0x98] sm:$0xff] %v394
            %v396 = vld [vmem:[%s366 + $0xa8] sm:$0xff]
            %397 = vst [vmem:[%s367 + $0xa8] sm:$0xff] %v396
            %v398 = vld [vmem:[%s366 + $0xb0] sm:$0xff]
            %399 = vst [vmem:[%s367 + $0xb0] sm:$0xff] %v398
            %v400 = vld [vmem:[%s366 + $0xc0] sm:$0xff]
            %401 = vst [vmem:[%s367 + $0xc0] sm:$0xff] %v400
            %v402 = vld [vmem:[%s366 + $0xc8] sm:$0xff]
            %403 = vst [vmem:[%s367 + $0xc8] sm:$0xff] %v402
            %v404 = vld [vmem:[%s366 + $0xd8] sm:$0xff]
            %405 = vst [vmem:[%s367 + $0xd8] sm:$0xff] %v404
            %v406 = vld [vmem:[%s366 + $0xe0] sm:$0xff]
            %407 = vst [vmem:[%s367 + $0xe0] sm:$0xff] %v406
          $region71: #{double_conv.2} parent=65 // loop_footer
            %s365 = sadd.s32 1, %s361
          $region72: #{double_conv.2} parent=65 // loop_footer_branch
            %360 = sbr.rel target = $region68
          $region73: #{double_conv.2} parent=65 // loop_exit
            _
          %s409 = ssub.s32 4, 1
          loop: start=0, step=1, limit=1
          $region74: #{double_conv.2} parent=65 // loop_pre_header
            _
          $region75: #{double_conv.2} parent=65 // loop_header
            %s411 = sphi 0, %s415
            %p412 = scmp.ge.s32.totalorder %s411, 1
            %s416 = sphi %s358, %s358
            %s417 = sphi %s359, %s359
          $region76: #{double_conv.2} parent=65 // loop_header_branch
            %414 = sbr.rel (%p412) target = $region80
          $region77: #{double_conv.2} parent=65 // loop_body
            %v418 = vld [vmem:[%s416] sm:%s409]
            %419 = vst [vmem:[%s417] sm:%s409] %v418
            %v420 = vld [vmem:[%s416 + $0x18] sm:%s409]
            %421 = vst [vmem:[%s417 + $0x18] sm:%s409] %v420
            %v422 = vld [vmem:[%s416 + $0x30] sm:%s409]
            %423 = vst [vmem:[%s417 + $0x30] sm:%s409] %v422
            %v424 = vld [vmem:[%s416 + $0x48] sm:%s409]
            %425 = vst [vmem:[%s417 + $0x48] sm:%s409] %v424
            %v426 = vld [vmem:[%s416 + $0x60] sm:%s409]
            %427 = vst [vmem:[%s417 + $0x60] sm:%s409] %v426
            %v428 = vld [vmem:[%s416 + $0x78] sm:%s409]
            %429 = vst [vmem:[%s417 + $0x78] sm:%s409] %v428
            %v430 = vld [vmem:[%s416 + $0x90] sm:%s409]
            %431 = vst [vmem:[%s417 + $0x90] sm:%s409] %v430
            %v432 = vld [vmem:[%s416 + $0xa8] sm:%s409]
            %433 = vst [vmem:[%s417 + $0xa8] sm:%s409] %v432
            %v434 = vld [vmem:[%s416 + $0xc0] sm:%s409]
            %435 = vst [vmem:[%s417 + $0xc0] sm:%s409] %v434
            %v436 = vld [vmem:[%s416 + $0xd8] sm:%s409]
            %437 = vst [vmem:[%s417 + $0xd8] sm:%s409] %v436
          $region78: #{double_conv.2} parent=65 // loop_footer
            %s415 = sadd.s32 1, %s411
          $region79: #{double_conv.2} parent=65 // loop_footer_branch
            %410 = sbr.rel target = $region75
          $region80: #{double_conv.2} parent=65 // loop_exit
            _
        $region66: #{double_conv.2} parent=61 // pred_fallthru
          _
        // Predicated region
        $region81: #{double_conv.2} parent=61 // pred_check
          _
        $region82: #{double_conv.2} parent=61 // pred_check_branch
          %440 = sbr.rel (0) target = $region84
        $region83: #{double_conv.2} parent=61 // pred_region
          %441 = vsyncadd %s355, 2880
        $region84: #{double_conv.2} parent=61 // pred_fallthru
          _
      $region62: #{double_conv.2} parent=31 // pred_fallthru
        _
      %v442 = vld [vmem:[%s336] sm:$0xff]
      %v443 = vld [vmem:[%s336 + $0x8] sm:$0xff]
      %v444 = vld [vmem:[%s336 + $0x18] sm:$0xff]
      %v445 = vld [vmem:[%s336 + $0x20] sm:$0xff]
      %v446 = vld [vmem:[%s336 + $0x30] sm:$0xff]
      %v447 = vld [vmem:[%s336 + $0x38] sm:$0xff]
      %v448 = vld [vmem:[%s336 + $0x48] sm:$0xff]
      %v449 = vld [vmem:[%s336 + $0x50] sm:$0xff]
      %v450 = vld [vmem:[%s336 + $0x60] sm:$0xff]
      %v451 = vld [vmem:[%s336 + $0x68] sm:$0xff]
      %v452 = vld [vmem:[%s336 + $0x78] sm:$0xff]
      %v453 = vld [vmem:[%s336 + $0x80] sm:$0xff]
      %v454 = vld [vmem:[%s336 + $0x90] sm:$0xff]
      %v455 = vld [vmem:[%s336 + $0x98] sm:$0xff]
      %v456 = vld [vmem:[%s336 + $0xa8] sm:$0xff]
      %v457 = vld [vmem:[%s336 + $0xb0] sm:$0xff]
      %v458 = vld [vmem:[%s336 + $0x1] sm:$0xff]
      %v459 = vld [vmem:[%s336 + $0x9] sm:$0xff]
      %v460 = vld [vmem:[%s336 + $0x19] sm:$0xff]
      %v461 = vld [vmem:[%s336 + $0x21] sm:$0xff]
      %v462 = vld [vmem:[%s336 + $0x31] sm:$0xff]
      %v463 = vld [vmem:[%s336 + $0x39] sm:$0xff]
      %v464 = vld [vmem:[%s336 + $0x49] sm:$0xff]
      %v465 = vld [vmem:[%s336 + $0x51] sm:$0xff]
      %v466 = vld [vmem:[%s336 + $0x61] sm:$0xff]
      %v467 = vld [vmem:[%s336 + $0x69] sm:$0xff]
      %v468 = vld [vmem:[%s336 + $0x79] sm:$0xff]
      %v469 = vld [vmem:[%s336 + $0x81] sm:$0xff]
      %v470 = vld [vmem:[%s336 + $0x91] sm:$0xff]
      %v471 = vld [vmem:[%s336 + $0x99] sm:$0xff]
      %v472 = vld [vmem:[%s336 + $0xa9] sm:$0xff]
      %v473 = vld [vmem:[%s336 + $0xb1] sm:$0xff]
      %v474 = vld [vmem:[%s336 + $0x2] sm:$0xff]
      %v475 = vld [vmem:[%s336 + $0xa] sm:$0xff]
      %v476 = vld [vmem:[%s336 + $0x1a] sm:$0xff]
      %v477 = vld [vmem:[%s336 + $0x22] sm:$0xff]
      %v478 = vld [vmem:[%s336 + $0x32] sm:$0xff]
      %v479 = vld [vmem:[%s336 + $0x3a] sm:$0xff]
      %v480 = vld [vmem:[%s336 + $0x4a] sm:$0xff]
      %v481 = vld [vmem:[%s336 + $0x52] sm:$0xff]
      %v482 = vld [vmem:[%s336 + $0x62] sm:$0xff]
      %v483 = vld [vmem:[%s336 + $0x6a] sm:$0xff]
      %v484 = vld [vmem:[%s336 + $0x7a] sm:$0xff]
      %v485 = vld [vmem:[%s336 + $0x82] sm:$0xff]
      %v486 = vld [vmem:[%s336 + $0x92] sm:$0xff]
      %v487 = vld [vmem:[%s336 + $0x9a] sm:$0xff]
      %v488 = vld [vmem:[%s336 + $0xaa] sm:$0xff]
      %v489 = vld [vmem:[%s336 + $0xb2] sm:$0xff]
      %v490 = vld [vmem:[%s1] sm:$0xff]
      %v491 = vld [vmem:[%s1 + $0x8] sm:$0xff]
      %v492 = vld [vmem:[%s1 + $0x10] sm:$0xff]
      %v493 = vld [vmem:[%s1 + $0x18] sm:$0xff]
      %v494 = vld [vmem:[%s1 + $0x20] sm:$0xff]
      %v495 = vld [vmem:[%s1 + $0x28] sm:$0xff]
      %v496 = vld [vmem:[%s1 + $0x30] sm:$0xff]
      %v497 = vld [vmem:[%s1 + $0x38] sm:$0xff]
      %v498 = vld [vmem:[%s1 + $0x40] sm:$0xff]
      %v499 = vld [vmem:[%s1 + $0x48] sm:$0xff]
      %v500 = vld [vmem:[%s1 + $0x50] sm:$0xff]
      %v501 = vld [vmem:[%s1 + $0x58] sm:$0xff]
      %v502 = vld [vmem:[%s1 + $0x60] sm:$0xff]
      %v503 = vld [vmem:[%s1 + $0x68] sm:$0xff]
      %v504 = vld [vmem:[%s1 + $0x70] sm:$0xff]
      %v505 = vld [vmem:[%s1 + $0x78] sm:$0xff]
      %v506 = vld [vmem:[%s1 + $0x80] sm:$0xff]
      %v507 = vld [vmem:[%s1 + $0x88] sm:$0xff]
      %v508 = vld [vmem:[%s1 + $0x90] sm:$0xff]
      %v509 = vld [vmem:[%s1 + $0x98] sm:$0xff]
      %v510 = vld [vmem:[%s1 + $0xa0] sm:$0xff]
      %v511 = vld [vmem:[%s1 + $0xa8] sm:$0xff]
      %v512 = vld [vmem:[%s1 + $0xb0] sm:$0xff]
      %v513 = vld [vmem:[%s1 + $0xb8] sm:$0xff]
      %v514 = vld [vmem:[%s1 + $0xc0] sm:$0xff]
      %v515 = vld [vmem:[%s1 + $0xc8] sm:$0xff]
      %v516 = vld [vmem:[%s1 + $0xd0] sm:$0xff]
      %v517 = vld [vmem:[%s1 + $0xd8] sm:$0xff]
      %v518 = vld [vmem:[%s1 + $0xe0] sm:$0xff]
      %v519 = vld [vmem:[%s1 + $0xe8] sm:$0xff]
      %v520 = vld [vmem:[%s1 + $0xf0] sm:$0xff]
      %v521 = vld [vmem:[%s1 + $0xf8] sm:$0xff]
      %v522 = vld [vmem:[%s1 + $0x100] sm:$0xff]
      %v523 = vld [vmem:[%s1 + $0x108] sm:$0xff]
      %v524 = vld [vmem:[%s1 + $0x110] sm:$0xff]
      %v525 = vld [vmem:[%s1 + $0x118] sm:$0xff]
      %v526 = vld [vmem:[%s1 + $0x120] sm:$0xff]
      %v527 = vld [vmem:[%s1 + $0x128] sm:$0xff]
      %v528 = vld [vmem:[%s1 + $0x130] sm:$0xff]
      %v529 = vld [vmem:[%s1 + $0x138] sm:$0xff]
      %v530 = vld [vmem:[%s1 + $0x140] sm:$0xff]
      %v531 = vld [vmem:[%s1 + $0x148] sm:$0xff]
      %v532 = vld [vmem:[%s1 + $0x150] sm:$0xff]
      %v533 = vld [vmem:[%s1 + $0x158] sm:$0xff]
      %v534 = vld [vmem:[%s1 + $0x160] sm:$0xff]
      %v535 = vld [vmem:[%s1 + $0x168] sm:$0xff]
      %v536 = vld [vmem:[%s1 + $0x170] sm:$0xff]
      %v537 = vld [vmem:[%s1 + $0x178] sm:$0xff]
      %s538 = scalar_lea.vmem %s336, 24 [#allocation2]
      %v539 = vld [vmem:[%s538] sm:$0xff]
      %v540 = vld [vmem:[%s538 + $0x8] sm:$0xff]
      %v541 = vld [vmem:[%s538 + $0x18] sm:$0xff]
      %v542 = vld [vmem:[%s538 + $0x20] sm:$0xff]
      %v543 = vld [vmem:[%s538 + $0x30] sm:$0xff]
      %v544 = vld [vmem:[%s538 + $0x38] sm:$0xff]
      %v545 = vld [vmem:[%s538 + $0x48] sm:$0xff]
      %v546 = vld [vmem:[%s538 + $0x50] sm:$0xff]
      %v547 = vld [vmem:[%s538 + $0x60] sm:$0xff]
      %v548 = vld [vmem:[%s538 + $0x68] sm:$0xff]
      %v549 = vld [vmem:[%s538 + $0x78] sm:$0xff]
      %v550 = vld [vmem:[%s538 + $0x80] sm:$0xff]
      %v551 = vld [vmem:[%s538 + $0x90] sm:$0xff]
      %v552 = vld [vmem:[%s538 + $0x98] sm:$0xff]
      %v553 = vld [vmem:[%s538 + $0xa8] sm:$0xff]
      %v554 = vld [vmem:[%s538 + $0xb0] sm:$0xff]
      %v555 = vld [vmem:[%s538 + $0x1] sm:$0xff]
      %v556 = vld [vmem:[%s538 + $0x9] sm:$0xff]
      %v557 = vld [vmem:[%s538 + $0x19] sm:$0xff]
      %v558 = vld [vmem:[%s538 + $0x21] sm:$0xff]
      %v559 = vld [vmem:[%s538 + $0x31] sm:$0xff]
      %v560 = vld [vmem:[%s538 + $0x39] sm:$0xff]
      %v561 = vld [vmem:[%s538 + $0x49] sm:$0xff]
      %v562 = vld [vmem:[%s538 + $0x51] sm:$0xff]
      %v563 = vld [vmem:[%s538 + $0x61] sm:$0xff]
      %v564 = vld [vmem:[%s538 + $0x69] sm:$0xff]
      %v565 = vld [vmem:[%s538 + $0x79] sm:$0xff]
      %v566 = vld [vmem:[%s538 + $0x81] sm:$0xff]
      %v567 = vld [vmem:[%s538 + $0x91] sm:$0xff]
      %v568 = vld [vmem:[%s538 + $0x99] sm:$0xff]
      %v569 = vld [vmem:[%s538 + $0xa9] sm:$0xff]
      %v570 = vld [vmem:[%s538 + $0xb1] sm:$0xff]
      %v571 = vld [vmem:[%s538 + $0x2] sm:$0xff]
      %v572 = vld [vmem:[%s538 + $0xa] sm:$0xff]
      %v573 = vld [vmem:[%s538 + $0x1a] sm:$0xff]
      %v574 = vld [vmem:[%s538 + $0x22] sm:$0xff]
      %v575 = vld [vmem:[%s538 + $0x32] sm:$0xff]
      %v576 = vld [vmem:[%s538 + $0x3a] sm:$0xff]
      %v577 = vld [vmem:[%s538 + $0x4a] sm:$0xff]
      %v578 = vld [vmem:[%s538 + $0x52] sm:$0xff]
      %v579 = vld [vmem:[%s538 + $0x62] sm:$0xff]
      %v580 = vld [vmem:[%s538 + $0x6a] sm:$0xff]
      %v581 = vld [vmem:[%s538 + $0x7a] sm:$0xff]
      %v582 = vld [vmem:[%s538 + $0x82] sm:$0xff]
      %v583 = vld [vmem:[%s538 + $0x92] sm:$0xff]
      %v584 = vld [vmem:[%s538 + $0x9a] sm:$0xff]
      %v585 = vld [vmem:[%s538 + $0xaa] sm:$0xff]
      %v586 = vld [vmem:[%s538 + $0xb2] sm:$0xff]
      %v587 = vld [vmem:[%s1 + $0x180] sm:$0xff]
      %v588 = vld [vmem:[%s1 + $0x188] sm:$0xff]
      %v589 = vld [vmem:[%s1 + $0x190] sm:$0xff]
      %v590 = vld [vmem:[%s1 + $0x198] sm:$0xff]
      %v591 = vld [vmem:[%s1 + $0x1a0] sm:$0xff]
      %v592 = vld [vmem:[%s1 + $0x1a8] sm:$0xff]
      %v593 = vld [vmem:[%s1 + $0x1b0] sm:$0xff]
      %v594 = vld [vmem:[%s1 + $0x1b8] sm:$0xff]
      %v595 = vld [vmem:[%s1 + $0x1c0] sm:$0xff]
      %v596 = vld [vmem:[%s1 + $0x1c8] sm:$0xff]
      %v597 = vld [vmem:[%s1 + $0x1d0] sm:$0xff]
      %v598 = vld [vmem:[%s1 + $0x1d8] sm:$0xff]
      %v599 = vld [vmem:[%s1 + $0x1e0] sm:$0xff]
      %v600 = vld [vmem:[%s1 + $0x1e8] sm:$0xff]
      %v601 = vld [vmem:[%s1 + $0x1f0] sm:$0xff]
      %v602 = vld [vmem:[%s1 + $0x1f8] sm:$0xff]
      %v603 = vld [vmem:[%s1 + $0x200] sm:$0xff]
      %v604 = vld [vmem:[%s1 + $0x208] sm:$0xff]
      %v605 = vld [vmem:[%s1 + $0x210] sm:$0xff]
      %v606 = vld [vmem:[%s1 + $0x218] sm:$0xff]
      %v607 = vld [vmem:[%s1 + $0x220] sm:$0xff]
      %v608 = vld [vmem:[%s1 + $0x228] sm:$0xff]
      %v609 = vld [vmem:[%s1 + $0x230] sm:$0xff]
      %v610 = vld [vmem:[%s1 + $0x238] sm:$0xff]
      %v611 = vld [vmem:[%s1 + $0x240] sm:$0xff]
      %v612 = vld [vmem:[%s1 + $0x248] sm:$0xff]
      %v613 = vld [vmem:[%s1 + $0x250] sm:$0xff]
      %v614 = vld [vmem:[%s1 + $0x258] sm:$0xff]
      %v615 = vld [vmem:[%s1 + $0x260] sm:$0xff]
      %v616 = vld [vmem:[%s1 + $0x268] sm:$0xff]
      %v617 = vld [vmem:[%s1 + $0x270] sm:$0xff]
      %v618 = vld [vmem:[%s1 + $0x278] sm:$0xff]
      %v619 = vld [vmem:[%s1 + $0x280] sm:$0xff]
      %v620 = vld [vmem:[%s1 + $0x288] sm:$0xff]
      %v621 = vld [vmem:[%s1 + $0x290] sm:$0xff]
      %v622 = vld [vmem:[%s1 + $0x298] sm:$0xff]
      %v623 = vld [vmem:[%s1 + $0x2a0] sm:$0xff]
      %v624 = vld [vmem:[%s1 + $0x2a8] sm:$0xff]
      %v625 = vld [vmem:[%s1 + $0x2b0] sm:$0xff]
      %v626 = vld [vmem:[%s1 + $0x2b8] sm:$0xff]
      %v627 = vld [vmem:[%s1 + $0x2c0] sm:$0xff]
      %v628 = vld [vmem:[%s1 + $0x2c8] sm:$0xff]
      %v629 = vld [vmem:[%s1 + $0x2d0] sm:$0xff]
      %v630 = vld [vmem:[%s1 + $0x2d8] sm:$0xff]
      %v631 = vld [vmem:[%s1 + $0x2e0] sm:$0xff]
      %v632 = vld [vmem:[%s1 + $0x2e8] sm:$0xff]
      %v633 = vld [vmem:[%s1 + $0x2f0] sm:$0xff]
      %v634 = vld [vmem:[%s1 + $0x2f8] sm:$0xff]
      %635 = vmatpush.msra.mxu0 %v602
      %636 = vmatpush.msra.mxu0 %v601
      %637 = vmatpush.msra.mxu0 %v600
      %638 = vmatpush.msra.mxu0 %v599
      %639 = vmatpush.msra.mxu0 %v598
      %640 = vmatpush.msra.mxu0 %v597
      %641 = vmatpush.msra.mxu0 %v596
      %642 = vmatpush.msra.mxu0 %v595
      %643 = vmatpush.msra.mxu0 %v594
      %644 = vmatpush.msra.mxu0 %v593
      %645 = vmatpush.msra.mxu0 %v592
      %646 = vmatpush.msra.mxu0 %v591
      %647 = vmatpush.msra.mxu0 %v590
      %648 = vmatpush.msra.mxu0 %v589
      %649 = vmatpush.msra.mxu0 %v588
      %650 = vmatpush.msra.mxu0 %v587
      %651 = vmatmul.f32.gmra.mxu0 %v539
      %v652 = vpop.f32.mrf.mxu0
      %v653 = vadd.f32 0.0, %v652
      %654 = vmatmul.f32.gmra.mxu0 %v540
      %v655 = vpop.f32.mrf.mxu0
      %v656 = vadd.f32 0.0, %v655
      %657 = vmatmul.f32.gmra.mxu0 %v541
      %v658 = vpop.f32.mrf.mxu0
      %v659 = vadd.f32 0.0, %v658
      %660 = vmatmul.f32.gmra.mxu0 %v542
      %v661 = vpop.f32.mrf.mxu0
      %v662 = vadd.f32 0.0, %v661
      %663 = vmatmul.f32.gmra.mxu0 %v543
      %v664 = vpop.f32.mrf.mxu0
      %v665 = vadd.f32 0.0, %v664
      %666 = vmatmul.f32.gmra.mxu0 %v544
      %v667 = vpop.f32.mrf.mxu0
      %v668 = vadd.f32 0.0, %v667
      %669 = vmatmul.f32.gmra.mxu0 %v545
      %v670 = vpop.f32.mrf.mxu0
      %v671 = vadd.f32 0.0, %v670
      %672 = vmatmul.f32.gmra.mxu0 %v546
      %v673 = vpop.f32.mrf.mxu0
      %v674 = vadd.f32 0.0, %v673
      %675 = vmatmul.f32.gmra.mxu0 %v547
      %v676 = vpop.f32.mrf.mxu0
      %v677 = vadd.f32 0.0, %v676
      %678 = vmatmul.f32.gmra.mxu0 %v548
      %v679 = vpop.f32.mrf.mxu0
      %v680 = vadd.f32 0.0, %v679
      %681 = vmatmul.f32.gmra.mxu0 %v549
      %v682 = vpop.f32.mrf.mxu0
      %v683 = vadd.f32 0.0, %v682
      %684 = vmatmul.f32.gmra.mxu0 %v550
      %v685 = vpop.f32.mrf.mxu0
      %v686 = vadd.f32 0.0, %v685
      %687 = vmatmul.f32.gmra.mxu0 %v551
      %v688 = vpop.f32.mrf.mxu0
      %v689 = vadd.f32 0.0, %v688
      %690 = vmatmul.f32.gmra.mxu0 %v552
      %v691 = vpop.f32.mrf.mxu0
      %v692 = vadd.f32 0.0, %v691
      %693 = vmatmul.f32.gmra.mxu0 %v553
      %v694 = vpop.f32.mrf.mxu0
      %v695 = vadd.f32 0.0, %v694
      %696 = vmatmul.f32.gmra.mxu0 %v554
      %v697 = vpop.f32.mrf.mxu0
      %v698 = vadd.f32 0.0, %v697
      %699 = vdwg.mxu0
      %700 = vmatpush.msra.mxu0 %v618
      %701 = vmatpush.msra.mxu0 %v617
      %702 = vmatpush.msra.mxu0 %v616
      %703 = vmatpush.msra.mxu0 %v615
      %704 = vmatpush.msra.mxu0 %v614
      %705 = vmatpush.msra.mxu0 %v613
      %706 = vmatpush.msra.mxu0 %v612
      %707 = vmatpush.msra.mxu0 %v611
      %708 = vmatpush.msra.mxu0 %v610
      %709 = vmatpush.msra.mxu0 %v609
      %710 = vmatpush.msra.mxu0 %v608
      %711 = vmatpush.msra.mxu0 %v607
      %712 = vmatpush.msra.mxu0 %v606
      %713 = vmatpush.msra.mxu0 %v605
      %714 = vmatpush.msra.mxu0 %v604
      %715 = vmatpush.msra.mxu0 %v603
      %716 = vmatmul.f32.gmra.mxu0 %v555
      %v717 = vpop.f32.mrf.mxu0
      %v718 = vadd.f32 %v653, %v717
      %719 = vmatmul.f32.gmra.mxu0 %v556
      %v720 = vpop.f32.mrf.mxu0
      %v721 = vadd.f32 %v656, %v720
      %722 = vmatmul.f32.gmra.mxu0 %v557
      %v723 = vpop.f32.mrf.mxu0
      %v724 = vadd.f32 %v659, %v723
      %725 = vmatmul.f32.gmra.mxu0 %v558
      %v726 = vpop.f32.mrf.mxu0
      %v727 = vadd.f32 %v662, %v726
      %728 = vmatmul.f32.gmra.mxu0 %v559
      %v729 = vpop.f32.mrf.mxu0
      %v730 = vadd.f32 %v665, %v729
      %731 = vmatmul.f32.gmra.mxu0 %v560
      %v732 = vpop.f32.mrf.mxu0
      %v733 = vadd.f32 %v668, %v732
      %734 = vmatmul.f32.gmra.mxu0 %v561
      %v735 = vpop.f32.mrf.mxu0
      %v736 = vadd.f32 %v671, %v735
      %737 = vmatmul.f32.gmra.mxu0 %v562
      %v738 = vpop.f32.mrf.mxu0
      %v739 = vadd.f32 %v674, %v738
      %740 = vmatmul.f32.gmra.mxu0 %v563
      %v741 = vpop.f32.mrf.mxu0
      %v742 = vadd.f32 %v677, %v741
      %743 = vmatmul.f32.gmra.mxu0 %v564
      %v744 = vpop.f32.mrf.mxu0
      %v745 = vadd.f32 %v680, %v744
      %746 = vmatmul.f32.gmra.mxu0 %v565
      %v747 = vpop.f32.mrf.mxu0
      %v748 = vadd.f32 %v683, %v747
      %749 = vmatmul.f32.gmra.mxu0 %v566
      %v750 = vpop.f32.mrf.mxu0
      %v751 = vadd.f32 %v686, %v750
      %752 = vmatmul.f32.gmra.mxu0 %v567
      %v753 = vpop.f32.mrf.mxu0
      %v754 = vadd.f32 %v689, %v753
      %755 = vmatmul.f32.gmra.mxu0 %v568
      %v756 = vpop.f32.mrf.mxu0
      %v757 = vadd.f32 %v692, %v756
      %758 = vmatmul.f32.gmra.mxu0 %v569
      %v759 = vpop.f32.mrf.mxu0
      %v760 = vadd.f32 %v695, %v759
      %761 = vmatmul.f32.gmra.mxu0 %v570
      %v762 = vpop.f32.mrf.mxu0
      %v763 = vadd.f32 %v698, %v762
      %764 = vdwg.mxu0
      %765 = vmatpush.msra.mxu0 %v634
      %766 = vmatpush.msra.mxu0 %v633
      %767 = vmatpush.msra.mxu0 %v632
      %768 = vmatpush.msra.mxu0 %v631
      %769 = vmatpush.msra.mxu0 %v630
      %770 = vmatpush.msra.mxu0 %v629
      %771 = vmatpush.msra.mxu0 %v628
      %772 = vmatpush.msra.mxu0 %v627
      %773 = vmatpush.msra.mxu0 %v626
      %774 = vmatpush.msra.mxu0 %v625
      %775 = vmatpush.msra.mxu0 %v624
      %776 = vmatpush.msra.mxu0 %v623
      %777 = vmatpush.msra.mxu0 %v622
      %778 = vmatpush.msra.mxu0 %v621
      %779 = vmatpush.msra.mxu0 %v620
      %780 = vmatpush.msra.mxu0 %v619
      %781 = vmatmul.f32.gmra.mxu0 %v571
      %v782 = vpop.f32.mrf.mxu0
      %v783 = vadd.f32 %v718, %v782
      %784 = vmatmul.f32.gmra.mxu0 %v572
      %v785 = vpop.f32.mrf.mxu0
      %v786 = vadd.f32 %v721, %v785
      %787 = vmatmul.f32.gmra.mxu0 %v573
      %v788 = vpop.f32.mrf.mxu0
      %v789 = vadd.f32 %v724, %v788
      %790 = vmatmul.f32.gmra.mxu0 %v574
      %v791 = vpop.f32.mrf.mxu0
      %v792 = vadd.f32 %v727, %v791
      %793 = vmatmul.f32.gmra.mxu0 %v575
      %v794 = vpop.f32.mrf.mxu0
      %v795 = vadd.f32 %v730, %v794
      %796 = vmatmul.f32.gmra.mxu0 %v576
      %v797 = vpop.f32.mrf.mxu0
      %v798 = vadd.f32 %v733, %v797
      %799 = vmatmul.f32.gmra.mxu0 %v577
      %v800 = vpop.f32.mrf.mxu0
      %v801 = vadd.f32 %v736, %v800
      %802 = vmatmul.f32.gmra.mxu0 %v578
      %v803 = vpop.f32.mrf.mxu0
      %v804 = vadd.f32 %v739, %v803
      %805 = vmatmul.f32.gmra.mxu0 %v579
      %v806 = vpop.f32.mrf.mxu0
      %v807 = vadd.f32 %v742, %v806
      %808 = vmatmul.f32.gmra.mxu0 %v580
      %v809 = vpop.f32.mrf.mxu0
      %v810 = vadd.f32 %v745, %v809
      %811 = vmatmul.f32.gmra.mxu0 %v581
      %v812 = vpop.f32.mrf.mxu0
      %v813 = vadd.f32 %v748, %v812
      %814 = vmatmul.f32.gmra.mxu0 %v582
      %v815 = vpop.f32.mrf.mxu0
      %v816 = vadd.f32 %v751, %v815
      %817 = vmatmul.f32.gmra.mxu0 %v583
      %v818 = vpop.f32.mrf.mxu0
      %v819 = vadd.f32 %v754, %v818
      %820 = vmatmul.f32.gmra.mxu0 %v584
      %v821 = vpop.f32.mrf.mxu0
      %v822 = vadd.f32 %v757, %v821
      %823 = vmatmul.f32.gmra.mxu0 %v585
      %v824 = vpop.f32.mrf.mxu0
      %v825 = vadd.f32 %v760, %v824
      %826 = vmatmul.f32.gmra.mxu0 %v586
      %v827 = vpop.f32.mrf.mxu0
      %v828 = vadd.f32 %v763, %v827
      %829 = vdwg.mxu0
      %830 = vmatpush.msra.mxu0 %v505
      %831 = vmatpush.msra.mxu0 %v504
      %832 = vmatpush.msra.mxu0 %v503
      %833 = vmatpush.msra.mxu0 %v502
      %834 = vmatpush.msra.mxu0 %v501
      %835 = vmatpush.msra.mxu0 %v500
      %836 = vmatpush.msra.mxu0 %v499
      %837 = vmatpush.msra.mxu0 %v498
      %838 = vmatpush.msra.mxu0 %v497
      %839 = vmatpush.msra.mxu0 %v496
      %840 = vmatpush.msra.mxu0 %v495
      %841 = vmatpush.msra.mxu0 %v494
      %842 = vmatpush.msra.mxu0 %v493
      %843 = vmatpush.msra.mxu0 %v492
      %844 = vmatpush.msra.mxu0 %v491
      %845 = vmatpush.msra.mxu0 %v490
      %846 = vmatmul.f32.gmra.mxu0 %v442
      %v847 = vpop.f32.mrf.mxu0
      %v848 = vadd.f32 %v783, %v847
      %849 = vmatmul.f32.gmra.mxu0 %v443
      %v850 = vpop.f32.mrf.mxu0
      %v851 = vadd.f32 %v786, %v850
      %852 = vmatmul.f32.gmra.mxu0 %v444
      %v853 = vpop.f32.mrf.mxu0
      %v854 = vadd.f32 %v789, %v853
      %855 = vmatmul.f32.gmra.mxu0 %v445
      %v856 = vpop.f32.mrf.mxu0
      %v857 = vadd.f32 %v792, %v856
      %858 = vmatmul.f32.gmra.mxu0 %v446
      %v859 = vpop.f32.mrf.mxu0
      %v860 = vadd.f32 %v795, %v859
      %861 = vmatmul.f32.gmra.mxu0 %v447
      %v862 = vpop.f32.mrf.mxu0
      %v863 = vadd.f32 %v798, %v862
      %864 = vmatmul.f32.gmra.mxu0 %v448
      %v865 = vpop.f32.mrf.mxu0
      %v866 = vadd.f32 %v801, %v865
      %867 = vmatmul.f32.gmra.mxu0 %v449
      %v868 = vpop.f32.mrf.mxu0
      %v869 = vadd.f32 %v804, %v868
      %870 = vmatmul.f32.gmra.mxu0 %v450
      %v871 = vpop.f32.mrf.mxu0
      %v872 = vadd.f32 %v807, %v871
      %873 = vmatmul.f32.gmra.mxu0 %v451
      %v874 = vpop.f32.mrf.mxu0
      %v875 = vadd.f32 %v810, %v874
      %876 = vmatmul.f32.gmra.mxu0 %v452
      %v877 = vpop.f32.mrf.mxu0
      %v878 = vadd.f32 %v813, %v877
      %879 = vmatmul.f32.gmra.mxu0 %v453
      %v880 = vpop.f32.mrf.mxu0
      %v881 = vadd.f32 %v816, %v880
      %882 = vmatmul.f32.gmra.mxu0 %v454
      %v883 = vpop.f32.mrf.mxu0
      %v884 = vadd.f32 %v819, %v883
      %885 = vmatmul.f32.gmra.mxu0 %v455
      %v886 = vpop.f32.mrf.mxu0
      %v887 = vadd.f32 %v822, %v886
      %888 = vmatmul.f32.gmra.mxu0 %v456
      %v889 = vpop.f32.mrf.mxu0
      %v890 = vadd.f32 %v825, %v889
      %891 = vmatmul.f32.gmra.mxu0 %v457
      %v892 = vpop.f32.mrf.mxu0
      %v893 = vadd.f32 %v828, %v892
      %894 = vdwg.mxu0
      %895 = vmatpush.msra.mxu0 %v521
      %896 = vmatpush.msra.mxu0 %v520
      %897 = vmatpush.msra.mxu0 %v519
      %898 = vmatpush.msra.mxu0 %v518
      %899 = vmatpush.msra.mxu0 %v517
      %900 = vmatpush.msra.mxu0 %v516
      %901 = vmatpush.msra.mxu0 %v515
      %902 = vmatpush.msra.mxu0 %v514
      %903 = vmatpush.msra.mxu0 %v513
      %904 = vmatpush.msra.mxu0 %v512
      %905 = vmatpush.msra.mxu0 %v511
      %906 = vmatpush.msra.mxu0 %v510
      %907 = vmatpush.msra.mxu0 %v509
      %908 = vmatpush.msra.mxu0 %v508
      %909 = vmatpush.msra.mxu0 %v507
      %910 = vmatpush.msra.mxu0 %v506
      %911 = vmatmul.f32.gmra.mxu0 %v458
      %v912 = vpop.f32.mrf.mxu0
      %v913 = vadd.f32 %v848, %v912
      %914 = vmatmul.f32.gmra.mxu0 %v459
      %v915 = vpop.f32.mrf.mxu0
      %v916 = vadd.f32 %v851, %v915
      %917 = vmatmul.f32.gmra.mxu0 %v460
      %v918 = vpop.f32.mrf.mxu0
      %v919 = vadd.f32 %v854, %v918
      %920 = vmatmul.f32.gmra.mxu0 %v461
      %v921 = vpop.f32.mrf.mxu0
      %v922 = vadd.f32 %v857, %v921
      %923 = vmatmul.f32.gmra.mxu0 %v462
      %v924 = vpop.f32.mrf.mxu0
      %v925 = vadd.f32 %v860, %v924
      %926 = vmatmul.f32.gmra.mxu0 %v463
      %v927 = vpop.f32.mrf.mxu0
      %v928 = vadd.f32 %v863, %v927
      %929 = vmatmul.f32.gmra.mxu0 %v464
      %v930 = vpop.f32.mrf.mxu0
      %v931 = vadd.f32 %v866, %v930
      %932 = vmatmul.f32.gmra.mxu0 %v465
      %v933 = vpop.f32.mrf.mxu0
      %v934 = vadd.f32 %v869, %v933
      %935 = vmatmul.f32.gmra.mxu0 %v466
      %v936 = vpop.f32.mrf.mxu0
      %v937 = vadd.f32 %v872, %v936
      %938 = vmatmul.f32.gmra.mxu0 %v467
      %v939 = vpop.f32.mrf.mxu0
      %v940 = vadd.f32 %v875, %v939
      %941 = vmatmul.f32.gmra.mxu0 %v468
      %v942 = vpop.f32.mrf.mxu0
      %v943 = vadd.f32 %v878, %v942
      %944 = vmatmul.f32.gmra.mxu0 %v469
      %v945 = vpop.f32.mrf.mxu0
      %v946 = vadd.f32 %v881, %v945
      %947 = vmatmul.f32.gmra.mxu0 %v470
      %v948 = vpop.f32.mrf.mxu0
      %v949 = vadd.f32 %v884, %v948
      %950 = vmatmul.f32.gmra.mxu0 %v471
      %v951 = vpop.f32.mrf.mxu0
      %v952 = vadd.f32 %v887, %v951
      %953 = vmatmul.f32.gmra.mxu0 %v472
      %v954 = vpop.f32.mrf.mxu0
      %v955 = vadd.f32 %v890, %v954
      %956 = vmatmul.f32.gmra.mxu0 %v473
      %v957 = vpop.f32.mrf.mxu0
      %v958 = vadd.f32 %v893, %v957
      %959 = vdwg.mxu0
      %960 = vmatpush.msra.mxu0 %v537
      %961 = vmatpush.msra.mxu0 %v536
      %962 = vmatpush.msra.mxu0 %v535
      %963 = vmatpush.msra.mxu0 %v534
      %964 = vmatpush.msra.mxu0 %v533
      %965 = vmatpush.msra.mxu0 %v532
      %966 = vmatpush.msra.mxu0 %v531
      %967 = vmatpush.msra.mxu0 %v530
      %968 = vmatpush.msra.mxu0 %v529
      %969 = vmatpush.msra.mxu0 %v528
      %970 = vmatpush.msra.mxu0 %v527
      %971 = vmatpush.msra.mxu0 %v526
      %972 = vmatpush.msra.mxu0 %v525
      %973 = vmatpush.msra.mxu0 %v524
      %974 = vmatpush.msra.mxu0 %v523
      %975 = vmatpush.msra.mxu0 %v522
      %976 = vmatmul.f32.gmra.mxu0 %v474
      %v977 = vpop.f32.mrf.mxu0
      %v978 = vadd.f32 %v913, %v977
      %979 = vmatmul.f32.gmra.mxu0 %v475
      %v980 = vpop.f32.mrf.mxu0
      %v981 = vadd.f32 %v916, %v980
      %982 = vmatmul.f32.gmra.mxu0 %v476
      %v983 = vpop.f32.mrf.mxu0
      %v984 = vadd.f32 %v919, %v983
      %985 = vmatmul.f32.gmra.mxu0 %v477
      %v986 = vpop.f32.mrf.mxu0
      %v987 = vadd.f32 %v922, %v986
      %988 = vmatmul.f32.gmra.mxu0 %v478
      %v989 = vpop.f32.mrf.mxu0
      %v990 = vadd.f32 %v925, %v989
      %991 = vmatmul.f32.gmra.mxu0 %v479
      %v992 = vpop.f32.mrf.mxu0
      %v993 = vadd.f32 %v928, %v992
      %994 = vmatmul.f32.gmra.mxu0 %v480
      %v995 = vpop.f32.mrf.mxu0
      %v996 = vadd.f32 %v931, %v995
      %997 = vmatmul.f32.gmra.mxu0 %v481
      %v998 = vpop.f32.mrf.mxu0
      %v999 = vadd.f32 %v934, %v998
      %1000 = vmatmul.f32.gmra.mxu0 %v482
      %v1001 = vpop.f32.mrf.mxu0
      %v1002 = vadd.f32 %v937, %v1001
      %1003 = vmatmul.f32.gmra.mxu0 %v483
      %v1004 = vpop.f32.mrf.mxu0
      %v1005 = vadd.f32 %v940, %v1004
      %1006 = vmatmul.f32.gmra.mxu0 %v484
      %v1007 = vpop.f32.mrf.mxu0
      %v1008 = vadd.f32 %v943, %v1007
      %1009 = vmatmul.f32.gmra.mxu0 %v485
      %v1010 = vpop.f32.mrf.mxu0
      %v1011 = vadd.f32 %v946, %v1010
      %1012 = vmatmul.f32.gmra.mxu0 %v486
      %v1013 = vpop.f32.mrf.mxu0
      %v1014 = vadd.f32 %v949, %v1013
      %1015 = vmatmul.f32.gmra.mxu0 %v487
      %v1016 = vpop.f32.mrf.mxu0
      %v1017 = vadd.f32 %v952, %v1016
      %1018 = vmatmul.f32.gmra.mxu0 %v488
      %v1019 = vpop.f32.mrf.mxu0
      %v1020 = vadd.f32 %v955, %v1019
      %1021 = vmatmul.f32.gmra.mxu0 %v489
      %v1022 = vpop.f32.mrf.mxu0
      %v1023 = vadd.f32 %v958, %v1022
      %1024 = vdwg.mxu0
      %s1025 = scalar_lea.vmem %s336, 48 [#allocation2]
      %v1026 = vld [vmem:[%s1025] sm:$0xff]
      %v1027 = vld [vmem:[%s1025 + $0x8] sm:$0xff]
      %v1028 = vld [vmem:[%s1025 + $0x18] sm:$0xff]
      %v1029 = vld [vmem:[%s1025 + $0x20] sm:$0xff]
      %v1030 = vld [vmem:[%s1025 + $0x30] sm:$0xff]
      %v1031 = vld [vmem:[%s1025 + $0x38] sm:$0xff]
      %v1032 = vld [vmem:[%s1025 + $0x48] sm:$0xff]
      %v1033 = vld [vmem:[%s1025 + $0x50] sm:$0xff]
      %v1034 = vld [vmem:[%s1025 + $0x60] sm:$0xff]
      %v1035 = vld [vmem:[%s1025 + $0x68] sm:$0xff]
      %v1036 = vld [vmem:[%s1025 + $0x78] sm:$0xff]
      %v1037 = vld [vmem:[%s1025 + $0x80] sm:$0xff]
      %v1038 = vld [vmem:[%s1025 + $0x90] sm:$0xff]
      %v1039 = vld [vmem:[%s1025 + $0x98] sm:$0xff]
      %v1040 = vld [vmem:[%s1025 + $0xa8] sm:$0xff]
      %v1041 = vld [vmem:[%s1025 + $0xb0] sm:$0xff]
      %v1042 = vld [vmem:[%s1025 + $0x1] sm:$0xff]
      %v1043 = vld [vmem:[%s1025 + $0x9] sm:$0xff]
      %v1044 = vld [vmem:[%s1025 + $0x19] sm:$0xff]
      %v1045 = vld [vmem:[%s1025 + $0x21] sm:$0xff]
      %v1046 = vld [vmem:[%s1025 + $0x31] sm:$0xff]
      %v1047 = vld [vmem:[%s1025 + $0x39] sm:$0xff]
      %v1048 = vld [vmem:[%s1025 + $0x49] sm:$0xff]
      %v1049 = vld [vmem:[%s1025 + $0x51] sm:$0xff]
      %v1050 = vld [vmem:[%s1025 + $0x61] sm:$0xff]
      %v1051 = vld [vmem:[%s1025 + $0x69] sm:$0xff]
      %v1052 = vld [vmem:[%s1025 + $0x79] sm:$0xff]
      %v1053 = vld [vmem:[%s1025 + $0x81] sm:$0xff]
      %v1054 = vld [vmem:[%s1025 + $0x91] sm:$0xff]
      %v1055 = vld [vmem:[%s1025 + $0x99] sm:$0xff]
      %v1056 = vld [vmem:[%s1025 + $0xa9] sm:$0xff]
      %v1057 = vld [vmem:[%s1025 + $0xb1] sm:$0xff]
      %v1058 = vld [vmem:[%s1025 + $0x2] sm:$0xff]
      %v1059 = vld [vmem:[%s1025 + $0xa] sm:$0xff]
      %v1060 = vld [vmem:[%s1025 + $0x1a] sm:$0xff]
      %v1061 = vld [vmem:[%s1025 + $0x22] sm:$0xff]
      %v1062 = vld [vmem:[%s1025 + $0x32] sm:$0xff]
      %v1063 = vld [vmem:[%s1025 + $0x3a] sm:$0xff]
      %v1064 = vld [vmem:[%s1025 + $0x4a] sm:$0xff]
      %v1065 = vld [vmem:[%s1025 + $0x52] sm:$0xff]
      %v1066 = vld [vmem:[%s1025 + $0x62] sm:$0xff]
      %v1067 = vld [vmem:[%s1025 + $0x6a] sm:$0xff]
      %v1068 = vld [vmem:[%s1025 + $0x7a] sm:$0xff]
      %v1069 = vld [vmem:[%s1025 + $0x82] sm:$0xff]
      %v1070 = vld [vmem:[%s1025 + $0x92] sm:$0xff]
      %v1071 = vld [vmem:[%s1025 + $0x9a] sm:$0xff]
      %v1072 = vld [vmem:[%s1025 + $0xaa] sm:$0xff]
      %v1073 = vld [vmem:[%s1025 + $0xb2] sm:$0xff]
      %v1074 = vld [vmem:[%s1 + $0x300] sm:$0xff]
      %v1075 = vld [vmem:[%s1 + $0x308] sm:$0xff]
      %v1076 = vld [vmem:[%s1 + $0x310] sm:$0xff]
      %v1077 = vld [vmem:[%s1 + $0x318] sm:$0xff]
      %v1078 = vld [vmem:[%s1 + $0x320] sm:$0xff]
      %v1079 = vld [vmem:[%s1 + $0x328] sm:$0xff]
      %v1080 = vld [vmem:[%s1 + $0x330] sm:$0xff]
      %v1081 = vld [vmem:[%s1 + $0x338] sm:$0xff]
      %v1082 = vld [vmem:[%s1 + $0x340] sm:$0xff]
      %v1083 = vld [vmem:[%s1 + $0x348] sm:$0xff]
      %v1084 = vld [vmem:[%s1 + $0x350] sm:$0xff]
      %v1085 = vld [vmem:[%s1 + $0x358] sm:$0xff]
      %v1086 = vld [vmem:[%s1 + $0x360] sm:$0xff]
      %v1087 = vld [vmem:[%s1 + $0x368] sm:$0xff]
      %v1088 = vld [vmem:[%s1 + $0x370] sm:$0xff]
      %v1089 = vld [vmem:[%s1 + $0x378] sm:$0xff]
      %v1090 = vld [vmem:[%s1 + $0x380] sm:$0xff]
      %v1091 = vld [vmem:[%s1 + $0x388] sm:$0xff]
      %v1092 = vld [vmem:[%s1 + $0x390] sm:$0xff]
      %v1093 = vld [vmem:[%s1 + $0x398] sm:$0xff]
      %v1094 = vld [vmem:[%s1 + $0x3a0] sm:$0xff]
      %v1095 = vld [vmem:[%s1 + $0x3a8] sm:$0xff]
      %v1096 = vld [vmem:[%s1 + $0x3b0] sm:$0xff]
      %v1097 = vld [vmem:[%s1 + $0x3b8] sm:$0xff]
      %v1098 = vld [vmem:[%s1 + $0x3c0] sm:$0xff]
      %v1099 = vld [vmem:[%s1 + $0x3c8] sm:$0xff]
      %v1100 = vld [vmem:[%s1 + $0x3d0] sm:$0xff]
      %v1101 = vld [vmem:[%s1 + $0x3d8] sm:$0xff]
      %v1102 = vld [vmem:[%s1 + $0x3e0] sm:$0xff]
      %v1103 = vld [vmem:[%s1 + $0x3e8] sm:$0xff]
      %v1104 = vld [vmem:[%s1 + $0x3f0] sm:$0xff]
      %v1105 = vld [vmem:[%s1 + $0x3f8] sm:$0xff]
      %v1106 = vld [vmem:[%s1 + $0x400] sm:$0xff]
      %v1107 = vld [vmem:[%s1 + $0x408] sm:$0xff]
      %v1108 = vld [vmem:[%s1 + $0x410] sm:$0xff]
      %v1109 = vld [vmem:[%s1 + $0x418] sm:$0xff]
      %v1110 = vld [vmem:[%s1 + $0x420] sm:$0xff]
      %v1111 = vld [vmem:[%s1 + $0x428] sm:$0xff]
      %v1112 = vld [vmem:[%s1 + $0x430] sm:$0xff]
      %v1113 = vld [vmem:[%s1 + $0x438] sm:$0xff]
      %v1114 = vld [vmem:[%s1 + $0x440] sm:$0xff]
      %v1115 = vld [vmem:[%s1 + $0x448] sm:$0xff]
      %v1116 = vld [vmem:[%s1 + $0x450] sm:$0xff]
      %v1117 = vld [vmem:[%s1 + $0x458] sm:$0xff]
      %v1118 = vld [vmem:[%s1 + $0x460] sm:$0xff]
      %v1119 = vld [vmem:[%s1 + $0x468] sm:$0xff]
      %v1120 = vld [vmem:[%s1 + $0x470] sm:$0xff]
      %v1121 = vld [vmem:[%s1 + $0x478] sm:$0xff]
      %1122 = vmatpush.msra.mxu0 %v1089
      %1123 = vmatpush.msra.mxu0 %v1088
      %1124 = vmatpush.msra.mxu0 %v1087
      %1125 = vmatpush.msra.mxu0 %v1086
      %1126 = vmatpush.msra.mxu0 %v1085
      %1127 = vmatpush.msra.mxu0 %v1084
      %1128 = vmatpush.msra.mxu0 %v1083
      %1129 = vmatpush.msra.mxu0 %v1082
      %1130 = vmatpush.msra.mxu0 %v1081
      %1131 = vmatpush.msra.mxu0 %v1080
      %1132 = vmatpush.msra.mxu0 %v1079
      %1133 = vmatpush.msra.mxu0 %v1078
      %1134 = vmatpush.msra.mxu0 %v1077
      %1135 = vmatpush.msra.mxu0 %v1076
      %1136 = vmatpush.msra.mxu0 %v1075
      %1137 = vmatpush.msra.mxu0 %v1074
      %1138 = vmatmul.f32.gmra.mxu0 %v1026
      %v1139 = vpop.f32.mrf.mxu0
      %v1140 = vadd.f32 0.0, %v1139
      %1141 = vmatmul.f32.gmra.mxu0 %v1027
      %v1142 = vpop.f32.mrf.mxu0
      %v1143 = vadd.f32 0.0, %v1142
      %1144 = vmatmul.f32.gmra.mxu0 %v1028
      %v1145 = vpop.f32.mrf.mxu0
      %v1146 = vadd.f32 0.0, %v1145
      %1147 = vmatmul.f32.gmra.mxu0 %v1029
      %v1148 = vpop.f32.mrf.mxu0
      %v1149 = vadd.f32 0.0, %v1148
      %1150 = vmatmul.f32.gmra.mxu0 %v1030
      %v1151 = vpop.f32.mrf.mxu0
      %v1152 = vadd.f32 0.0, %v1151
      %1153 = vmatmul.f32.gmra.mxu0 %v1031
      %v1154 = vpop.f32.mrf.mxu0
      %v1155 = vadd.f32 0.0, %v1154
      %1156 = vmatmul.f32.gmra.mxu0 %v1032
      %v1157 = vpop.f32.mrf.mxu0
      %v1158 = vadd.f32 0.0, %v1157
      %1159 = vmatmul.f32.gmra.mxu0 %v1033
      %v1160 = vpop.f32.mrf.mxu0
      %v1161 = vadd.f32 0.0, %v1160
      %1162 = vmatmul.f32.gmra.mxu0 %v1034
      %v1163 = vpop.f32.mrf.mxu0
      %v1164 = vadd.f32 0.0, %v1163
      %1165 = vmatmul.f32.gmra.mxu0 %v1035
      %v1166 = vpop.f32.mrf.mxu0
      %v1167 = vadd.f32 0.0, %v1166
      %1168 = vmatmul.f32.gmra.mxu0 %v1036
      %v1169 = vpop.f32.mrf.mxu0
      %v1170 = vadd.f32 0.0, %v1169
      %1171 = vmatmul.f32.gmra.mxu0 %v1037
      %v1172 = vpop.f32.mrf.mxu0
      %v1173 = vadd.f32 0.0, %v1172
      %1174 = vmatmul.f32.gmra.mxu0 %v1038
      %v1175 = vpop.f32.mrf.mxu0
      %v1176 = vadd.f32 0.0, %v1175
      %1177 = vmatmul.f32.gmra.mxu0 %v1039
      %v1178 = vpop.f32.mrf.mxu0
      %v1179 = vadd.f32 0.0, %v1178
      %1180 = vmatmul.f32.gmra.mxu0 %v1040
      %v1181 = vpop.f32.mrf.mxu0
      %v1182 = vadd.f32 0.0, %v1181
      %1183 = vmatmul.f32.gmra.mxu0 %v1041
      %v1184 = vpop.f32.mrf.mxu0
      %v1185 = vadd.f32 0.0, %v1184
      %1186 = vdwg.mxu0
      %1187 = vmatpush.msra.mxu0 %v1105
      %1188 = vmatpush.msra.mxu0 %v1104
      %1189 = vmatpush.msra.mxu0 %v1103
      %1190 = vmatpush.msra.mxu0 %v1102
      %1191 = vmatpush.msra.mxu0 %v1101
      %1192 = vmatpush.msra.mxu0 %v1100
      %1193 = vmatpush.msra.mxu0 %v1099
      %1194 = vmatpush.msra.mxu0 %v1098
      %1195 = vmatpush.msra.mxu0 %v1097
      %1196 = vmatpush.msra.mxu0 %v1096
      %1197 = vmatpush.msra.mxu0 %v1095
      %1198 = vmatpush.msra.mxu0 %v1094
      %1199 = vmatpush.msra.mxu0 %v1093
      %1200 = vmatpush.msra.mxu0 %v1092
      %1201 = vmatpush.msra.mxu0 %v1091
      %1202 = vmatpush.msra.mxu0 %v1090
      %1203 = vmatmul.f32.gmra.mxu0 %v1042
      %v1204 = vpop.f32.mrf.mxu0
      %v1205 = vadd.f32 %v1140, %v1204
      %1206 = vmatmul.f32.gmra.mxu0 %v1043
      %v1207 = vpop.f32.mrf.mxu0
      %v1208 = vadd.f32 %v1143, %v1207
      %1209 = vmatmul.f32.gmra.mxu0 %v1044
      %v1210 = vpop.f32.mrf.mxu0
      %v1211 = vadd.f32 %v1146, %v1210
      %1212 = vmatmul.f32.gmra.mxu0 %v1045
      %v1213 = vpop.f32.mrf.mxu0
      %v1214 = vadd.f32 %v1149, %v1213
      %1215 = vmatmul.f32.gmra.mxu0 %v1046
      %v1216 = vpop.f32.mrf.mxu0
      %v1217 = vadd.f32 %v1152, %v1216
      %1218 = vmatmul.f32.gmra.mxu0 %v1047
      %v1219 = vpop.f32.mrf.mxu0
      %v1220 = vadd.f32 %v1155, %v1219
      %1221 = vmatmul.f32.gmra.mxu0 %v1048
      %v1222 = vpop.f32.mrf.mxu0
      %v1223 = vadd.f32 %v1158, %v1222
      %1224 = vmatmul.f32.gmra.mxu0 %v1049
      %v1225 = vpop.f32.mrf.mxu0
      %v1226 = vadd.f32 %v1161, %v1225
      %1227 = vmatmul.f32.gmra.mxu0 %v1050
      %v1228 = vpop.f32.mrf.mxu0
      %v1229 = vadd.f32 %v1164, %v1228
      %1230 = vmatmul.f32.gmra.mxu0 %v1051
      %v1231 = vpop.f32.mrf.mxu0
      %v1232 = vadd.f32 %v1167, %v1231
      %1233 = vmatmul.f32.gmra.mxu0 %v1052
      %v1234 = vpop.f32.mrf.mxu0
      %v1235 = vadd.f32 %v1170, %v1234
      %1236 = vmatmul.f32.gmra.mxu0 %v1053
      %v1237 = vpop.f32.mrf.mxu0
      %v1238 = vadd.f32 %v1173, %v1237
      %1239 = vmatmul.f32.gmra.mxu0 %v1054
      %v1240 = vpop.f32.mrf.mxu0
      %v1241 = vadd.f32 %v1176, %v1240
      %1242 = vmatmul.f32.gmra.mxu0 %v1055
      %v1243 = vpop.f32.mrf.mxu0
      %v1244 = vadd.f32 %v1179, %v1243
      %1245 = vmatmul.f32.gmra.mxu0 %v1056
      %v1246 = vpop.f32.mrf.mxu0
      %v1247 = vadd.f32 %v1182, %v1246
      %1248 = vmatmul.f32.gmra.mxu0 %v1057
      %v1249 = vpop.f32.mrf.mxu0
      %v1250 = vadd.f32 %v1185, %v1249
      %1251 = vdwg.mxu0
      %1252 = vmatpush.msra.mxu0 %v1121
      %1253 = vmatpush.msra.mxu0 %v1120
      %1254 = vmatpush.msra.mxu0 %v1119
      %1255 = vmatpush.msra.mxu0 %v1118
      %1256 = vmatpush.msra.mxu0 %v1117
      %1257 = vmatpush.msra.mxu0 %v1116
      %1258 = vmatpush.msra.mxu0 %v1115
      %1259 = vmatpush.msra.mxu0 %v1114
      %1260 = vmatpush.msra.mxu0 %v1113
      %1261 = vmatpush.msra.mxu0 %v1112
      %1262 = vmatpush.msra.mxu0 %v1111
      %1263 = vmatpush.msra.mxu0 %v1110
      %1264 = vmatpush.msra.mxu0 %v1109
      %1265 = vmatpush.msra.mxu0 %v1108
      %1266 = vmatpush.msra.mxu0 %v1107
      %1267 = vmatpush.msra.mxu0 %v1106
      %1268 = vmatmul.f32.gmra.mxu0 %v1058
      %v1269 = vpop.f32.mrf.mxu0
      %v1270 = vadd.f32 %v1205, %v1269
      %1271 = vmatmul.f32.gmra.mxu0 %v1059
      %v1272 = vpop.f32.mrf.mxu0
      %v1273 = vadd.f32 %v1208, %v1272
      %1274 = vmatmul.f32.gmra.mxu0 %v1060
      %v1275 = vpop.f32.mrf.mxu0
      %v1276 = vadd.f32 %v1211, %v1275
      %1277 = vmatmul.f32.gmra.mxu0 %v1061
      %v1278 = vpop.f32.mrf.mxu0
      %v1279 = vadd.f32 %v1214, %v1278
      %1280 = vmatmul.f32.gmra.mxu0 %v1062
      %v1281 = vpop.f32.mrf.mxu0
      %v1282 = vadd.f32 %v1217, %v1281
      %1283 = vmatmul.f32.gmra.mxu0 %v1063
      %v1284 = vpop.f32.mrf.mxu0
      %v1285 = vadd.f32 %v1220, %v1284
      %1286 = vmatmul.f32.gmra.mxu0 %v1064
      %v1287 = vpop.f32.mrf.mxu0
      %v1288 = vadd.f32 %v1223, %v1287
      %1289 = vmatmul.f32.gmra.mxu0 %v1065
      %v1290 = vpop.f32.mrf.mxu0
      %v1291 = vadd.f32 %v1226, %v1290
      %1292 = vmatmul.f32.gmra.mxu0 %v1066
      %v1293 = vpop.f32.mrf.mxu0
      %v1294 = vadd.f32 %v1229, %v1293
      %1295 = vmatmul.f32.gmra.mxu0 %v1067
      %v1296 = vpop.f32.mrf.mxu0
      %v1297 = vadd.f32 %v1232, %v1296
      %1298 = vmatmul.f32.gmra.mxu0 %v1068
      %v1299 = vpop.f32.mrf.mxu0
      %v1300 = vadd.f32 %v1235, %v1299
      %1301 = vmatmul.f32.gmra.mxu0 %v1069
      %v1302 = vpop.f32.mrf.mxu0
      %v1303 = vadd.f32 %v1238, %v1302
      %1304 = vmatmul.f32.gmra.mxu0 %v1070
      %v1305 = vpop.f32.mrf.mxu0
      %v1306 = vadd.f32 %v1241, %v1305
      %1307 = vmatmul.f32.gmra.mxu0 %v1071
      %v1308 = vpop.f32.mrf.mxu0
      %v1309 = vadd.f32 %v1244, %v1308
      %1310 = vmatmul.f32.gmra.mxu0 %v1072
      %v1311 = vpop.f32.mrf.mxu0
      %v1312 = vadd.f32 %v1247, %v1311
      %1313 = vmatmul.f32.gmra.mxu0 %v1073
      %v1314 = vpop.f32.mrf.mxu0
      %v1315 = vadd.f32 %v1250, %v1314
      %1316 = vdwg.mxu0
      %v1317 = vadd.f32 %v978, %v1270
      %v1318 = vadd.f32 %v981, %v1273
      %v1319 = vadd.f32 %v984, %v1276
      %v1320 = vadd.f32 %v987, %v1279
      %v1321 = vadd.f32 %v990, %v1282
      %v1322 = vadd.f32 %v993, %v1285
      %v1323 = vadd.f32 %v996, %v1288
      %v1324 = vadd.f32 %v999, %v1291
      %v1325 = vadd.f32 %v1002, %v1294
      %v1326 = vadd.f32 %v1005, %v1297
      %v1327 = vadd.f32 %v1008, %v1300
      %v1328 = vadd.f32 %v1011, %v1303
      %v1329 = vadd.f32 %v1014, %v1306
      %v1330 = vadd.f32 %v1017, %v1309
      %v1331 = vadd.f32 %v1020, %v1312
      %v1332 = vadd.f32 %v1023, %v1315
      %1333 = vst [vmem:[%s215] sm:$0xff] %v1317
      %1334 = vst [vmem:[%s215 + $0x8] sm:$0xff] %v1318
      %1335 = vst [vmem:[%s215 + $0x10] sm:$0xff] %v1319
      %1336 = vst [vmem:[%s215 + $0x18] sm:$0xff] %v1320
      %1337 = vst [vmem:[%s215 + $0x20] sm:$0xff] %v1321
      %1338 = vst [vmem:[%s215 + $0x28] sm:$0xff] %v1322
      %1339 = vst [vmem:[%s215 + $0x30] sm:$0xff] %v1323
      %1340 = vst [vmem:[%s215 + $0x38] sm:$0xff] %v1324
      %1341 = vst [vmem:[%s215 + $0x40] sm:$0xff] %v1325
      %1342 = vst [vmem:[%s215 + $0x48] sm:$0xff] %v1326
      %1343 = vst [vmem:[%s215 + $0x50] sm:$0xff] %v1327
      %1344 = vst [vmem:[%s215 + $0x58] sm:$0xff] %v1328
      %1345 = vst [vmem:[%s215 + $0x60] sm:$0xff] %v1329
      %1346 = vst [vmem:[%s215 + $0x68] sm:$0xff] %v1330
      %1347 = vst [vmem:[%s215 + $0x70] sm:$0xff] %v1331
      %1348 = vst [vmem:[%s215 + $0x78] sm:$0xff] %v1332
      %v1349 = vadd.f32 %v1317, %v1318
      %v1350 = vadd.f32 %v1349, %v1319
      %v1351 = vadd.f32 %v1350, %v1320
      %v1352 = vadd.f32 %v1351, %v1321
      %v1353 = vadd.f32 %v1352, %v1322
      %v1354 = vadd.f32 %v1353, %v1323
      %v1355 = vadd.f32 %v1354, %v1324
      %v1356 = vadd.f32 %v1355, %v1325
      %v1357 = vadd.f32 %v1356, %v1326
      %v1358 = vadd.f32 %v1357, %v1327
      %v1359 = vadd.f32 %v1358, %v1328
      %v1360 = vadd.f32 %v1359, %v1329
      %v1361 = vadd.f32 %v1360, %v1330
      %v1362 = vadd.f32 %v1361, %v1331
      %v1363 = vadd.f32 %v1362, %v1332
      %v1364 = vrot.slane %v1363, 4
      %v1365 = vadd.f32 %v1363, %v1364
      %v1366 = vrot.slane %v1365, 2
      %v1367 = vadd.f32 %v1365, %v1366
      %v1368 = vrot.slane %v1367, 1
      %v1369 = vadd.f32 %v1367, %v1368
      %v1370 = vmul.f32 %v1369, 0.0078125
      %v1371 = vsub.f32 %v1317, %v1370
      %v1372 = vsub.f32 %v1318, %v1370
      %v1373 = vsub.f32 %v1319, %v1370
      %v1374 = vsub.f32 %v1320, %v1370
      %v1375 = vsub.f32 %v1321, %v1370
      %v1376 = vsub.f32 %v1322, %v1370
      %v1377 = vsub.f32 %v1323, %v1370
      %v1378 = vsub.f32 %v1324, %v1370
      %v1379 = vsub.f32 %v1325, %v1370
      %v1380 = vsub.f32 %v1326, %v1370
      %v1381 = vsub.f32 %v1327, %v1370
      %v1382 = vsub.f32 %v1328, %v1370
      %v1383 = vsub.f32 %v1329, %v1370
      %v1384 = vsub.f32 %v1330, %v1370
      %v1385 = vsub.f32 %v1331, %v1370
      %v1386 = vsub.f32 %v1332, %v1370
      %v1387 = vmul.f32 %v1371, %v1371
      %v1388 = vmul.f32 %v1372, %v1372
      %v1389 = vmul.f32 %v1373, %v1373
      %v1390 = vmul.f32 %v1374, %v1374
      %v1391 = vmul.f32 %v1375, %v1375
      %v1392 = vmul.f32 %v1376, %v1376
      %v1393 = vmul.f32 %v1377, %v1377
      %v1394 = vmul.f32 %v1378, %v1378
      %v1395 = vmul.f32 %v1379, %v1379
      %v1396 = vmul.f32 %v1380, %v1380
      %v1397 = vmul.f32 %v1381, %v1381
      %v1398 = vmul.f32 %v1382, %v1382
      %v1399 = vmul.f32 %v1383, %v1383
      %v1400 = vmul.f32 %v1384, %v1384
      %v1401 = vmul.f32 %v1385, %v1385
      %v1402 = vmul.f32 %v1386, %v1386
      %v1403 = vadd.f32 %v1387, %v1388
      %v1404 = vadd.f32 %v1403, %v1389
      %v1405 = vadd.f32 %v1404, %v1390
      %v1406 = vadd.f32 %v1405, %v1391
      %v1407 = vadd.f32 %v1406, %v1392
      %v1408 = vadd.f32 %v1407, %v1393
      %v1409 = vadd.f32 %v1408, %v1394
      %v1410 = vadd.f32 %v1409, %v1395
      %v1411 = vadd.f32 %v1410, %v1396
      %v1412 = vadd.f32 %v1411, %v1397
      %v1413 = vadd.f32 %v1412, %v1398
      %v1414 = vadd.f32 %v1413, %v1399
      %v1415 = vadd.f32 %v1414, %v1400
      %v1416 = vadd.f32 %v1415, %v1401
      %v1417 = vadd.f32 %v1416, %v1402
      %v1418 = vrot.slane %v1417, 4
      %v1419 = vadd.f32 %v1417, %v1418
      %v1420 = vrot.slane %v1419, 2
      %v1421 = vadd.f32 %v1419, %v1420
      %v1422 = vrot.slane %v1421, 1
      %v1423 = vadd.f32 %v1421, %v1422
      %vm1424 = vcmask 1040384
      %v1425 = vsel %vm1424, %v1369, %v1423
      %vm1426 = vcmask 1041408
      %v1427 = vsel %vm1426, %v1425, 0.0
      %1428 = vst [vmem:[%s224] sm:$0xff] %v1427
      %s1429 = smul.u32 8, %s22
      %p1430 = scmp.lt.s32.totalorder %s21, 1
      %s1431 = scalar_select %p1430, %s21, 1
      %p1432 = scmp.lt.s32.totalorder %s1429, 15
      %s1433 = scalar_select %p1432, %s1429, 15
      %s1434 = smul.addr %s1433, 2
      %s1435 = smul.addr %s1431, 32
      %s1436 = sadd.s32 %s1434, %s1435
      %s1437 = smul.addr %s1436, 8
      %s1438 = scalar_lea.vmem %s4, %s1437
      %p1439 = scmp.lt.s32.totalorder %s21, 1
      %s1440 = scalar_select %p1439, %s21, 1
      %p1441 = scmp.lt.s32.totalorder %s22, 1
      %s1442 = scalar_select %p1441, %s22, 1
      %s1443 = smul.addr %s1440, 2
      %s1444 = sadd.s32 %s1442, %s1443
      %s1445 = smul.addr %s1444, 8
      %s1446 = scalar_lea.vmem %s5, %s1445
      // Predicated region
      $region85: #{double_conv.2} parent=31 // pred_check
        %p1447 = pneg %p112
      $region86: #{double_conv.2} parent=31 // pred_check_branch
        %1449 = sbr.rel (%p1447) target = $region88
      $region87: #{double_conv.2} parent=31 // pred_region
        %s1450 = smul.u32 8, %s22
      $region88: #{double_conv.2} parent=31 // pred_fallthru
        _
      // Predicated region
      $region89: #{double_conv.2} parent=31 // pred_check
        %p1451 = pneg %p140
      $region90: #{double_conv.2} parent=31 // pred_check_branch
        %1453 = sbr.rel (%p1451) target = $region92
      $region91: #{double_conv.2} parent=31 // pred_region
        _
      $region92: #{double_conv.2} parent=31 // pred_fallthru
        _
    $region32: #{double_conv.2} parent=5 // pred_fallthru
      _
    %p1454 = scmp.le.s32.totalorder 2, %s12
    // Predicated region
    $region93: #{double_conv.2} parent=5 // pred_check
      %p1455 = pneg %p1454
    $region94: #{double_conv.2} parent=5 // pred_check_branch
      %1457 = sbr.rel (%p1455) target = $region96
    $region95: #{double_conv.2} parent=5 // pred_region
      %s1458 = ssub.s32 %s12, 2
      // Predicated region
      $region97: #{double_conv.2} parent=95 // pred_check
        %p1459 = pneg %p118
      $region98: #{double_conv.2} parent=95 // pred_check_branch
        %1461 = sbr.rel (%p1459) target = $region100
      $region99: #{double_conv.2} parent=95 // pred_region
        %s1462 = smul.u32 8, %s24
        %p1463 = scmp.lt.s32.totalorder %s23, 1
        %s1464 = scalar_select %p1463, %s23, 1
        %p1465 = scmp.lt.s32.totalorder %s1462, 15
        %s1466 = scalar_select %p1465, %s1462, 15
        %s1467 = smul.addr %s1466, 2
        %s1468 = smul.addr %s1464, 32
        %s1469 = sadd.s32 %s1467, %s1468
        %s1470 = smul.addr %s1469, 8
        %s1471 = scalar_lea.vmem %s4, %s1470
      $region100: #{double_conv.2} parent=95 // pred_fallthru
        _
      // Predicated region
      $region101: #{double_conv.2} parent=95 // pred_check
        %p1472 = pneg %p146
      $region102: #{double_conv.2} parent=95 // pred_check_branch
        %1474 = sbr.rel (%p1472) target = $region104
      $region103: #{double_conv.2} parent=95 // pred_region
        %p1475 = scmp.lt.s32.totalorder %s23, 1
        %s1476 = scalar_select %p1475, %s23, 1
        %p1477 = scmp.lt.s32.totalorder %s24, 1
        %s1478 = scalar_select %p1477, %s24, 1
        %s1479 = smul.addr %s1476, 2
        %s1480 = sadd.s32 %s1478, %s1479
        %s1481 = smul.addr %s1480, 8
        %s1482 = scalar_lea.vmem %s5, %s1481
      $region104: #{double_conv.2} parent=95 // pred_fallthru
        _
    $region96: #{double_conv.2} parent=5 // pred_fallthru
      _
  $region6: #{double_conv.2} parent=0 // loop_footer
    %s16 = sadd.s32 1, %s12
  $region7: #{double_conv.2} parent=0 // loop_footer_branch
    %11 = sbr.rel target = $region3
  $region8: #{double_conv.2} parent=0 // loop_exit
    _
  %1483 = vsyncmov [#allocation3]
  %s1484 = vpop.sfrf %1483
  %p1485 = scmp.eq.s32.totalorder %s1484, 0
  %p1486 = pneg %p1485
  %1488 = shalt.err (%p1486)
  %s1489 = scalar_lea.sflag [#allocation3], 1
  %1490 = vsyncmov %s1489
  %s1491 = vpop.sfrf %1490
  %p1492 = scmp.eq.s32.totalorder %s1491, 0
  %p1493 = pneg %p1492
  %1495 = shalt.err (%p1493)

// kernel: double_conv.3
$region0: #{double_conv.3}
  #allocation0 [shape = 'u32[]', space=smem, size = 0x4, offset = 0x4, fixed_abs, tag = 'smem constant byte address 0x4 - core index']
  #allocation1 [shape = 'u32[72,128]{1,0:T(1,128)}', space=vmem, size = 0x9000, scoped, tag = 'internal scratch']
  #allocation2 [shape = 'f32[2,10,18,128]{3,2,1,0:T(8,128)}', space=vmem, size = 0x3c000, scoped, tag = 'scratch operand']
  #allocation3 [shape = 's32[2]{0}', space=sflag, size = 0x8, scoped, tag = 'scratch operand']
  #allocation4 [shape = 's32[]', space=sflag, size = 0x4, offset = 0, fixed_abs, tag = 'sflag constant byte address 0x0 - dummy sync flag']
  #allocation5 [shape = 's32[]', space=sflag, size = 0x4, offset = 0, fixed_abs, tag = 'sflag constant byte address 0x0 - dummy sync flag']
  %s0 = inlined_call_operand.vmem [shape: f32[2,18,18,128], index: 0, kind: input, shape index: {}]
  %s1 = inlined_call_operand.vmem [shape: f32[1152,128], index: 1, kind: input, shape index: {}]
  %s2 = inlined_call_operand.vmem [shape: f32[1,128], index: 2, kind: input, shape index: {}]
  %s3 = inlined_call_operand.vmem [shape: f32[1,128], index: 3, kind: input, shape index: {}]
  %s4 = inlined_call_operand.vmem [shape: f32[2,16,16,128], index: 4, kind: output, shape index: {0}]
  %s5 = inlined_call_operand.vmem [shape: f32[2,2,8,128], index: 5, kind: output, shape index: {1}]
  %6 = xla_tuple %s4, %s5
  %s7 = sld [smem:[#allocation0]]
  $region105: #{double_conv.3} parent=0
    _
  %s9 = ssub.s32 1, %s7
  %s10 = scalar_select 0, %s9, %s7
  loop: start=0, step=1, limit=6
  $region2: #{double_conv.3} parent=0 // loop_pre_header
    _
  $region3: #{double_conv.3} parent=0 // loop_header
    %s12 = sphi 0, %s16
    %p13 = scmp.ge.s32.totalorder %s12, 6
    %s19 = sphi 0, %s31
    %s20 = sphi 0, %s27
    %s21 = sphi 0, %s19
    %s22 = sphi 0, %s20
    %s23 = sphi 0, %s21
    %s24 = sphi 0, %s22
    %s32 = sphi 0, %s32
    %s34 = sphi 0, %s32
    %s35 = sphi 0, %s34
    %s49 = sphi 0, %s35
    %s53 = sphi 0, %s53
    %s55 = sphi 0, %s53
    %s56 = sphi 0, %s55
    %s70 = sphi 0, %s56
    %s74 = sphi 0, %s74
    %s76 = sphi 0, %s74
    %s77 = sphi 0, %s76
    %s91 = sphi 0, %s77
    %s99 = sphi 0, %s101
    %s102 = sphi 0, %s99
    %s103 = sphi 0, %s102
    %s119 = sphi 0, %s103
    %s127 = sphi 0, %s129
    %s130 = sphi 0, %s127
    %s131 = sphi 0, %s130
    %s147 = sphi 0, %s131
  $region4: #{double_conv.3} parent=0 // loop_header_branch
    %15 = sbr.rel (%p13) target = $region8
  $region5: #{double_conv.3} parent=0 // loop_body
    %s17 = ssub.s32 %s12, 1
    %s18 = ssub.s32 %s12, 2
    %s25 = sadd.s32 1, %s20
    %p26 = scmp.ge.s32.totalorder %s25, 2
    %s27 = scalar_select %p26, 0, %s25
    %s28 = sadd.s32 1, %s19
    %s29 = scalar_select %p26, %s28, %s19
    %p30 = scmp.ge.s32.totalorder %s29, 2
    %s31 = scalar_select %p30, 0, %s29
    %s33 = sadd.s32 %s32, 1
    %p36 = scmp.eq.s32.totalorder %s12, 3
    %p37 = scmp.ne.s32.totalorder %s32, %s34
    %p38 = scmp.eq.s32.totalorder %s12, 0
    %p39 = por %p37, %p38
    %p40 = scmp.ne.s32.totalorder %s32, %s34
    %p41 = scmp.eq.s32.totalorder %s17, 3
    %p42 = por %p40, %p41
    %p43 = scmp.ne.s32.totalorder %s34, %s35
    %p44 = scmp.eq.s32.totalorder %s17, 0
    %p45 = por %p43, %p44
    %p46 = scmp.ne.s32.totalorder %s34, %s35
    %p47 = scmp.eq.s32.totalorder %s18, 3
    %p48 = por %p46, %p47
    %p50 = scmp.ne.s32.totalorder %s35, %s49
    %p51 = scmp.eq.s32.totalorder %s18, 0
    %p52 = por %p50, %p51
    %s54 = sadd.s32 %s53, 1
    %p57 = scmp.eq.s32.totalorder %s12, 3
    %p58 = scmp.ne.s32.totalorder %s53, %s55
    %p59 = scmp.eq.s32.totalorder %s12, 0
    %p60 = por %p58, %p59
    %p61 = scmp.ne.s32.totalorder %s53, %s55
    %p62 = scmp.eq.s32.totalorder %s17, 3
    %p63 = por %p61, %p62
    %p64 = scmp.ne.s32.totalorder %s55, %s56
    %p65 = scmp.eq.s32.totalorder %s17, 0
    %p66 = por %p64, %p65
    %p67 = scmp.ne.s32.totalorder %s55, %s56
    %p68 = scmp.eq.s32.totalorder %s18, 3
    %p69 = por %p67, %p68
    %p71 = scmp.ne.s32.totalorder %s56, %s70
    %p72 = scmp.eq.s32.totalorder %s18, 0
    %p73 = por %p71, %p72
    %s75 = sadd.s32 %s74, 1
    %p78 = scmp.eq.s32.totalorder %s12, 3
    %p79 = scmp.ne.s32.totalorder %s74, %s76
    %p80 = scmp.eq.s32.totalorder %s12, 0
    %p81 = por %p79, %p80
    %p82 = scmp.ne.s32.totalorder %s74, %s76
    %p83 = scmp.eq.s32.totalorder %s17, 3
    %p84 = por %p82, %p83
    %p85 = scmp.ne.s32.totalorder %s76, %s77
    %p86 = scmp.eq.s32.totalorder %s17, 0
    %p87 = por %p85, %p86
    %p88 = scmp.ne.s32.totalorder %s76, %s77
    %p89 = scmp.eq.s32.totalorder %s18, 3
    %p90 = por %p88, %p89
    %p92 = scmp.ne.s32.totalorder %s77, %s91
    %p93 = scmp.eq.s32.totalorder %s18, 0
    %p94 = por %p92, %p93
    %s95 = ssub.s32 %s19, %s31
    %s96 = ssub.s32 %s20, %s27
    %s97 = sor.u32 %s95, %s96
    %p98 = scmp.eq.s32.totalorder %s97, 0
    %s100 = sadd.s32 %s99, 1
    %s101 = scalar_select %p98, %s99, %s100
    %p104 = pneg %p98
    %p105 = scmp.eq.s32.totalorder %s12, 3
    %p106 = por %p104, %p105
    %p107 = scmp.ne.s32.totalorder %s99, %s102
    %p108 = scmp.eq.s32.totalorder %s12, 0
    %p109 = por %p107, %p108
    %p110 = scmp.ne.s32.totalorder %s99, %s102
    %p111 = scmp.eq.s32.totalorder %s17, 3
    %p112 = por %p110, %p111
    %p113 = scmp.ne.s32.totalorder %s102, %s103
    %p114 = scmp.eq.s32.totalorder %s17, 0
    %p115 = por %p113, %p114
    %p116 = scmp.ne.s32.totalorder %s102, %s103
    %p117 = scmp.eq.s32.totalorder %s18, 3
    %p118 = por %p116, %p117
    %p120 = scmp.ne.s32.totalorder %s103, %s119
    %p121 = scmp.eq.s32.totalorder %s18, 0
    %p122 = por %p120, %p121
    %s123 = ssub.s32 %s19, %s31
    %s124 = ssub.s32 %s20, %s27
    %s125 = sor.u32 %s123, %s124
    %p126 = scmp.eq.s32.totalorder %s125, 0
    %s128 = sadd.s32 %s127, 1
    %s129 = scalar_select %p126, %s127, %s128
    %p132 = pneg %p126
    %p133 = scmp.eq.s32.totalorder %s12, 3
    %p134 = por %p132, %p133
    %p135 = scmp.ne.s32.totalorder %s127, %s130
    %p136 = scmp.eq.s32.totalorder %s12, 0
    %p137 = por %p135, %p136
    %p138 = scmp.ne.s32.totalorder %s127, %s130
    %p139 = scmp.eq.s32.totalorder %s17, 3
    %p140 = por %p138, %p139
    %p141 = scmp.ne.s32.totalorder %s130, %s131
    %p142 = scmp.eq.s32.totalorder %s17, 0
    %p143 = por %p141, %p142
    %p144 = scmp.ne.s32.totalorder %s130, %s131
    %p145 = scmp.eq.s32.totalorder %s18, 3
    %p146 = por %p144, %p145
    %p148 = scmp.ne.s32.totalorder %s131, %s147
    %p149 = scmp.eq.s32.totalorder %s18, 0
    %p150 = por %p148, %p149
    %p151 = scmp.le.s32.totalorder 1, %s12
    %p152 = scmp.lt.s32.totalorder %s12, 5
    %p153 = pnand %p151, %p152
    %p154 = pneg %p153
    // Predicated region
    $region9: #{double_conv.3} parent=5 // pred_check
      _
    $region10: #{double_conv.3} parent=5 // pred_check_branch
      %156 = sbr.rel (%p153) target = $region12
    $region11: #{double_conv.3} parent=5 // pred_region
      %s157 = ssub.s32 %s12, 1
      // Predicated region
      $region13: #{double_conv.3} parent=11 // pred_check
        %p158 = pneg %p45
      $region14: #{double_conv.3} parent=11 // pred_check_branch
        %160 = sbr.rel (%p158) target = $region16
      $region15: #{double_conv.3} parent=11 // pred_region
        _
      $region16: #{double_conv.3} parent=11 // pred_fallthru
        _
      // Predicated region
      $region17: #{double_conv.3} parent=11 // pred_check
        %p161 = pneg %p66
      $region18: #{double_conv.3} parent=11 // pred_check_branch
        %163 = sbr.rel (%p161) target = $region20
      $region19: #{double_conv.3} parent=11 // pred_region
        _
      $region20: #{double_conv.3} parent=11 // pred_fallthru
        _
      // Predicated region
      $region21: #{double_conv.3} parent=11 // pred_check
        %p164 = pneg %p87
      $region22: #{double_conv.3} parent=11 // pred_check_branch
        %166 = sbr.rel (%p164) target = $region24
      $region23: #{double_conv.3} parent=11 // pred_region
        _
      $region24: #{double_conv.3} parent=11 // pred_fallthru
        _
    $region12: #{double_conv.3} parent=5 // pred_fallthru
      _
    %p167 = scmp.lt.s32.totalorder %s12, 4
    // Predicated region
    $region25: #{double_conv.3} parent=5 // pred_check
      %p168 = pneg %p167
    $region26: #{double_conv.3} parent=5 // pred_check_branch
      %170 = sbr.rel (%p168) target = $region28
    $region27: #{double_conv.3} parent=5 // pred_region
      _
    $region28: #{double_conv.3} parent=5 // pred_fallthru
      _
    %p171 = scmp.le.s32.totalorder 1, %s12
    %p172 = scmp.lt.s32.totalorder %s12, 5
    %p173 = pnand %p171, %p172
    %p174 = pneg %p173
    // Predicated region
    $region29: #{double_conv.3} parent=5 // pred_check
      _
    $region30: #{double_conv.3} parent=5 // pred_check_branch
      %176 = sbr.rel (%p173) target = $region32
    $region31: #{double_conv.3} parent=5 // pred_region
      %s177 = ssub.s32 %s12, 1
      %p178 = pneg %p45
      %p179 = pneg %p42
      %p180 = pneg %p66
      %p181 = pneg %p63
      %p182 = pneg %p87
      %p183 = pneg %p84
      %p184 = pneg %p115
      %p185 = pneg %p112
      %s186 = smul.u32 8, %s22
      %p187 = scmp.lt.s32.totalorder %s21, 1
      %s188 = scalar_select %p187, %s21, 1
      %p189 = scmp.lt.s32.totalorder %s186, 15
      %s190 = scalar_select %p189, %s186, 15
      %s191 = smul.addr %s190, 2
      %s192 = smul.addr %s188, 32
      %s193 = sadd.s32 %s191, %s192
      %s194 = smul.addr %s193, 8
      %s195 = scalar_lea.vmem %s4, %s194
      %p196 = pneg %p143
      %p197 = pneg %p140
      %p198 = scmp.lt.s32.totalorder %s21, 1
      %s199 = scalar_select %p198, %s21, 1
      %p200 = scmp.lt.s32.totalorder %s22, 1
      %s201 = scalar_select %p200, %s22, 1
      %s202 = smul.addr %s199, 2
      %s203 = sadd.s32 %s201, %s202
      %s204 = smul.addr %s203, 8
      %s205 = scalar_lea.vmem %s5, %s204
      %s206 = smul.u32 8, %s22
      %p207 = scmp.lt.s32.totalorder %s21, 1
      %s208 = scalar_select %p207, %s21, 1
      %p209 = scmp.lt.s32.totalorder %s206, 15
      %s210 = scalar_select %p209, %s206, 15
      %s211 = smul.addr %s210, 2
      %s212 = smul.addr %s208, 32
      %s213 = sadd.s32 %s211, %s212
      %s214 = smul.addr %s213, 8
      %s215 = scalar_lea.vmem %s4, %s214
      %s216 = smul.u32 8, %s22
      %p217 = scmp.lt.s32.totalorder %s21, 1
      %s218 = scalar_select %p217, %s21, 1
      %p219 = scmp.lt.s32.totalorder %s22, 1
      %s220 = scalar_select %p219, %s22, 1
      %s221 = smul.addr %s218, 2
      %s222 = sadd.s32 %s220, %s221
      %s223 = smul.addr %s222, 8
      %s224 = scalar_lea.vmem %s5, %s223
      %p225 = scmp.lt.s32.totalorder %s22, 0
      %s226 = ssub.s32 0, %s22
      %s227 = scalar_select %p225, %s226, %s22
      %s228 = sand.u32 %s227, 1
      %s229 = ssub.s32 0, %s228
      %s230 = scalar_select %p225, %s229, %s228
      %p231 = scmp.ne.s32.totalorder %s230, 0
      %p232 = scmp.lt.s32.totalorder %s230, 0
      %p233 = pnand %p232, %p231
      %p234 = pneg %p233
      %s235 = sadd.s32 %s230, 2
      %s236 = scalar_select %p234, %s235, %s230
      %p237 = scmp.eq.s32.totalorder %s22, 0
      // Predicated region
      $region33: #{double_conv.3} parent=31 // pred_check
        %p238 = pneg %p237
      $region34: #{double_conv.3} parent=31 // pred_check_branch
        %240 = sbr.rel (%p238) target = $region36
      $region35: #{double_conv.3} parent=31 // pred_region
        %s241 = smul.u32 %s22, 8
        %s242 = smul.u32 %s241, 24
        %s243 = smul.u32 %s21, 432
        %s244 = sadd.s32 %s242, %s243
        %s245 = scalar_lea.vmem %s0, %s244
        %s246 = smul.u32 %s236, 240
        %s247 = scalar_lea.vmem [#allocation2], %s246
        %s248 = scalar_lea.sflag [#allocation3], %s236
        // Predicated region
        $region37: #{double_conv.3} parent=35 // pred_check
          _
        $region38: #{double_conv.3} parent=35 // pred_check_branch
          %250 = sbr.rel (0) target = $region40
        $region39: #{double_conv.3} parent=35 // pred_region
          %s251 = scalar_lea.vmem %s245, 16
          %s252 = scalar_lea.vmem %s247, 16 [#allocation2]
          loop: start=0, step=1, limit=1
          $region41: #{double_conv.3} parent=39 // loop_pre_header
            _
          $region42: #{double_conv.3} parent=39 // loop_header
            %s254 = sphi 0, %s258
            %p255 = scmp.ge.s32.totalorder %s254, 1
            %s259 = sphi %s245, %s245
            %s260 = sphi %s247, %s247
          $region43: #{double_conv.3} parent=39 // loop_header_branch
            %257 = sbr.rel (%p255) target = $region47
          $region44: #{double_conv.3} parent=39 // loop_body
            %v261 = vld [vmem:[%s259] sm:$0xff]
            %262 = vst [vmem:[%s260] sm:$0xff] %v261
            %v263 = vld [vmem:[%s259 + $0x8] sm:$0xff]
            %264 = vst [vmem:[%s260 + $0x8] sm:$0xff] %v263
            %v265 = vld [vmem:[%s259 + $0x18] sm:$0xff]
            %266 = vst [vmem:[%s260 + $0x18] sm:$0xff] %v265
            %v267 = vld [vmem:[%s259 + $0x20] sm:$0xff]
            %268 = vst [vmem:[%s260 + $0x20] sm:$0xff] %v267
            %v269 = vld [vmem:[%s259 + $0x30] sm:$0xff]
            %270 = vst [vmem:[%s260 + $0x30] sm:$0xff] %v269
            %v271 = vld [vmem:[%s259 + $0x38] sm:$0xff]
            %272 = vst [vmem:[%s260 + $0x38] sm:$0xff] %v271
            %v273 = vld [vmem:[%s259 + $0x48] sm:$0xff]
            %274 = vst [vmem:[%s260 + $0x48] sm:$0xff] %v273
            %v275 = vld [vmem:[%s259 + $0x50] sm:$0xff]
            %276 = vst [vmem:[%s260 + $0x50] sm:$0xff] %v275
            %v277 = vld [vmem:[%s259 + $0x60] sm:$0xff]
            %278 = vst [vmem:[%s260 + $0x60] sm:$0xff] %v277
            %v279 = vld [vmem:[%s259 + $0x68] sm:$0xff]
            %280 = vst [vmem:[%s260 + $0x68] sm:$0xff] %v279
            %v281 = vld [vmem:[%s259 + $0x78] sm:$0xff]
            %282 = vst [vmem:[%s260 + $0x78] sm:$0xff] %v281
            %v283 = vld [vmem:[%s259 + $0x80] sm:$0xff]
            %284 = vst [vmem:[%s260 + $0x80] sm:$0xff] %v283
            %v285 = vld [vmem:[%s259 + $0x90] sm:$0xff]
            %286 = vst [vmem:[%s260 + $0x90] sm:$0xff] %v285
            %v287 = vld [vmem:[%s259 + $0x98] sm:$0xff]
            %288 = vst [vmem:[%s260 + $0x98] sm:$0xff] %v287
            %v289 = vld [vmem:[%s259 + $0xa8] sm:$0xff]
            %290 = vst [vmem:[%s260 + $0xa8] sm:$0xff] %v289
            %v291 = vld [vmem:[%s259 + $0xb0] sm:$0xff]
            %292 = vst [vmem:[%s260 + $0xb0] sm:$0xff] %v291
            %v293 = vld [vmem:[%s259 + $0xc0] sm:$0xff]
            %294 = vst [vmem:[%s260 + $0xc0] sm:$0xff] %v293
            %v295 = vld [vmem:[%s259 + $0xc8] sm:$0xff]
            %296 = vst [vmem:[%s260 + $0xc8] sm:$0xff] %v295
            %v297 = vld [vmem:[%s259 + $0xd8] sm:$0xff]
            %298 = vst [vmem:[%s260 + $0xd8] sm:$0xff] %v297
            %v299 = vld [vmem:[%s259 + $0xe0] sm:$0xff]
            %300 = vst [vmem:[%s260 + $0xe0] sm:$0xff] %v299
          $region45: #{double_conv.3} parent=39 // loop_footer
            %s258 = sadd.s32 1, %s254
          $region46: #{double_conv.3} parent=39 // loop_footer_branch
            %253 = sbr.rel target = $region42
          $region47: #{double_conv.3} parent=39 // loop_exit
            _
          %s302 = ssub.s32 4, 1
          loop: start=0, step=1, limit=1
          $region48: #{double_conv.3} parent=39 // loop_pre_header
            _
          $region49: #{double_conv.3} parent=39 // loop_header
            %s304 = sphi 0, %s308
            %p305 = scmp.ge.s32.totalorder %s304, 1
            %s309 = sphi %s251, %s251
            %s310 = sphi %s252, %s252
          $region50: #{double_conv.3} parent=39 // loop_header_branch
            %307 = sbr.rel (%p305) target = $region54
          $region51: #{double_conv.3} parent=39 // loop_body
            %v311 = vld [vmem:[%s309] sm:%s302]
            %312 = vst [vmem:[%s310] sm:%s302] %v311
            %v313 = vld [vmem:[%s309 + $0x18] sm:%s302]
            %314 = vst [vmem:[%s310 + $0x18] sm:%s302] %v313
            %v315 = vld [vmem:[%s309 + $0x30] sm:%s302]
            %316 = vst [vmem:[%s310 + $0x30] sm:%s302] %v315
            %v317 = vld [vmem:[%s309 + $0x48] sm:%s302]
            %318 = vst [vmem:[%s310 + $0x48] sm:%s302] %v317
            %v319 = vld [vmem:[%s309 + $0x60] sm:%s302]
            %320 = vst [vmem:[%s310 + $0x60] sm:%s302] %v319
            %v321 = vld [vmem:[%s309 + $0x78] sm:%s302]
            %322 = vst [vmem:[%s310 + $0x78] sm:%s302] %v321
            %v323 = vld [vmem:[%s309 + $0x90] sm:%s302]
            %324 = vst [vmem:[%s310 + $0x90] sm:%s302] %v323
            %v325 = vld [vmem:[%s309 + $0xa8] sm:%s302]
            %326 = vst [vmem:[%s310 + $0xa8] sm:%s302] %v325
            %v327 = vld [vmem:[%s309 + $0xc0] sm:%s302]
            %328 = vst [vmem:[%s310 + $0xc0] sm:%s302] %v327
            %v329 = vld [vmem:[%s309 + $0xd8] sm:%s302]
            %330 = vst [vmem:[%s310 + $0xd8] sm:%s302] %v329
          $region52: #{double_conv.3} parent=39 // loop_footer
            %s308 = sadd.s32 1, %s304
          $region53: #{double_conv.3} parent=39 // loop_footer_branch
            %303 = sbr.rel target = $region49
          $region54: #{double_conv.3} parent=39 // loop_exit
            _
        $region40: #{double_conv.3} parent=35 // pred_fallthru
          _
        // Predicated region
        $region55: #{double_conv.3} parent=35 // pred_check
          _
        $region56: #{double_conv.3} parent=35 // pred_check_branch
          %333 = sbr.rel (0) target = $region58
        $region57: #{double_conv.3} parent=35 // pred_region
          %334 = vsyncadd %s248, 2880
        $region58: #{double_conv.3} parent=35 // pred_fallthru
          _
      $region36: #{double_conv.3} parent=31 // pred_fallthru
        _
      %s335 = smul.u32 %s22, 8
      %s336 = smul.u32 %s236, 240
      %s337 = scalar_lea.vmem [#allocation2], %s336
      %s338 = scalar_lea.sflag [#allocation3], %s236
      %s339 = smul.u32 10, 18
      %s340 = smul.u32 %s339, 1
      %s341 = sshll.u32 %s340, 4
      %342 = dma.done %s338, %s341
      %s343 = sadd.s32 %s22, 1
      %p344 = scmp.lt.s32.totalorder %s343, 2
      // Predicated region
      $region59: #{double_conv.3} parent=31 // pred_check
        %p345 = pneg %p344
      $region60: #{double_conv.3} parent=31 // pred_check_branch
        %347 = sbr.rel (%p345) target = $region62
      $region61: #{double_conv.3} parent=31 // pred_region
        %s348 = ssub.s32 1, %s236
        %s349 = smul.u32 %s343, 8
        %s350 = smul.u32 %s349, 24
        %s351 = smul.u32 %s21, 432
        %s352 = sadd.s32 %s350, %s351
        %s353 = scalar_lea.vmem %s0, %s352
        %s354 = smul.u32 %s348, 240
        %s355 = scalar_lea.vmem [#allocation2], %s354
        %s356 = scalar_lea.sflag [#allocation3], %s348
        // Predicated region
        $region63: #{double_conv.3} parent=61 // pred_check
          _
        $region64: #{double_conv.3} parent=61 // pred_check_branch
          %358 = sbr.rel (0) target = $region66
        $region65: #{double_conv.3} parent=61 // pred_region
          %s359 = scalar_lea.vmem %s353, 16
          %s360 = scalar_lea.vmem %s355, 16 [#allocation2]
          loop: start=0, step=1, limit=1
          $region67: #{double_conv.3} parent=65 // loop_pre_header
            _
          $region68: #{double_conv.3} parent=65 // loop_header
            %s362 = sphi 0, %s366
            %p363 = scmp.ge.s32.totalorder %s362, 1
            %s367 = sphi %s353, %s353
            %s368 = sphi %s355, %s355
          $region69: #{double_conv.3} parent=65 // loop_header_branch
            %365 = sbr.rel (%p363) target = $region73
          $region70: #{double_conv.3} parent=65 // loop_body
            %v369 = vld [vmem:[%s367] sm:$0xff]
            %370 = vst [vmem:[%s368] sm:$0xff] %v369
            %v371 = vld [vmem:[%s367 + $0x8] sm:$0xff]
            %372 = vst [vmem:[%s368 + $0x8] sm:$0xff] %v371
            %v373 = vld [vmem:[%s367 + $0x18] sm:$0xff]
            %374 = vst [vmem:[%s368 + $0x18] sm:$0xff] %v373
            %v375 = vld [vmem:[%s367 + $0x20] sm:$0xff]
            %376 = vst [vmem:[%s368 + $0x20] sm:$0xff] %v375
            %v377 = vld [vmem:[%s367 + $0x30] sm:$0xff]
            %378 = vst [vmem:[%s368 + $0x30] sm:$0xff] %v377
            %v379 = vld [vmem:[%s367 + $0x38] sm:$0xff]
            %380 = vst [vmem:[%s368 + $0x38] sm:$0xff] %v379
            %v381 = vld [vmem:[%s367 + $0x48] sm:$0xff]
            %382 = vst [vmem:[%s368 + $0x48] sm:$0xff] %v381
            %v383 = vld [vmem:[%s367 + $0x50] sm:$0xff]
            %384 = vst [vmem:[%s368 + $0x50] sm:$0xff] %v383
            %v385 = vld [vmem:[%s367 + $0x60] sm:$0xff]
            %386 = vst [vmem:[%s368 + $0x60] sm:$0xff] %v385
            %v387 = vld [vmem:[%s367 + $0x68] sm:$0xff]
            %388 = vst [vmem:[%s368 + $0x68] sm:$0xff] %v387
            %v389 = vld [vmem:[%s367 + $0x78] sm:$0xff]
            %390 = vst [vmem:[%s368 + $0x78] sm:$0xff] %v389
            %v391 = vld [vmem:[%s367 + $0x80] sm:$0xff]
            %392 = vst [vmem:[%s368 + $0x80] sm:$0xff] %v391
            %v393 = vld [vmem:[%s367 + $0x90] sm:$0xff]
            %394 = vst [vmem:[%s368 + $0x90] sm:$0xff] %v393
            %v395 = vld [vmem:[%s367 + $0x98] sm:$0xff]
            %396 = vst [vmem:[%s368 + $0x98] sm:$0xff] %v395
            %v397 = vld [vmem:[%s367 + $0xa8] sm:$0xff]
            %398 = vst [vmem:[%s368 + $0xa8] sm:$0xff] %v397
            %v399 = vld [vmem:[%s367 + $0xb0] sm:$0xff]
            %400 = vst [vmem:[%s368 + $0xb0] sm:$0xff] %v399
            %v401 = vld [vmem:[%s367 + $0xc0] sm:$0xff]
            %402 = vst [vmem:[%s368 + $0xc0] sm:$0xff] %v401
            %v403 = vld [vmem:[%s367 + $0xc8] sm:$0xff]
            %404 = vst [vmem:[%s368 + $0xc8] sm:$0xff] %v403
            %v405 = vld [vmem:[%s367 + $0xd8] sm:$0xff]
            %406 = vst [vmem:[%s368 + $0xd8] sm:$0xff] %v405
            %v407 = vld [vmem:[%s367 + $0xe0] sm:$0xff]
            %408 = vst [vmem:[%s368 + $0xe0] sm:$0xff] %v407
          $region71: #{double_conv.3} parent=65 // loop_footer
            %s366 = sadd.s32 1, %s362
          $region72: #{double_conv.3} parent=65 // loop_footer_branch
            %361 = sbr.rel target = $region68
          $region73: #{double_conv.3} parent=65 // loop_exit
            _
          %s410 = ssub.s32 4, 1
          loop: start=0, step=1, limit=1
          $region74: #{double_conv.3} parent=65 // loop_pre_header
            _
          $region75: #{double_conv.3} parent=65 // loop_header
            %s412 = sphi 0, %s416
            %p413 = scmp.ge.s32.totalorder %s412, 1
            %s417 = sphi %s359, %s359
            %s418 = sphi %s360, %s360
          $region76: #{double_conv.3} parent=65 // loop_header_branch
            %415 = sbr.rel (%p413) target = $region80
          $region77: #{double_conv.3} parent=65 // loop_body
            %v419 = vld [vmem:[%s417] sm:%s410]
            %420 = vst [vmem:[%s418] sm:%s410] %v419
            %v421 = vld [vmem:[%s417 + $0x18] sm:%s410]
            %422 = vst [vmem:[%s418 + $0x18] sm:%s410] %v421
            %v423 = vld [vmem:[%s417 + $0x30] sm:%s410]
            %424 = vst [vmem:[%s418 + $0x30] sm:%s410] %v423
            %v425 = vld [vmem:[%s417 + $0x48] sm:%s410]
            %426 = vst [vmem:[%s418 + $0x48] sm:%s410] %v425
            %v427 = vld [vmem:[%s417 + $0x60] sm:%s410]
            %428 = vst [vmem:[%s418 + $0x60] sm:%s410] %v427
            %v429 = vld [vmem:[%s417 + $0x78] sm:%s410]
            %430 = vst [vmem:[%s418 + $0x78] sm:%s410] %v429
            %v431 = vld [vmem:[%s417 + $0x90] sm:%s410]
            %432 = vst [vmem:[%s418 + $0x90] sm:%s410] %v431
            %v433 = vld [vmem:[%s417 + $0xa8] sm:%s410]
            %434 = vst [vmem:[%s418 + $0xa8] sm:%s410] %v433
            %v435 = vld [vmem:[%s417 + $0xc0] sm:%s410]
            %436 = vst [vmem:[%s418 + $0xc0] sm:%s410] %v435
            %v437 = vld [vmem:[%s417 + $0xd8] sm:%s410]
            %438 = vst [vmem:[%s418 + $0xd8] sm:%s410] %v437
          $region78: #{double_conv.3} parent=65 // loop_footer
            %s416 = sadd.s32 1, %s412
          $region79: #{double_conv.3} parent=65 // loop_footer_branch
            %411 = sbr.rel target = $region75
          $region80: #{double_conv.3} parent=65 // loop_exit
            _
        $region66: #{double_conv.3} parent=61 // pred_fallthru
          _
        // Predicated region
        $region81: #{double_conv.3} parent=61 // pred_check
          _
        $region82: #{double_conv.3} parent=61 // pred_check_branch
          %441 = sbr.rel (0) target = $region84
        $region83: #{double_conv.3} parent=61 // pred_region
          %442 = vsyncadd %s356, 2880
        $region84: #{double_conv.3} parent=61 // pred_fallthru
          _
      $region62: #{double_conv.3} parent=31 // pred_fallthru
        _
      %v443 = vld [vmem:[%s337] sm:$0xff]
      %v444 = vld [vmem:[%s337 + $0x8] sm:$0xff]
      %v445 = vld [vmem:[%s337 + $0x10] sm:$0x3]
      %v446 = vld [vmem:[%s337 + $0x18] sm:$0xff]
      %v447 = vld [vmem:[%s337 + $0x20] sm:$0xff]
      %v448 = vld [vmem:[%s337 + $0x28] sm:$0x3]
      %v449 = vld [vmem:[%s337 + $0x30] sm:$0xff]
      %v450 = vld [vmem:[%s337 + $0x38] sm:$0xff]
      %v451 = vld [vmem:[%s337 + $0x40] sm:$0x3]
      %v452 = vld [vmem:[%s337 + $0x48] sm:$0xff]
      %v453 = vld [vmem:[%s337 + $0x50] sm:$0xff]
      %v454 = vld [vmem:[%s337 + $0x58] sm:$0x3]
      %v455 = vld [vmem:[%s337 + $0x60] sm:$0xff]
      %v456 = vld [vmem:[%s337 + $0x68] sm:$0xff]
      %v457 = vld [vmem:[%s337 + $0x70] sm:$0x3]
      %v458 = vld [vmem:[%s337 + $0x78] sm:$0xff]
      %v459 = vld [vmem:[%s337 + $0x80] sm:$0xff]
      %v460 = vld [vmem:[%s337 + $0x88] sm:$0x3]
      %v461 = vld [vmem:[%s337 + $0x90] sm:$0xff]
      %v462 = vld [vmem:[%s337 + $0x98] sm:$0xff]
      %v463 = vld [vmem:[%s337 + $0xa0] sm:$0x3]
      %v464 = vld [vmem:[%s337 + $0xa8] sm:$0xff]
      %v465 = vld [vmem:[%s337 + $0xb0] sm:$0xff]
      %v466 = vld [vmem:[%s337 + $0xb8] sm:$0x3]
      %v467 = vld [vmem:[%s337 + $0xc0] sm:$0xff]
      %v468 = vld [vmem:[%s337 + $0xc8] sm:$0xff]
      %v469 = vld [vmem:[%s337 + $0xd0] sm:$0x3]
      %v470 = vld [vmem:[%s337 + $0xd8] sm:$0xff]
      %v471 = vld [vmem:[%s337 + $0xe0] sm:$0xff]
      %v472 = vld [vmem:[%s337 + $0xe8] sm:$0x3]
      %v473 = vld [vmem:[%s2] sm:$0x1]
      %v475 = vperm.slane %v473, 0
      %v477 = vmul.f32 %v443, %v475
      %v478 = vmul.f32 %v444, %v475
      %v479 = vmul.f32 %v445, %v475
      %v480 = vmul.f32 %v446, %v475
      %v481 = vmul.f32 %v447, %v475
      %v482 = vmul.f32 %v448, %v475
      %v483 = vmul.f32 %v449, %v475
      %v484 = vmul.f32 %v450, %v475
      %v485 = vmul.f32 %v451, %v475
      %v486 = vmul.f32 %v452, %v475
      %v487 = vmul.f32 %v453, %v475
      %v488 = vmul.f32 %v454, %v475
      %v489 = vmul.f32 %v455, %v475
      %v490 = vmul.f32 %v456, %v475
      %v491 = vmul.f32 %v457, %v475
      %v492 = vmul.f32 %v458, %v475
      %v493 = vmul.f32 %v459, %v475
      %v494 = vmul.f32 %v460, %v475
      %v495 = vmul.f32 %v461, %v475
      %v496 = vmul.f32 %v462, %v475
      %v497 = vmul.f32 %v463, %v475
      %v498 = vmul.f32 %v464, %v475
      %v499 = vmul.f32 %v465, %v475
      %v500 = vmul.f32 %v466, %v475
      %v501 = vmul.f32 %v467, %v475
      %v502 = vmul.f32 %v468, %v475
      %v503 = vmul.f32 %v469, %v475
      %v504 = vmul.f32 %v470, %v475
      %v505 = vmul.f32 %v471, %v475
      %v506 = vmul.f32 %v472, %v475
      %v507 = vld [vmem:[%s3] sm:$0x1]
      %v509 = vperm.slane %v507, 0
      %v511 = vadd.f32 %v477, %v509
      %v512 = vadd.f32 %v478, %v509
      %v513 = vadd.f32 %v479, %v509
      %v514 = vadd.f32 %v480, %v509
      %v515 = vadd.f32 %v481, %v509
      %v516 = vadd.f32 %v482, %v509
      %v517 = vadd.f32 %v483, %v509
      %v518 = vadd.f32 %v484, %v509
      %v519 = vadd.f32 %v485, %v509
      %v520 = vadd.f32 %v486, %v509
      %v521 = vadd.f32 %v487, %v509
      %v522 = vadd.f32 %v488, %v509
      %v523 = vadd.f32 %v489, %v509
      %v524 = vadd.f32 %v490, %v509
      %v525 = vadd.f32 %v491, %v509
      %v526 = vadd.f32 %v492, %v509
      %v527 = vadd.f32 %v493, %v509
      %v528 = vadd.f32 %v494, %v509
      %v529 = vadd.f32 %v495, %v509
      %v530 = vadd.f32 %v496, %v509
      %v531 = vadd.f32 %v497, %v509
      %v532 = vadd.f32 %v498, %v509
      %v533 = vadd.f32 %v499, %v509
      %v534 = vadd.f32 %v500, %v509
      %v535 = vadd.f32 %v501, %v509
      %v536 = vadd.f32 %v502, %v509
      %v537 = vadd.f32 %v503, %v509
      %v538 = vadd.f32 %v504, %v509
      %v539 = vadd.f32 %v505, %v509
      %v540 = vadd.f32 %v506, %v509
      %v541 = vmax.f32 %v511, 0.0
      %v542 = vmax.f32 %v512, 0.0
      %v543 = vmax.f32 %v513, 0.0
      %v544 = vmax.f32 %v514, 0.0
      %v545 = vmax.f32 %v515, 0.0
      %v546 = vmax.f32 %v516, 0.0
      %v547 = vmax.f32 %v517, 0.0
      %v548 = vmax.f32 %v518, 0.0
      %v549 = vmax.f32 %v519, 0.0
      %v550 = vmax.f32 %v520, 0.0
      %v551 = vmax.f32 %v521, 0.0
      %v552 = vmax.f32 %v522, 0.0
      %v553 = vmax.f32 %v523, 0.0
      %v554 = vmax.f32 %v524, 0.0
      %v555 = vmax.f32 %v525, 0.0
      %v556 = vmax.f32 %v526, 0.0
      %v557 = vmax.f32 %v527, 0.0
      %v558 = vmax.f32 %v528, 0.0
      %v559 = vmax.f32 %v529, 0.0
      %v560 = vmax.f32 %v530, 0.0
      %v561 = vmax.f32 %v531, 0.0
      %v562 = vmax.f32 %v532, 0.0
      %v563 = vmax.f32 %v533, 0.0
      %v564 = vmax.f32 %v534, 0.0
      %v565 = vmax.f32 %v535, 0.0
      %v566 = vmax.f32 %v536, 0.0
      %v567 = vmax.f32 %v537, 0.0
      %v568 = vmax.f32 %v538, 0.0
      %v569 = vmax.f32 %v539, 0.0
      %v570 = vmax.f32 %v540, 0.0
      %v571 = vstv %s335
      %v572 = vadd.s32 %v571, 1
      %v573 = vadd.s32 %v571, 2
      %v574 = vadd.s32 %v571, 3
      %v575 = vadd.s32 %v571, 4
      %v576 = vadd.s32 %v571, 5
      %v577 = vadd.s32 %v571, 6
      %v578 = vadd.s32 %v571, 7
      %v579 = vadd.s32 %v571, 8
      %v580 = vadd.s32 %v571, 9
      %v581 = vlaneseq
      %v582 = vshrl.u32 %v581, 7
      %v583 = vadd.s32 %v582, 8
      %v584 = vadd.s32 %v582, 16
      %vm585 = vcmp.gt.s32.totalorder %v571, 0
      %vm586 = vcmp.gt.s32.totalorder %v572, 0
      %vm587 = vcmp.gt.s32.totalorder %v573, 0
      %vm588 = vcmp.gt.s32.totalorder %v574, 0
      %vm589 = vcmp.gt.s32.totalorder %v575, 0
      %vm590 = vcmp.gt.s32.totalorder %v576, 0
      %vm591 = vcmp.gt.s32.totalorder %v577, 0
      %vm592 = vcmp.gt.s32.totalorder %v578, 0
      %vm593 = vcmp.gt.s32.totalorder %v579, 0
      %vm594 = vcmp.gt.s32.totalorder %v580, 0
      %vm595 = vcmp.lt.s32.totalorder %v571, 17
      %vm596 = vcmp.lt.s32.totalorder %v572, 17
      %vm597 = vcmp.lt.s32.totalorder %v573, 17
      %vm598 = vcmp.lt.s32.totalorder %v574, 17
      %vm599 = vcmp.lt.s32.totalorder %v575, 17
      %vm600 = vcmp.lt.s32.totalorder %v576, 17
      %vm601 = vcmp.lt.s32.totalorder %v577, 17
      %vm602 = vcmp.lt.s32.totalorder %v578, 17
      %vm603 = vcmp.lt.s32.totalorder %v579, 17
      %vm604 = vcmp.lt.s32.totalorder %v580, 17
      %vm605 = vmand %vm585, %vm595
      %vm606 = vmand %vm586, %vm596
      %vm607 = vmand %vm587, %vm597
      %vm608 = vmand %vm588, %vm598
      %vm609 = vmand %vm589, %vm599
      %vm610 = vmand %vm590, %vm600
      %vm611 = vmand %vm591, %vm601
      %vm612 = vmand %vm592, %vm602
      %vm613 = vmand %vm593, %vm603
      %vm614 = vmand %vm594, %vm604
      %vm615 = vcmp.gt.s32.totalorder %v582, 0
      %vm616 = vcmp.gt.s32.totalorder %v583, 0
      %vm617 = vcmp.gt.s32.totalorder %v584, 0
      %vm618 = vmand %vm605, %vm615
      %vm619 = vmand %vm605, %vm616
      %vm620 = vmand %vm605, %vm617
      %vm621 = vmand %vm606, %vm615
      %vm622 = vmand %vm606, %vm616
      %vm623 = vmand %vm606, %vm617
      %vm624 = vmand %vm607, %vm615
      %vm625 = vmand %vm607, %vm616
      %vm626 = vmand %vm607, %vm617
      %vm627 = vmand %vm608, %vm615
      %vm628 = vmand %vm608, %vm616
      %vm629 = vmand %vm608, %vm617
      %vm630 = vmand %vm609, %vm615
      %vm631 = vmand %vm609, %vm616
      %vm632 = vmand %vm609, %vm617
      %vm633 = vmand %vm610, %vm615
      %vm634 = vmand %vm610, %vm616
      %vm635 = vmand %vm610, %vm617
      %vm636 = vmand %vm611, %vm615
      %vm637 = vmand %vm611, %vm616
      %vm638 = vmand %vm611, %vm617
      %vm639 = vmand %vm612, %vm615
      %vm640 = vmand %vm612, %vm616
      %vm641 = vmand %vm612, %vm617
      %vm642 = vmand %vm613, %vm615
      %vm643 = vmand %vm613, %vm616
      %vm644 = vmand %vm613, %vm617
      %vm645 = vmand %vm614, %vm615
      %vm646 = vmand %vm614, %vm616
      %vm647 = vmand %vm614, %vm617
      %vm648 = vcmp.lt.s32.totalorder %v582, 17
      %vm649 = vcmp.lt.s32.totalorder %v583, 17
      %vm650 = vcmp.lt.s32.totalorder %v584, 17
      %vm651 = vmand %vm618, %vm648
      %vm652 = vmand %vm619, %vm649
      %vm653 = vmand %vm620, %vm650
      %vm654 = vmand %vm621, %vm648
      %vm655 = vmand %vm622, %vm649
      %vm656 = vmand %vm623, %vm650
      %vm657 = vmand %vm624, %vm648
      %vm658 = vmand %vm625, %vm649
      %vm659 = vmand %vm626, %vm650
      %vm660 = vmand %vm627, %vm648
      %vm661 = vmand %vm628, %vm649
      %vm662 = vmand %vm629, %vm650
      %vm663 = vmand %vm630, %vm648
      %vm664 = vmand %vm631, %vm649
      %vm665 = vmand %vm632, %vm650
      %vm666 = vmand %vm633, %vm648
      %vm667 = vmand %vm634, %vm649
      %vm668 = vmand %vm635, %vm650
      %vm669 = vmand %vm636, %vm648
      %vm670 = vmand %vm637, %vm649
      %vm671 = vmand %vm638, %vm650
      %vm672 = vmand %vm639, %vm648
      %vm673 = vmand %vm640, %vm649
      %vm674 = vmand %vm641, %vm650
      %vm675 = vmand %vm642, %vm648
      %vm676 = vmand %vm643, %vm649
      %vm677 = vmand %vm644, %vm650
      %vm678 = vmand %vm645, %vm648
      %vm679 = vmand %vm646, %vm649
      %vm680 = vmand %vm647, %vm650
      %v681 = vsel %vm651, %v541, 0.0
      %v682 = vsel %vm652, %v542, 0.0
      %v683 = vsel %vm653, %v543, 0.0
      %v684 = vsel %vm654, %v544, 0.0
      %v685 = vsel %vm655, %v545, 0.0
      %v686 = vsel %vm656, %v546, 0.0
      %v687 = vsel %vm657, %v547, 0.0
      %v688 = vsel %vm658, %v548, 0.0
      %v689 = vsel %vm659, %v549, 0.0
      %v690 = vsel %vm660, %v550, 0.0
      %v691 = vsel %vm661, %v551, 0.0
      %v692 = vsel %vm662, %v552, 0.0
      %v693 = vsel %vm663, %v553, 0.0
      %v694 = vsel %vm664, %v554, 0.0
      %v695 = vsel %vm665, %v555, 0.0
      %v696 = vsel %vm666, %v556, 0.0
      %v697 = vsel %vm667, %v557, 0.0
      %v698 = vsel %vm668, %v558, 0.0
      %v699 = vsel %vm669, %v559, 0.0
      %v700 = vsel %vm670, %v560, 0.0
      %v701 = vsel %vm671, %v561, 0.0
      %v702 = vsel %vm672, %v562, 0.0
      %v703 = vsel %vm673, %v563, 0.0
      %v704 = vsel %vm674, %v564, 0.0
      %v705 = vsel %vm675, %v565, 0.0
      %v706 = vsel %vm676, %v566, 0.0
      %v707 = vsel %vm677, %v567, 0.0
      %v708 = vsel %vm678, %v568, 0.0
      %v709 = vsel %vm679, %v569, 0.0
      %v710 = vsel %vm680, %v570, 0.0
      %711 = vst [vmem:[%s337] sm:$0xff] %v681
      %712 = vst [vmem:[%s337 + $0x8] sm:$0xff] %v682
      %713 = vst [vmem:[%s337 + $0x10] sm:$0x3] %v683
      %714 = vst [vmem:[%s337 + $0x18] sm:$0xff] %v684
      %715 = vst [vmem:[%s337 + $0x20] sm:$0xff] %v685
      %716 = vst [vmem:[%s337 + $0x28] sm:$0x3] %v686
      %717 = vst [vmem:[%s337 + $0x30] sm:$0xff] %v687
      %718 = vst [vmem:[%s337 + $0x38] sm:$0xff] %v688
      %719 = vst [vmem:[%s337 + $0x40] sm:$0x3] %v689
      %720 = vst [vmem:[%s337 + $0x48] sm:$0xff] %v690
      %721 = vst [vmem:[%s337 + $0x50] sm:$0xff] %v691
      %722 = vst [vmem:[%s337 + $0x58] sm:$0x3] %v692
      %723 = vst [vmem:[%s337 + $0x60] sm:$0xff] %v693
      %724 = vst [vmem:[%s337 + $0x68] sm:$0xff] %v694
      %725 = vst [vmem:[%s337 + $0x70] sm:$0x3] %v695
      %726 = vst [vmem:[%s337 + $0x78] sm:$0xff] %v696
      %727 = vst [vmem:[%s337 + $0x80] sm:$0xff] %v697
      %728 = vst [vmem:[%s337 + $0x88] sm:$0x3] %v698
      %729 = vst [vmem:[%s337 + $0x90] sm:$0xff] %v699
      %730 = vst [vmem:[%s337 + $0x98] sm:$0xff] %v700
      %731 = vst [vmem:[%s337 + $0xa0] sm:$0x3] %v701
      %732 = vst [vmem:[%s337 + $0xa8] sm:$0xff] %v702
      %733 = vst [vmem:[%s337 + $0xb0] sm:$0xff] %v703
      %734 = vst [vmem:[%s337 + $0xb8] sm:$0x3] %v704
      %735 = vst [vmem:[%s337 + $0xc0] sm:$0xff] %v705
      %736 = vst [vmem:[%s337 + $0xc8] sm:$0xff] %v706
      %737 = vst [vmem:[%s337 + $0xd0] sm:$0x3] %v707
      %738 = vst [vmem:[%s337 + $0xd8] sm:$0xff] %v708
      %739 = vst [vmem:[%s337 + $0xe0] sm:$0xff] %v709
      %740 = vst [vmem:[%s337 + $0xe8] sm:$0x3] %v710
      %v741 = vld [vmem:[%s337] sm:$0xff]
      %v742 = vld [vmem:[%s337 + $0x8] sm:$0xff]
      %v743 = vld [vmem:[%s337 + $0x18] sm:$0xff]
      %v744 = vld [vmem:[%s337 + $0x20] sm:$0xff]
      %v745 = vld [vmem:[%s337 + $0x30] sm:$0xff]
      %v746 = vld [vmem:[%s337 + $0x38] sm:$0xff]
      %v747 = vld [vmem:[%s337 + $0x48] sm:$0xff]
      %v748 = vld [vmem:[%s337 + $0x50] sm:$0xff]
      %v749 = vld [vmem:[%s337 + $0x60] sm:$0xff]
      %v750 = vld [vmem:[%s337 + $0x68] sm:$0xff]
      %v751 = vld [vmem:[%s337 + $0x78] sm:$0xff]
      %v752 = vld [vmem:[%s337 + $0x80] sm:$0xff]
      %v753 = vld [vmem:[%s337 + $0x90] sm:$0xff]
      %v754 = vld [vmem:[%s337 + $0x98] sm:$0xff]
      %v755 = vld [vmem:[%s337 + $0xa8] sm:$0xff]
      %v756 = vld [vmem:[%s337 + $0xb0] sm:$0xff]
      %v757 = vld [vmem:[%s337 + $0x1] sm:$0xff]
      %v758 = vld [vmem:[%s337 + $0x9] sm:$0xff]
      %v759 = vld [vmem:[%s337 + $0x19] sm:$0xff]
      %v760 = vld [vmem:[%s337 + $0x21] sm:$0xff]
      %v761 = vld [vmem:[%s337 + $0x31] sm:$0xff]
      %v762 = vld [vmem:[%s337 + $0x39] sm:$0xff]
      %v763 = vld [vmem:[%s337 + $0x49] sm:$0xff]
      %v764 = vld [vmem:[%s337 + $0x51] sm:$0xff]
      %v765 = vld [vmem:[%s337 + $0x61] sm:$0xff]
      %v766 = vld [vmem:[%s337 + $0x69] sm:$0xff]
      %v767 = vld [vmem:[%s337 + $0x79] sm:$0xff]
      %v768 = vld [vmem:[%s337 + $0x81] sm:$0xff]
      %v769 = vld [vmem:[%s337 + $0x91] sm:$0xff]
      %v770 = vld [vmem:[%s337 + $0x99] sm:$0xff]
      %v771 = vld [vmem:[%s337 + $0xa9] sm:$0xff]
      %v772 = vld [vmem:[%s337 + $0xb1] sm:$0xff]
      %v773 = vld [vmem:[%s337 + $0x2] sm:$0xff]
      %v774 = vld [vmem:[%s337 + $0xa] sm:$0xff]
      %v775 = vld [vmem:[%s337 + $0x1a] sm:$0xff]
      %v776 = vld [vmem:[%s337 + $0x22] sm:$0xff]
      %v777 = vld [vmem:[%s337 + $0x32] sm:$0xff]
      %v778 = vld [vmem:[%s337 + $0x3a] sm:$0xff]
      %v779 = vld [vmem:[%s337 + $0x4a] sm:$0xff]
      %v780 = vld [vmem:[%s337 + $0x52] sm:$0xff]
      %v781 = vld [vmem:[%s337 + $0x62] sm:$0xff]
      %v782 = vld [vmem:[%s337 + $0x6a] sm:$0xff]
      %v783 = vld [vmem:[%s337 + $0x7a] sm:$0xff]
      %v784 = vld [vmem:[%s337 + $0x82] sm:$0xff]
      %v785 = vld [vmem:[%s337 + $0x92] sm:$0xff]
      %v786 = vld [vmem:[%s337 + $0x9a] sm:$0xff]
      %v787 = vld [vmem:[%s337 + $0xaa] sm:$0xff]
      %v788 = vld [vmem:[%s337 + $0xb2] sm:$0xff]
      %v789 = vld [vmem:[%s1] sm:$0xff]
      %v790 = vld [vmem:[%s1 + $0x8] sm:$0xff]
      %v791 = vld [vmem:[%s1 + $0x10] sm:$0xff]
      %v792 = vld [vmem:[%s1 + $0x18] sm:$0xff]
      %v793 = vld [vmem:[%s1 + $0x20] sm:$0xff]
      %v794 = vld [vmem:[%s1 + $0x28] sm:$0xff]
      %v795 = vld [vmem:[%s1 + $0x30] sm:$0xff]
      %v796 = vld [vmem:[%s1 + $0x38] sm:$0xff]
      %v797 = vld [vmem:[%s1 + $0x40] sm:$0xff]
      %v798 = vld [vmem:[%s1 + $0x48] sm:$0xff]
      %v799 = vld [vmem:[%s1 + $0x50] sm:$0xff]
      %v800 = vld [vmem:[%s1 + $0x58] sm:$0xff]
      %v801 = vld [vmem:[%s1 + $0x60] sm:$0xff]
      %v802 = vld [vmem:[%s1 + $0x68] sm:$0xff]
      %v803 = vld [vmem:[%s1 + $0x70] sm:$0xff]
      %v804 = vld [vmem:[%s1 + $0x78] sm:$0xff]
      %v805 = vld [vmem:[%s1 + $0x80] sm:$0xff]
      %v806 = vld [vmem:[%s1 + $0x88] sm:$0xff]
      %v807 = vld [vmem:[%s1 + $0x90] sm:$0xff]
      %v808 = vld [vmem:[%s1 + $0x98] sm:$0xff]
      %v809 = vld [vmem:[%s1 + $0xa0] sm:$0xff]
      %v810 = vld [vmem:[%s1 + $0xa8] sm:$0xff]
      %v811 = vld [vmem:[%s1 + $0xb0] sm:$0xff]
      %v812 = vld [vmem:[%s1 + $0xb8] sm:$0xff]
      %v813 = vld [vmem:[%s1 + $0xc0] sm:$0xff]
      %v814 = vld [vmem:[%s1 + $0xc8] sm:$0xff]
      %v815 = vld [vmem:[%s1 + $0xd0] sm:$0xff]
      %v816 = vld [vmem:[%s1 + $0xd8] sm:$0xff]
      %v817 = vld [vmem:[%s1 + $0xe0] sm:$0xff]
      %v818 = vld [vmem:[%s1 + $0xe8] sm:$0xff]
      %v819 = vld [vmem:[%s1 + $0xf0] sm:$0xff]
      %v820 = vld [vmem:[%s1 + $0xf8] sm:$0xff]
      %v821 = vld [vmem:[%s1 + $0x100] sm:$0xff]
      %v822 = vld [vmem:[%s1 + $0x108] sm:$0xff]
      %v823 = vld [vmem:[%s1 + $0x110] sm:$0xff]
      %v824 = vld [vmem:[%s1 + $0x118] sm:$0xff]
      %v825 = vld [vmem:[%s1 + $0x120] sm:$0xff]
      %v826 = vld [vmem:[%s1 + $0x128] sm:$0xff]
      %v827 = vld [vmem:[%s1 + $0x130] sm:$0xff]
      %v828 = vld [vmem:[%s1 + $0x138] sm:$0xff]
      %v829 = vld [vmem:[%s1 + $0x140] sm:$0xff]
      %v830 = vld [vmem:[%s1 + $0x148] sm:$0xff]
      %v831 = vld [vmem:[%s1 + $0x150] sm:$0xff]
      %v832 = vld [vmem:[%s1 + $0x158] sm:$0xff]
      %v833 = vld [vmem:[%s1 + $0x160] sm:$0xff]
      %v834 = vld [vmem:[%s1 + $0x168] sm:$0xff]
      %v835 = vld [vmem:[%s1 + $0x170] sm:$0xff]
      %v836 = vld [vmem:[%s1 + $0x178] sm:$0xff]
      %s837 = scalar_lea.vmem %s337, 24 [#allocation2]
      %v838 = vld [vmem:[%s837] sm:$0xff]
      %v839 = vld [vmem:[%s837 + $0x8] sm:$0xff]
      %v840 = vld [vmem:[%s837 + $0x18] sm:$0xff]
      %v841 = vld [vmem:[%s837 + $0x20] sm:$0xff]
      %v842 = vld [vmem:[%s837 + $0x30] sm:$0xff]
      %v843 = vld [vmem:[%s837 + $0x38] sm:$0xff]
      %v844 = vld [vmem:[%s837 + $0x48] sm:$0xff]
      %v845 = vld [vmem:[%s837 + $0x50] sm:$0xff]
      %v846 = vld [vmem:[%s837 + $0x60] sm:$0xff]
      %v847 = vld [vmem:[%s837 + $0x68] sm:$0xff]
      %v848 = vld [vmem:[%s837 + $0x78] sm:$0xff]
      %v849 = vld [vmem:[%s837 + $0x80] sm:$0xff]
      %v850 = vld [vmem:[%s837 + $0x90] sm:$0xff]
      %v851 = vld [vmem:[%s837 + $0x98] sm:$0xff]
      %v852 = vld [vmem:[%s837 + $0xa8] sm:$0xff]
      %v853 = vld [vmem:[%s837 + $0xb0] sm:$0xff]
      %v854 = vld [vmem:[%s837 + $0x1] sm:$0xff]
      %v855 = vld [vmem:[%s837 + $0x9] sm:$0xff]
      %v856 = vld [vmem:[%s837 + $0x19] sm:$0xff]
      %v857 = vld [vmem:[%s837 + $0x21] sm:$0xff]
      %v858 = vld [vmem:[%s837 + $0x31] sm:$0xff]
      %v859 = vld [vmem:[%s837 + $0x39] sm:$0xff]
      %v860 = vld [vmem:[%s837 + $0x49] sm:$0xff]
      %v861 = vld [vmem:[%s837 + $0x51] sm:$0xff]
      %v862 = vld [vmem:[%s837 + $0x61] sm:$0xff]
      %v863 = vld [vmem:[%s837 + $0x69] sm:$0xff]
      %v864 = vld [vmem:[%s837 + $0x79] sm:$0xff]
      %v865 = vld [vmem:[%s837 + $0x81] sm:$0xff]
      %v866 = vld [vmem:[%s837 + $0x91] sm:$0xff]
      %v867 = vld [vmem:[%s837 + $0x99] sm:$0xff]
      %v868 = vld [vmem:[%s837 + $0xa9] sm:$0xff]
      %v869 = vld [vmem:[%s837 + $0xb1] sm:$0xff]
      %v870 = vld [vmem:[%s837 + $0x2] sm:$0xff]
      %v871 = vld [vmem:[%s837 + $0xa] sm:$0xff]
      %v872 = vld [vmem:[%s837 + $0x1a] sm:$0xff]
      %v873 = vld [vmem:[%s837 + $0x22] sm:$0xff]
      %v874 = vld [vmem:[%s837 + $0x32] sm:$0xff]
      %v875 = vld [vmem:[%s837 + $0x3a] sm:$0xff]
      %v876 = vld [vmem:[%s837 + $0x4a] sm:$0xff]
      %v877 = vld [vmem:[%s837 + $0x52] sm:$0xff]
      %v878 = vld [vmem:[%s837 + $0x62] sm:$0xff]
      %v879 = vld [vmem:[%s837 + $0x6a] sm:$0xff]
      %v880 = vld [vmem:[%s837 + $0x7a] sm:$0xff]
      %v881 = vld [vmem:[%s837 + $0x82] sm:$0xff]
      %v882 = vld [vmem:[%s837 + $0x92] sm:$0xff]
      %v883 = vld [vmem:[%s837 + $0x9a] sm:$0xff]
      %v884 = vld [vmem:[%s837 + $0xaa] sm:$0xff]
      %v885 = vld [vmem:[%s837 + $0xb2] sm:$0xff]
      %v886 = vld [vmem:[%s1 + $0x180] sm:$0xff]
      %v887 = vld [vmem:[%s1 + $0x188] sm:$0xff]
      %v888 = vld [vmem:[%s1 + $0x190] sm:$0xff]
      %v889 = vld [vmem:[%s1 + $0x198] sm:$0xff]
      %v890 = vld [vmem:[%s1 + $0x1a0] sm:$0xff]
      %v891 = vld [vmem:[%s1 + $0x1a8] sm:$0xff]
      %v892 = vld [vmem:[%s1 + $0x1b0] sm:$0xff]
      %v893 = vld [vmem:[%s1 + $0x1b8] sm:$0xff]
      %v894 = vld [vmem:[%s1 + $0x1c0] sm:$0xff]
      %v895 = vld [vmem:[%s1 + $0x1c8] sm:$0xff]
      %v896 = vld [vmem:[%s1 + $0x1d0] sm:$0xff]
      %v897 = vld [vmem:[%s1 + $0x1d8] sm:$0xff]
      %v898 = vld [vmem:[%s1 + $0x1e0] sm:$0xff]
      %v899 = vld [vmem:[%s1 + $0x1e8] sm:$0xff]
      %v900 = vld [vmem:[%s1 + $0x1f0] sm:$0xff]
      %v901 = vld [vmem:[%s1 + $0x1f8] sm:$0xff]
      %v902 = vld [vmem:[%s1 + $0x200] sm:$0xff]
      %v903 = vld [vmem:[%s1 + $0x208] sm:$0xff]
      %v904 = vld [vmem:[%s1 + $0x210] sm:$0xff]
      %v905 = vld [vmem:[%s1 + $0x218] sm:$0xff]
      %v906 = vld [vmem:[%s1 + $0x220] sm:$0xff]
      %v907 = vld [vmem:[%s1 + $0x228] sm:$0xff]
      %v908 = vld [vmem:[%s1 + $0x230] sm:$0xff]
      %v909 = vld [vmem:[%s1 + $0x238] sm:$0xff]
      %v910 = vld [vmem:[%s1 + $0x240] sm:$0xff]
      %v911 = vld [vmem:[%s1 + $0x248] sm:$0xff]
      %v912 = vld [vmem:[%s1 + $0x250] sm:$0xff]
      %v913 = vld [vmem:[%s1 + $0x258] sm:$0xff]
      %v914 = vld [vmem:[%s1 + $0x260] sm:$0xff]
      %v915 = vld [vmem:[%s1 + $0x268] sm:$0xff]
      %v916 = vld [vmem:[%s1 + $0x270] sm:$0xff]
      %v917 = vld [vmem:[%s1 + $0x278] sm:$0xff]
      %v918 = vld [vmem:[%s1 + $0x280] sm:$0xff]
      %v919 = vld [vmem:[%s1 + $0x288] sm:$0xff]
      %v920 = vld [vmem:[%s1 + $0x290] sm:$0xff]
      %v921 = vld [vmem:[%s1 + $0x298] sm:$0xff]
      %v922 = vld [vmem:[%s1 + $0x2a0] sm:$0xff]
      %v923 = vld [vmem:[%s1 + $0x2a8] sm:$0xff]
      %v924 = vld [vmem:[%s1 + $0x2b0] sm:$0xff]
      %v925 = vld [vmem:[%s1 + $0x2b8] sm:$0xff]
      %v926 = vld [vmem:[%s1 + $0x2c0] sm:$0xff]
      %v927 = vld [vmem:[%s1 + $0x2c8] sm:$0xff]
      %v928 = vld [vmem:[%s1 + $0x2d0] sm:$0xff]
      %v929 = vld [vmem:[%s1 + $0x2d8] sm:$0xff]
      %v930 = vld [vmem:[%s1 + $0x2e0] sm:$0xff]
      %v931 = vld [vmem:[%s1 + $0x2e8] sm:$0xff]
      %v932 = vld [vmem:[%s1 + $0x2f0] sm:$0xff]
      %v933 = vld [vmem:[%s1 + $0x2f8] sm:$0xff]
      %934 = vmatpush.msra.mxu0 %v901
      %935 = vmatpush.msra.mxu0 %v900
      %936 = vmatpush.msra.mxu0 %v899
      %937 = vmatpush.msra.mxu0 %v898
      %938 = vmatpush.msra.mxu0 %v897
      %939 = vmatpush.msra.mxu0 %v896
      %940 = vmatpush.msra.mxu0 %v895
      %941 = vmatpush.msra.mxu0 %v894
      %942 = vmatpush.msra.mxu0 %v893
      %943 = vmatpush.msra.mxu0 %v892
      %944 = vmatpush.msra.mxu0 %v891
      %945 = vmatpush.msra.mxu0 %v890
      %946 = vmatpush.msra.mxu0 %v889
      %947 = vmatpush.msra.mxu0 %v888
      %948 = vmatpush.msra.mxu0 %v887
      %949 = vmatpush.msra.mxu0 %v886
      %950 = vmatmul.f32.gmra.mxu0 %v838
      %v951 = vpop.f32.mrf.mxu0
      %v952 = vadd.f32 0.0, %v951
      %953 = vmatmul.f32.gmra.mxu0 %v839
      %v954 = vpop.f32.mrf.mxu0
      %v955 = vadd.f32 0.0, %v954
      %956 = vmatmul.f32.gmra.mxu0 %v840
      %v957 = vpop.f32.mrf.mxu0
      %v958 = vadd.f32 0.0, %v957
      %959 = vmatmul.f32.gmra.mxu0 %v841
      %v960 = vpop.f32.mrf.mxu0
      %v961 = vadd.f32 0.0, %v960
      %962 = vmatmul.f32.gmra.mxu0 %v842
      %v963 = vpop.f32.mrf.mxu0
      %v964 = vadd.f32 0.0, %v963
      %965 = vmatmul.f32.gmra.mxu0 %v843
      %v966 = vpop.f32.mrf.mxu0
      %v967 = vadd.f32 0.0, %v966
      %968 = vmatmul.f32.gmra.mxu0 %v844
      %v969 = vpop.f32.mrf.mxu0
      %v970 = vadd.f32 0.0, %v969
      %971 = vmatmul.f32.gmra.mxu0 %v845
      %v972 = vpop.f32.mrf.mxu0
      %v973 = vadd.f32 0.0, %v972
      %974 = vmatmul.f32.gmra.mxu0 %v846
      %v975 = vpop.f32.mrf.mxu0
      %v976 = vadd.f32 0.0, %v975
      %977 = vmatmul.f32.gmra.mxu0 %v847
      %v978 = vpop.f32.mrf.mxu0
      %v979 = vadd.f32 0.0, %v978
      %980 = vmatmul.f32.gmra.mxu0 %v848
      %v981 = vpop.f32.mrf.mxu0
      %v982 = vadd.f32 0.0, %v981
      %983 = vmatmul.f32.gmra.mxu0 %v849
      %v984 = vpop.f32.mrf.mxu0
      %v985 = vadd.f32 0.0, %v984
      %986 = vmatmul.f32.gmra.mxu0 %v850
      %v987 = vpop.f32.mrf.mxu0
      %v988 = vadd.f32 0.0, %v987
      %989 = vmatmul.f32.gmra.mxu0 %v851
      %v990 = vpop.f32.mrf.mxu0
      %v991 = vadd.f32 0.0, %v990
      %992 = vmatmul.f32.gmra.mxu0 %v852
      %v993 = vpop.f32.mrf.mxu0
      %v994 = vadd.f32 0.0, %v993
      %995 = vmatmul.f32.gmra.mxu0 %v853
      %v996 = vpop.f32.mrf.mxu0
      %v997 = vadd.f32 0.0, %v996
      %998 = vdwg.mxu0
      %999 = vmatpush.msra.mxu0 %v917
      %1000 = vmatpush.msra.mxu0 %v916
      %1001 = vmatpush.msra.mxu0 %v915
      %1002 = vmatpush.msra.mxu0 %v914
      %1003 = vmatpush.msra.mxu0 %v913
      %1004 = vmatpush.msra.mxu0 %v912
      %1005 = vmatpush.msra.mxu0 %v911
      %1006 = vmatpush.msra.mxu0 %v910
      %1007 = vmatpush.msra.mxu0 %v909
      %1008 = vmatpush.msra.mxu0 %v908
      %1009 = vmatpush.msra.mxu0 %v907
      %1010 = vmatpush.msra.mxu0 %v906
      %1011 = vmatpush.msra.mxu0 %v905
      %1012 = vmatpush.msra.mxu0 %v904
      %1013 = vmatpush.msra.mxu0 %v903
      %1014 = vmatpush.msra.mxu0 %v902
      %1015 = vmatmul.f32.gmra.mxu0 %v854
      %v1016 = vpop.f32.mrf.mxu0
      %v1017 = vadd.f32 %v952, %v1016
      %1018 = vmatmul.f32.gmra.mxu0 %v855
      %v1019 = vpop.f32.mrf.mxu0
      %v1020 = vadd.f32 %v955, %v1019
      %1021 = vmatmul.f32.gmra.mxu0 %v856
      %v1022 = vpop.f32.mrf.mxu0
      %v1023 = vadd.f32 %v958, %v1022
      %1024 = vmatmul.f32.gmra.mxu0 %v857
      %v1025 = vpop.f32.mrf.mxu0
      %v1026 = vadd.f32 %v961, %v1025
      %1027 = vmatmul.f32.gmra.mxu0 %v858
      %v1028 = vpop.f32.mrf.mxu0
      %v1029 = vadd.f32 %v964, %v1028
      %1030 = vmatmul.f32.gmra.mxu0 %v859
      %v1031 = vpop.f32.mrf.mxu0
      %v1032 = vadd.f32 %v967, %v1031
      %1033 = vmatmul.f32.gmra.mxu0 %v860
      %v1034 = vpop.f32.mrf.mxu0
      %v1035 = vadd.f32 %v970, %v1034
      %1036 = vmatmul.f32.gmra.mxu0 %v861
      %v1037 = vpop.f32.mrf.mxu0
      %v1038 = vadd.f32 %v973, %v1037
      %1039 = vmatmul.f32.gmra.mxu0 %v862
      %v1040 = vpop.f32.mrf.mxu0
      %v1041 = vadd.f32 %v976, %v1040
      %1042 = vmatmul.f32.gmra.mxu0 %v863
      %v1043 = vpop.f32.mrf.mxu0
      %v1044 = vadd.f32 %v979, %v1043
      %1045 = vmatmul.f32.gmra.mxu0 %v864
      %v1046 = vpop.f32.mrf.mxu0
      %v1047 = vadd.f32 %v982, %v1046
      %1048 = vmatmul.f32.gmra.mxu0 %v865
      %v1049 = vpop.f32.mrf.mxu0
      %v1050 = vadd.f32 %v985, %v1049
      %1051 = vmatmul.f32.gmra.mxu0 %v866
      %v1052 = vpop.f32.mrf.mxu0
      %v1053 = vadd.f32 %v988, %v1052
      %1054 = vmatmul.f32.gmra.mxu0 %v867
      %v1055 = vpop.f32.mrf.mxu0
      %v1056 = vadd.f32 %v991, %v1055
      %1057 = vmatmul.f32.gmra.mxu0 %v868
      %v1058 = vpop.f32.mrf.mxu0
      %v1059 = vadd.f32 %v994, %v1058
      %1060 = vmatmul.f32.gmra.mxu0 %v869
      %v1061 = vpop.f32.mrf.mxu0
      %v1062 = vadd.f32 %v997, %v1061
      %1063 = vdwg.mxu0
      %1064 = vmatpush.msra.mxu0 %v933
      %1065 = vmatpush.msra.mxu0 %v932
      %1066 = vmatpush.msra.mxu0 %v931
      %1067 = vmatpush.msra.mxu0 %v930
      %1068 = vmatpush.msra.mxu0 %v929
      %1069 = vmatpush.msra.mxu0 %v928
      %1070 = vmatpush.msra.mxu0 %v927
      %1071 = vmatpush.msra.mxu0 %v926
      %1072 = vmatpush.msra.mxu0 %v925
      %1073 = vmatpush.msra.mxu0 %v924
      %1074 = vmatpush.msra.mxu0 %v923
      %1075 = vmatpush.msra.mxu0 %v922
      %1076 = vmatpush.msra.mxu0 %v921
      %1077 = vmatpush.msra.mxu0 %v920
      %1078 = vmatpush.msra.mxu0 %v919
      %1079 = vmatpush.msra.mxu0 %v918
      %1080 = vmatmul.f32.gmra.mxu0 %v870
      %v1081 = vpop.f32.mrf.mxu0
      %v1082 = vadd.f32 %v1017, %v1081
      %1083 = vmatmul.f32.gmra.mxu0 %v871
      %v1084 = vpop.f32.mrf.mxu0
      %v1085 = vadd.f32 %v1020, %v1084
      %1086 = vmatmul.f32.gmra.mxu0 %v872
      %v1087 = vpop.f32.mrf.mxu0
      %v1088 = vadd.f32 %v1023, %v1087
      %1089 = vmatmul.f32.gmra.mxu0 %v873
      %v1090 = vpop.f32.mrf.mxu0
      %v1091 = vadd.f32 %v1026, %v1090
      %1092 = vmatmul.f32.gmra.mxu0 %v874
      %v1093 = vpop.f32.mrf.mxu0
      %v1094 = vadd.f32 %v1029, %v1093
      %1095 = vmatmul.f32.gmra.mxu0 %v875
      %v1096 = vpop.f32.mrf.mxu0
      %v1097 = vadd.f32 %v1032, %v1096
      %1098 = vmatmul.f32.gmra.mxu0 %v876
      %v1099 = vpop.f32.mrf.mxu0
      %v1100 = vadd.f32 %v1035, %v1099
      %1101 = vmatmul.f32.gmra.mxu0 %v877
      %v1102 = vpop.f32.mrf.mxu0
      %v1103 = vadd.f32 %v1038, %v1102
      %1104 = vmatmul.f32.gmra.mxu0 %v878
      %v1105 = vpop.f32.mrf.mxu0
      %v1106 = vadd.f32 %v1041, %v1105
      %1107 = vmatmul.f32.gmra.mxu0 %v879
      %v1108 = vpop.f32.mrf.mxu0
      %v1109 = vadd.f32 %v1044, %v1108
      %1110 = vmatmul.f32.gmra.mxu0 %v880
      %v1111 = vpop.f32.mrf.mxu0
      %v1112 = vadd.f32 %v1047, %v1111
      %1113 = vmatmul.f32.gmra.mxu0 %v881
      %v1114 = vpop.f32.mrf.mxu0
      %v1115 = vadd.f32 %v1050, %v1114
      %1116 = vmatmul.f32.gmra.mxu0 %v882
      %v1117 = vpop.f32.mrf.mxu0
      %v1118 = vadd.f32 %v1053, %v1117
      %1119 = vmatmul.f32.gmra.mxu0 %v883
      %v1120 = vpop.f32.mrf.mxu0
      %v1121 = vadd.f32 %v1056, %v1120
      %1122 = vmatmul.f32.gmra.mxu0 %v884
      %v1123 = vpop.f32.mrf.mxu0
      %v1124 = vadd.f32 %v1059, %v1123
      %1125 = vmatmul.f32.gmra.mxu0 %v885
      %v1126 = vpop.f32.mrf.mxu0
      %v1127 = vadd.f32 %v1062, %v1126
      %1128 = vdwg.mxu0
      %1129 = vmatpush.msra.mxu0 %v804
      %1130 = vmatpush.msra.mxu0 %v803
      %1131 = vmatpush.msra.mxu0 %v802
      %1132 = vmatpush.msra.mxu0 %v801
      %1133 = vmatpush.msra.mxu0 %v800
      %1134 = vmatpush.msra.mxu0 %v799
      %1135 = vmatpush.msra.mxu0 %v798
      %1136 = vmatpush.msra.mxu0 %v797
      %1137 = vmatpush.msra.mxu0 %v796
      %1138 = vmatpush.msra.mxu0 %v795
      %1139 = vmatpush.msra.mxu0 %v794
      %1140 = vmatpush.msra.mxu0 %v793
      %1141 = vmatpush.msra.mxu0 %v792
      %1142 = vmatpush.msra.mxu0 %v791
      %1143 = vmatpush.msra.mxu0 %v790
      %1144 = vmatpush.msra.mxu0 %v789
      %1145 = vmatmul.f32.gmra.mxu0 %v741
      %v1146 = vpop.f32.mrf.mxu0
      %v1147 = vadd.f32 %v1082, %v1146
      %1148 = vmatmul.f32.gmra.mxu0 %v742
      %v1149 = vpop.f32.mrf.mxu0
      %v1150 = vadd.f32 %v1085, %v1149
      %1151 = vmatmul.f32.gmra.mxu0 %v743
      %v1152 = vpop.f32.mrf.mxu0
      %v1153 = vadd.f32 %v1088, %v1152
      %1154 = vmatmul.f32.gmra.mxu0 %v744
      %v1155 = vpop.f32.mrf.mxu0
      %v1156 = vadd.f32 %v1091, %v1155
      %1157 = vmatmul.f32.gmra.mxu0 %v745
      %v1158 = vpop.f32.mrf.mxu0
      %v1159 = vadd.f32 %v1094, %v1158
      %1160 = vmatmul.f32.gmra.mxu0 %v746
      %v1161 = vpop.f32.mrf.mxu0
      %v1162 = vadd.f32 %v1097, %v1161
      %1163 = vmatmul.f32.gmra.mxu0 %v747
      %v1164 = vpop.f32.mrf.mxu0
      %v1165 = vadd.f32 %v1100, %v1164
      %1166 = vmatmul.f32.gmra.mxu0 %v748
      %v1167 = vpop.f32.mrf.mxu0
      %v1168 = vadd.f32 %v1103, %v1167
      %1169 = vmatmul.f32.gmra.mxu0 %v749
      %v1170 = vpop.f32.mrf.mxu0
      %v1171 = vadd.f32 %v1106, %v1170
      %1172 = vmatmul.f32.gmra.mxu0 %v750
      %v1173 = vpop.f32.mrf.mxu0
      %v1174 = vadd.f32 %v1109, %v1173
      %1175 = vmatmul.f32.gmra.mxu0 %v751
      %v1176 = vpop.f32.mrf.mxu0
      %v1177 = vadd.f32 %v1112, %v1176
      %1178 = vmatmul.f32.gmra.mxu0 %v752
      %v1179 = vpop.f32.mrf.mxu0
      %v1180 = vadd.f32 %v1115, %v1179
      %1181 = vmatmul.f32.gmra.mxu0 %v753
      %v1182 = vpop.f32.mrf.mxu0
      %v1183 = vadd.f32 %v1118, %v1182
      %1184 = vmatmul.f32.gmra.mxu0 %v754
      %v1185 = vpop.f32.mrf.mxu0
      %v1186 = vadd.f32 %v1121, %v1185
      %1187 = vmatmul.f32.gmra.mxu0 %v755
      %v1188 = vpop.f32.mrf.mxu0
      %v1189 = vadd.f32 %v1124, %v1188
      %1190 = vmatmul.f32.gmra.mxu0 %v756
      %v1191 = vpop.f32.mrf.mxu0
      %v1192 = vadd.f32 %v1127, %v1191
      %1193 = vdwg.mxu0
      %1194 = vmatpush.msra.mxu0 %v820
      %1195 = vmatpush.msra.mxu0 %v819
      %1196 = vmatpush.msra.mxu0 %v818
      %1197 = vmatpush.msra.mxu0 %v817
      %1198 = vmatpush.msra.mxu0 %v816
      %1199 = vmatpush.msra.mxu0 %v815
      %1200 = vmatpush.msra.mxu0 %v814
      %1201 = vmatpush.msra.mxu0 %v813
      %1202 = vmatpush.msra.mxu0 %v812
      %1203 = vmatpush.msra.mxu0 %v811
      %1204 = vmatpush.msra.mxu0 %v810
      %1205 = vmatpush.msra.mxu0 %v809
      %1206 = vmatpush.msra.mxu0 %v808
      %1207 = vmatpush.msra.mxu0 %v807
      %1208 = vmatpush.msra.mxu0 %v806
      %1209 = vmatpush.msra.mxu0 %v805
      %1210 = vmatmul.f32.gmra.mxu0 %v757
      %v1211 = vpop.f32.mrf.mxu0
      %v1212 = vadd.f32 %v1147, %v1211
      %1213 = vmatmul.f32.gmra.mxu0 %v758
      %v1214 = vpop.f32.mrf.mxu0
      %v1215 = vadd.f32 %v1150, %v1214
      %1216 = vmatmul.f32.gmra.mxu0 %v759
      %v1217 = vpop.f32.mrf.mxu0
      %v1218 = vadd.f32 %v1153, %v1217
      %1219 = vmatmul.f32.gmra.mxu0 %v760
      %v1220 = vpop.f32.mrf.mxu0
      %v1221 = vadd.f32 %v1156, %v1220
      %1222 = vmatmul.f32.gmra.mxu0 %v761
      %v1223 = vpop.f32.mrf.mxu0
      %v1224 = vadd.f32 %v1159, %v1223
      %1225 = vmatmul.f32.gmra.mxu0 %v762
      %v1226 = vpop.f32.mrf.mxu0
      %v1227 = vadd.f32 %v1162, %v1226
      %1228 = vmatmul.f32.gmra.mxu0 %v763
      %v1229 = vpop.f32.mrf.mxu0
      %v1230 = vadd.f32 %v1165, %v1229
      %1231 = vmatmul.f32.gmra.mxu0 %v764
      %v1232 = vpop.f32.mrf.mxu0
      %v1233 = vadd.f32 %v1168, %v1232
      %1234 = vmatmul.f32.gmra.mxu0 %v765
      %v1235 = vpop.f32.mrf.mxu0
      %v1236 = vadd.f32 %v1171, %v1235
      %1237 = vmatmul.f32.gmra.mxu0 %v766
      %v1238 = vpop.f32.mrf.mxu0
      %v1239 = vadd.f32 %v1174, %v1238
      %1240 = vmatmul.f32.gmra.mxu0 %v767
      %v1241 = vpop.f32.mrf.mxu0
      %v1242 = vadd.f32 %v1177, %v1241
      %1243 = vmatmul.f32.gmra.mxu0 %v768
      %v1244 = vpop.f32.mrf.mxu0
      %v1245 = vadd.f32 %v1180, %v1244
      %1246 = vmatmul.f32.gmra.mxu0 %v769
      %v1247 = vpop.f32.mrf.mxu0
      %v1248 = vadd.f32 %v1183, %v1247
      %1249 = vmatmul.f32.gmra.mxu0 %v770
      %v1250 = vpop.f32.mrf.mxu0
      %v1251 = vadd.f32 %v1186, %v1250
      %1252 = vmatmul.f32.gmra.mxu0 %v771
      %v1253 = vpop.f32.mrf.mxu0
      %v1254 = vadd.f32 %v1189, %v1253
      %1255 = vmatmul.f32.gmra.mxu0 %v772
      %v1256 = vpop.f32.mrf.mxu0
      %v1257 = vadd.f32 %v1192, %v1256
      %1258 = vdwg.mxu0
      %1259 = vmatpush.msra.mxu0 %v836
      %1260 = vmatpush.msra.mxu0 %v835
      %1261 = vmatpush.msra.mxu0 %v834
      %1262 = vmatpush.msra.mxu0 %v833
      %1263 = vmatpush.msra.mxu0 %v832
      %1264 = vmatpush.msra.mxu0 %v831
      %1265 = vmatpush.msra.mxu0 %v830
      %1266 = vmatpush.msra.mxu0 %v829
      %1267 = vmatpush.msra.mxu0 %v828
      %1268 = vmatpush.msra.mxu0 %v827
      %1269 = vmatpush.msra.mxu0 %v826
      %1270 = vmatpush.msra.mxu0 %v825
      %1271 = vmatpush.msra.mxu0 %v824
      %1272 = vmatpush.msra.mxu0 %v823
      %1273 = vmatpush.msra.mxu0 %v822
      %1274 = vmatpush.msra.mxu0 %v821
      %1275 = vmatmul.f32.gmra.mxu0 %v773
      %v1276 = vpop.f32.mrf.mxu0
      %v1277 = vadd.f32 %v1212, %v1276
      %1278 = vmatmul.f32.gmra.mxu0 %v774
      %v1279 = vpop.f32.mrf.mxu0
      %v1280 = vadd.f32 %v1215, %v1279
      %1281 = vmatmul.f32.gmra.mxu0 %v775
      %v1282 = vpop.f32.mrf.mxu0
      %v1283 = vadd.f32 %v1218, %v1282
      %1284 = vmatmul.f32.gmra.mxu0 %v776
      %v1285 = vpop.f32.mrf.mxu0
      %v1286 = vadd.f32 %v1221, %v1285
      %1287 = vmatmul.f32.gmra.mxu0 %v777
      %v1288 = vpop.f32.mrf.mxu0
      %v1289 = vadd.f32 %v1224, %v1288
      %1290 = vmatmul.f32.gmra.mxu0 %v778
      %v1291 = vpop.f32.mrf.mxu0
      %v1292 = vadd.f32 %v1227, %v1291
      %1293 = vmatmul.f32.gmra.mxu0 %v779
      %v1294 = vpop.f32.mrf.mxu0
      %v1295 = vadd.f32 %v1230, %v1294
      %1296 = vmatmul.f32.gmra.mxu0 %v780
      %v1297 = vpop.f32.mrf.mxu0
      %v1298 = vadd.f32 %v1233, %v1297
      %1299 = vmatmul.f32.gmra.mxu0 %v781
      %v1300 = vpop.f32.mrf.mxu0
      %v1301 = vadd.f32 %v1236, %v1300
      %1302 = vmatmul.f32.gmra.mxu0 %v782
      %v1303 = vpop.f32.mrf.mxu0
      %v1304 = vadd.f32 %v1239, %v1303
      %1305 = vmatmul.f32.gmra.mxu0 %v783
      %v1306 = vpop.f32.mrf.mxu0
      %v1307 = vadd.f32 %v1242, %v1306
      %1308 = vmatmul.f32.gmra.mxu0 %v784
      %v1309 = vpop.f32.mrf.mxu0
      %v1310 = vadd.f32 %v1245, %v1309
      %1311 = vmatmul.f32.gmra.mxu0 %v785
      %v1312 = vpop.f32.mrf.mxu0
      %v1313 = vadd.f32 %v1248, %v1312
      %1314 = vmatmul.f32.gmra.mxu0 %v786
      %v1315 = vpop.f32.mrf.mxu0
      %v1316 = vadd.f32 %v1251, %v1315
      %1317 = vmatmul.f32.gmra.mxu0 %v787
      %v1318 = vpop.f32.mrf.mxu0
      %v1319 = vadd.f32 %v1254, %v1318
      %1320 = vmatmul.f32.gmra.mxu0 %v788
      %v1321 = vpop.f32.mrf.mxu0
      %v1322 = vadd.f32 %v1257, %v1321
      %1323 = vdwg.mxu0
      %s1324 = scalar_lea.vmem %s337, 48 [#allocation2]
      %v1325 = vld [vmem:[%s1324] sm:$0xff]
      %v1326 = vld [vmem:[%s1324 + $0x8] sm:$0xff]
      %v1327 = vld [vmem:[%s1324 + $0x18] sm:$0xff]
      %v1328 = vld [vmem:[%s1324 + $0x20] sm:$0xff]
      %v1329 = vld [vmem:[%s1324 + $0x30] sm:$0xff]
      %v1330 = vld [vmem:[%s1324 + $0x38] sm:$0xff]
      %v1331 = vld [vmem:[%s1324 + $0x48] sm:$0xff]
      %v1332 = vld [vmem:[%s1324 + $0x50] sm:$0xff]
      %v1333 = vld [vmem:[%s1324 + $0x60] sm:$0xff]
      %v1334 = vld [vmem:[%s1324 + $0x68] sm:$0xff]
      %v1335 = vld [vmem:[%s1324 + $0x78] sm:$0xff]
      %v1336 = vld [vmem:[%s1324 + $0x80] sm:$0xff]
      %v1337 = vld [vmem:[%s1324 + $0x90] sm:$0xff]
      %v1338 = vld [vmem:[%s1324 + $0x98] sm:$0xff]
      %v1339 = vld [vmem:[%s1324 + $0xa8] sm:$0xff]
      %v1340 = vld [vmem:[%s1324 + $0xb0] sm:$0xff]
      %v1341 = vld [vmem:[%s1324 + $0x1] sm:$0xff]
      %v1342 = vld [vmem:[%s1324 + $0x9] sm:$0xff]
      %v1343 = vld [vmem:[%s1324 + $0x19] sm:$0xff]
      %v1344 = vld [vmem:[%s1324 + $0x21] sm:$0xff]
      %v1345 = vld [vmem:[%s1324 + $0x31] sm:$0xff]
      %v1346 = vld [vmem:[%s1324 + $0x39] sm:$0xff]
      %v1347 = vld [vmem:[%s1324 + $0x49] sm:$0xff]
      %v1348 = vld [vmem:[%s1324 + $0x51] sm:$0xff]
      %v1349 = vld [vmem:[%s1324 + $0x61] sm:$0xff]
      %v1350 = vld [vmem:[%s1324 + $0x69] sm:$0xff]
      %v1351 = vld [vmem:[%s1324 + $0x79] sm:$0xff]
      %v1352 = vld [vmem:[%s1324 + $0x81] sm:$0xff]
      %v1353 = vld [vmem:[%s1324 + $0x91] sm:$0xff]
      %v1354 = vld [vmem:[%s1324 + $0x99] sm:$0xff]
      %v1355 = vld [vmem:[%s1324 + $0xa9] sm:$0xff]
      %v1356 = vld [vmem:[%s1324 + $0xb1] sm:$0xff]
      %v1357 = vld [vmem:[%s1324 + $0x2] sm:$0xff]
      %v1358 = vld [vmem:[%s1324 + $0xa] sm:$0xff]
      %v1359 = vld [vmem:[%s1324 + $0x1a] sm:$0xff]
      %v1360 = vld [vmem:[%s1324 + $0x22] sm:$0xff]
      %v1361 = vld [vmem:[%s1324 + $0x32] sm:$0xff]
      %v1362 = vld [vmem:[%s1324 + $0x3a] sm:$0xff]
      %v1363 = vld [vmem:[%s1324 + $0x4a] sm:$0xff]
      %v1364 = vld [vmem:[%s1324 + $0x52] sm:$0xff]
      %v1365 = vld [vmem:[%s1324 + $0x62] sm:$0xff]
      %v1366 = vld [vmem:[%s1324 + $0x6a] sm:$0xff]
      %v1367 = vld [vmem:[%s1324 + $0x7a] sm:$0xff]
      %v1368 = vld [vmem:[%s1324 + $0x82] sm:$0xff]
      %v1369 = vld [vmem:[%s1324 + $0x92] sm:$0xff]
      %v1370 = vld [vmem:[%s1324 + $0x9a] sm:$0xff]
      %v1371 = vld [vmem:[%s1324 + $0xaa] sm:$0xff]
      %v1372 = vld [vmem:[%s1324 + $0xb2] sm:$0xff]
      %v1373 = vld [vmem:[%s1 + $0x300] sm:$0xff]
      %v1374 = vld [vmem:[%s1 + $0x308] sm:$0xff]
      %v1375 = vld [vmem:[%s1 + $0x310] sm:$0xff]
      %v1376 = vld [vmem:[%s1 + $0x318] sm:$0xff]
      %v1377 = vld [vmem:[%s1 + $0x320] sm:$0xff]
      %v1378 = vld [vmem:[%s1 + $0x328] sm:$0xff]
      %v1379 = vld [vmem:[%s1 + $0x330] sm:$0xff]
      %v1380 = vld [vmem:[%s1 + $0x338] sm:$0xff]
      %v1381 = vld [vmem:[%s1 + $0x340] sm:$0xff]
      %v1382 = vld [vmem:[%s1 + $0x348] sm:$0xff]
      %v1383 = vld [vmem:[%s1 + $0x350] sm:$0xff]
      %v1384 = vld [vmem:[%s1 + $0x358] sm:$0xff]
      %v1385 = vld [vmem:[%s1 + $0x360] sm:$0xff]
      %v1386 = vld [vmem:[%s1 + $0x368] sm:$0xff]
      %v1387 = vld [vmem:[%s1 + $0x370] sm:$0xff]
      %v1388 = vld [vmem:[%s1 + $0x378] sm:$0xff]
      %v1389 = vld [vmem:[%s1 + $0x380] sm:$0xff]
      %v1390 = vld [vmem:[%s1 + $0x388] sm:$0xff]
      %v1391 = vld [vmem:[%s1 + $0x390] sm:$0xff]
      %v1392 = vld [vmem:[%s1 + $0x398] sm:$0xff]
      %v1393 = vld [vmem:[%s1 + $0x3a0] sm:$0xff]
      %v1394 = vld [vmem:[%s1 + $0x3a8] sm:$0xff]
      %v1395 = vld [vmem:[%s1 + $0x3b0] sm:$0xff]
      %v1396 = vld [vmem:[%s1 + $0x3b8] sm:$0xff]
      %v1397 = vld [vmem:[%s1 + $0x3c0] sm:$0xff]
      %v1398 = vld [vmem:[%s1 + $0x3c8] sm:$0xff]
      %v1399 = vld [vmem:[%s1 + $0x3d0] sm:$0xff]
      %v1400 = vld [vmem:[%s1 + $0x3d8] sm:$0xff]
      %v1401 = vld [vmem:[%s1 + $0x3e0] sm:$0xff]
      %v1402 = vld [vmem:[%s1 + $0x3e8] sm:$0xff]
      %v1403 = vld [vmem:[%s1 + $0x3f0] sm:$0xff]
      %v1404 = vld [vmem:[%s1 + $0x3f8] sm:$0xff]
      %v1405 = vld [vmem:[%s1 + $0x400] sm:$0xff]
      %v1406 = vld [vmem:[%s1 + $0x408] sm:$0xff]
      %v1407 = vld [vmem:[%s1 + $0x410] sm:$0xff]
      %v1408 = vld [vmem:[%s1 + $0x418] sm:$0xff]
      %v1409 = vld [vmem:[%s1 + $0x420] sm:$0xff]
      %v1410 = vld [vmem:[%s1 + $0x428] sm:$0xff]
      %v1411 = vld [vmem:[%s1 + $0x430] sm:$0xff]
      %v1412 = vld [vmem:[%s1 + $0x438] sm:$0xff]
      %v1413 = vld [vmem:[%s1 + $0x440] sm:$0xff]
      %v1414 = vld [vmem:[%s1 + $0x448] sm:$0xff]
      %v1415 = vld [vmem:[%s1 + $0x450] sm:$0xff]
      %v1416 = vld [vmem:[%s1 + $0x458] sm:$0xff]
      %v1417 = vld [vmem:[%s1 + $0x460] sm:$0xff]
      %v1418 = vld [vmem:[%s1 + $0x468] sm:$0xff]
      %v1419 = vld [vmem:[%s1 + $0x470] sm:$0xff]
      %v1420 = vld [vmem:[%s1 + $0x478] sm:$0xff]
      %1421 = vmatpush.msra.mxu0 %v1388
      %1422 = vmatpush.msra.mxu0 %v1387
      %1423 = vmatpush.msra.mxu0 %v1386
      %1424 = vmatpush.msra.mxu0 %v1385
      %1425 = vmatpush.msra.mxu0 %v1384
      %1426 = vmatpush.msra.mxu0 %v1383
      %1427 = vmatpush.msra.mxu0 %v1382
      %1428 = vmatpush.msra.mxu0 %v1381
      %1429 = vmatpush.msra.mxu0 %v1380
      %1430 = vmatpush.msra.mxu0 %v1379
      %1431 = vmatpush.msra.mxu0 %v1378
      %1432 = vmatpush.msra.mxu0 %v1377
      %1433 = vmatpush.msra.mxu0 %v1376
      %1434 = vmatpush.msra.mxu0 %v1375
      %1435 = vmatpush.msra.mxu0 %v1374
      %1436 = vmatpush.msra.mxu0 %v1373
      %1437 = vmatmul.f32.gmra.mxu0 %v1325
      %v1438 = vpop.f32.mrf.mxu0
      %v1439 = vadd.f32 0.0, %v1438
      %1440 = vmatmul.f32.gmra.mxu0 %v1326
      %v1441 = vpop.f32.mrf.mxu0
      %v1442 = vadd.f32 0.0, %v1441
      %1443 = vmatmul.f32.gmra.mxu0 %v1327
      %v1444 = vpop.f32.mrf.mxu0
      %v1445 = vadd.f32 0.0, %v1444
      %1446 = vmatmul.f32.gmra.mxu0 %v1328
      %v1447 = vpop.f32.mrf.mxu0
      %v1448 = vadd.f32 0.0, %v1447
      %1449 = vmatmul.f32.gmra.mxu0 %v1329
      %v1450 = vpop.f32.mrf.mxu0
      %v1451 = vadd.f32 0.0, %v1450
      %1452 = vmatmul.f32.gmra.mxu0 %v1330
      %v1453 = vpop.f32.mrf.mxu0
      %v1454 = vadd.f32 0.0, %v1453
      %1455 = vmatmul.f32.gmra.mxu0 %v1331
      %v1456 = vpop.f32.mrf.mxu0
      %v1457 = vadd.f32 0.0, %v1456
      %1458 = vmatmul.f32.gmra.mxu0 %v1332
      %v1459 = vpop.f32.mrf.mxu0
      %v1460 = vadd.f32 0.0, %v1459
      %1461 = vmatmul.f32.gmra.mxu0 %v1333
      %v1462 = vpop.f32.mrf.mxu0
      %v1463 = vadd.f32 0.0, %v1462
      %1464 = vmatmul.f32.gmra.mxu0 %v1334
      %v1465 = vpop.f32.mrf.mxu0
      %v1466 = vadd.f32 0.0, %v1465
      %1467 = vmatmul.f32.gmra.mxu0 %v1335
      %v1468 = vpop.f32.mrf.mxu0
      %v1469 = vadd.f32 0.0, %v1468
      %1470 = vmatmul.f32.gmra.mxu0 %v1336
      %v1471 = vpop.f32.mrf.mxu0
      %v1472 = vadd.f32 0.0, %v1471
      %1473 = vmatmul.f32.gmra.mxu0 %v1337
      %v1474 = vpop.f32.mrf.mxu0
      %v1475 = vadd.f32 0.0, %v1474
      %1476 = vmatmul.f32.gmra.mxu0 %v1338
      %v1477 = vpop.f32.mrf.mxu0
      %v1478 = vadd.f32 0.0, %v1477
      %1479 = vmatmul.f32.gmra.mxu0 %v1339
      %v1480 = vpop.f32.mrf.mxu0
      %v1481 = vadd.f32 0.0, %v1480
      %1482 = vmatmul.f32.gmra.mxu0 %v1340
      %v1483 = vpop.f32.mrf.mxu0
      %v1484 = vadd.f32 0.0, %v1483
      %1485 = vdwg.mxu0
      %1486 = vmatpush.msra.mxu0 %v1404
      %1487 = vmatpush.msra.mxu0 %v1403
      %1488 = vmatpush.msra.mxu0 %v1402
      %1489 = vmatpush.msra.mxu0 %v1401
      %1490 = vmatpush.msra.mxu0 %v1400
      %1491 = vmatpush.msra.mxu0 %v1399
      %1492 = vmatpush.msra.mxu0 %v1398
      %1493 = vmatpush.msra.mxu0 %v1397
      %1494 = vmatpush.msra.mxu0 %v1396
      %1495 = vmatpush.msra.mxu0 %v1395
      %1496 = vmatpush.msra.mxu0 %v1394
      %1497 = vmatpush.msra.mxu0 %v1393
      %1498 = vmatpush.msra.mxu0 %v1392
      %1499 = vmatpush.msra.mxu0 %v1391
      %1500 = vmatpush.msra.mxu0 %v1390
      %1501 = vmatpush.msra.mxu0 %v1389
      %1502 = vmatmul.f32.gmra.mxu0 %v1341
      %v1503 = vpop.f32.mrf.mxu0
      %v1504 = vadd.f32 %v1439, %v1503
      %1505 = vmatmul.f32.gmra.mxu0 %v1342
      %v1506 = vpop.f32.mrf.mxu0
      %v1507 = vadd.f32 %v1442, %v1506
      %1508 = vmatmul.f32.gmra.mxu0 %v1343
      %v1509 = vpop.f32.mrf.mxu0
      %v1510 = vadd.f32 %v1445, %v1509
      %1511 = vmatmul.f32.gmra.mxu0 %v1344
      %v1512 = vpop.f32.mrf.mxu0
      %v1513 = vadd.f32 %v1448, %v1512
      %1514 = vmatmul.f32.gmra.mxu0 %v1345
      %v1515 = vpop.f32.mrf.mxu0
      %v1516 = vadd.f32 %v1451, %v1515
      %1517 = vmatmul.f32.gmra.mxu0 %v1346
      %v1518 = vpop.f32.mrf.mxu0
      %v1519 = vadd.f32 %v1454, %v1518
      %1520 = vmatmul.f32.gmra.mxu0 %v1347
      %v1521 = vpop.f32.mrf.mxu0
      %v1522 = vadd.f32 %v1457, %v1521
      %1523 = vmatmul.f32.gmra.mxu0 %v1348
      %v1524 = vpop.f32.mrf.mxu0
      %v1525 = vadd.f32 %v1460, %v1524
      %1526 = vmatmul.f32.gmra.mxu0 %v1349
      %v1527 = vpop.f32.mrf.mxu0
      %v1528 = vadd.f32 %v1463, %v1527
      %1529 = vmatmul.f32.gmra.mxu0 %v1350
      %v1530 = vpop.f32.mrf.mxu0
      %v1531 = vadd.f32 %v1466, %v1530
      %1532 = vmatmul.f32.gmra.mxu0 %v1351
      %v1533 = vpop.f32.mrf.mxu0
      %v1534 = vadd.f32 %v1469, %v1533
      %1535 = vmatmul.f32.gmra.mxu0 %v1352
      %v1536 = vpop.f32.mrf.mxu0
      %v1537 = vadd.f32 %v1472, %v1536
      %1538 = vmatmul.f32.gmra.mxu0 %v1353
      %v1539 = vpop.f32.mrf.mxu0
      %v1540 = vadd.f32 %v1475, %v1539
      %1541 = vmatmul.f32.gmra.mxu0 %v1354
      %v1542 = vpop.f32.mrf.mxu0
      %v1543 = vadd.f32 %v1478, %v1542
      %1544 = vmatmul.f32.gmra.mxu0 %v1355
      %v1545 = vpop.f32.mrf.mxu0
      %v1546 = vadd.f32 %v1481, %v1545
      %1547 = vmatmul.f32.gmra.mxu0 %v1356
      %v1548 = vpop.f32.mrf.mxu0
      %v1549 = vadd.f32 %v1484, %v1548
      %1550 = vdwg.mxu0
      %1551 = vmatpush.msra.mxu0 %v1420
      %1552 = vmatpush.msra.mxu0 %v1419
      %1553 = vmatpush.msra.mxu0 %v1418
      %1554 = vmatpush.msra.mxu0 %v1417
      %1555 = vmatpush.msra.mxu0 %v1416
      %1556 = vmatpush.msra.mxu0 %v1415
      %1557 = vmatpush.msra.mxu0 %v1414
      %1558 = vmatpush.msra.mxu0 %v1413
      %1559 = vmatpush.msra.mxu0 %v1412
      %1560 = vmatpush.msra.mxu0 %v1411
      %1561 = vmatpush.msra.mxu0 %v1410
      %1562 = vmatpush.msra.mxu0 %v1409
      %1563 = vmatpush.msra.mxu0 %v1408
      %1564 = vmatpush.msra.mxu0 %v1407
      %1565 = vmatpush.msra.mxu0 %v1406
      %1566 = vmatpush.msra.mxu0 %v1405
      %1567 = vmatmul.f32.gmra.mxu0 %v1357
      %v1568 = vpop.f32.mrf.mxu0
      %v1569 = vadd.f32 %v1504, %v1568
      %1570 = vmatmul.f32.gmra.mxu0 %v1358
      %v1571 = vpop.f32.mrf.mxu0
      %v1572 = vadd.f32 %v1507, %v1571
      %1573 = vmatmul.f32.gmra.mxu0 %v1359
      %v1574 = vpop.f32.mrf.mxu0
      %v1575 = vadd.f32 %v1510, %v1574
      %1576 = vmatmul.f32.gmra.mxu0 %v1360
      %v1577 = vpop.f32.mrf.mxu0
      %v1578 = vadd.f32 %v1513, %v1577
      %1579 = vmatmul.f32.gmra.mxu0 %v1361
      %v1580 = vpop.f32.mrf.mxu0
      %v1581 = vadd.f32 %v1516, %v1580
      %1582 = vmatmul.f32.gmra.mxu0 %v1362
      %v1583 = vpop.f32.mrf.mxu0
      %v1584 = vadd.f32 %v1519, %v1583
      %1585 = vmatmul.f32.gmra.mxu0 %v1363
      %v1586 = vpop.f32.mrf.mxu0
      %v1587 = vadd.f32 %v1522, %v1586
      %1588 = vmatmul.f32.gmra.mxu0 %v1364
      %v1589 = vpop.f32.mrf.mxu0
      %v1590 = vadd.f32 %v1525, %v1589
      %1591 = vmatmul.f32.gmra.mxu0 %v1365
      %v1592 = vpop.f32.mrf.mxu0
      %v1593 = vadd.f32 %v1528, %v1592
      %1594 = vmatmul.f32.gmra.mxu0 %v1366
      %v1595 = vpop.f32.mrf.mxu0
      %v1596 = vadd.f32 %v1531, %v1595
      %1597 = vmatmul.f32.gmra.mxu0 %v1367
      %v1598 = vpop.f32.mrf.mxu0
      %v1599 = vadd.f32 %v1534, %v1598
      %1600 = vmatmul.f32.gmra.mxu0 %v1368
      %v1601 = vpop.f32.mrf.mxu0
      %v1602 = vadd.f32 %v1537, %v1601
      %1603 = vmatmul.f32.gmra.mxu0 %v1369
      %v1604 = vpop.f32.mrf.mxu0
      %v1605 = vadd.f32 %v1540, %v1604
      %1606 = vmatmul.f32.gmra.mxu0 %v1370
      %v1607 = vpop.f32.mrf.mxu0
      %v1608 = vadd.f32 %v1543, %v1607
      %1609 = vmatmul.f32.gmra.mxu0 %v1371
      %v1610 = vpop.f32.mrf.mxu0
      %v1611 = vadd.f32 %v1546, %v1610
      %1612 = vmatmul.f32.gmra.mxu0 %v1372
      %v1613 = vpop.f32.mrf.mxu0
      %v1614 = vadd.f32 %v1549, %v1613
      %1615 = vdwg.mxu0
      %v1616 = vadd.f32 %v1277, %v1569
      %v1617 = vadd.f32 %v1280, %v1572
      %v1618 = vadd.f32 %v1283, %v1575
      %v1619 = vadd.f32 %v1286, %v1578
      %v1620 = vadd.f32 %v1289, %v1581
      %v1621 = vadd.f32 %v1292, %v1584
      %v1622 = vadd.f32 %v1295, %v1587
      %v1623 = vadd.f32 %v1298, %v1590
      %v1624 = vadd.f32 %v1301, %v1593
      %v1625 = vadd.f32 %v1304, %v1596
      %v1626 = vadd.f32 %v1307, %v1599
      %v1627 = vadd.f32 %v1310, %v1602
      %v1628 = vadd.f32 %v1313, %v1605
      %v1629 = vadd.f32 %v1316, %v1608
      %v1630 = vadd.f32 %v1319, %v1611
      %v1631 = vadd.f32 %v1322, %v1614
      %1632 = vst [vmem:[%s215] sm:$0xff] %v1616
      %1633 = vst [vmem:[%s215 + $0x8] sm:$0xff] %v1617
      %1634 = vst [vmem:[%s215 + $0x10] sm:$0xff] %v1618
      %1635 = vst [vmem:[%s215 + $0x18] sm:$0xff] %v1619
      %1636 = vst [vmem:[%s215 + $0x20] sm:$0xff] %v1620
      %1637 = vst [vmem:[%s215 + $0x28] sm:$0xff] %v1621
      %1638 = vst [vmem:[%s215 + $0x30] sm:$0xff] %v1622
      %1639 = vst [vmem:[%s215 + $0x38] sm:$0xff] %v1623
      %1640 = vst [vmem:[%s215 + $0x40] sm:$0xff] %v1624
      %1641 = vst [vmem:[%s215 + $0x48] sm:$0xff] %v1625
      %1642 = vst [vmem:[%s215 + $0x50] sm:$0xff] %v1626
      %1643 = vst [vmem:[%s215 + $0x58] sm:$0xff] %v1627
      %1644 = vst [vmem:[%s215 + $0x60] sm:$0xff] %v1628
      %1645 = vst [vmem:[%s215 + $0x68] sm:$0xff] %v1629
      %1646 = vst [vmem:[%s215 + $0x70] sm:$0xff] %v1630
      %1647 = vst [vmem:[%s215 + $0x78] sm:$0xff] %v1631
      %v1648 = vadd.f32 %v1616, %v1617
      %v1649 = vadd.f32 %v1648, %v1618
      %v1650 = vadd.f32 %v1649, %v1619
      %v1651 = vadd.f32 %v1650, %v1620
      %v1652 = vadd.f32 %v1651, %v1621
      %v1653 = vadd.f32 %v1652, %v1622
      %v1654 = vadd.f32 %v1653, %v1623
      %v1655 = vadd.f32 %v1654, %v1624
      %v1656 = vadd.f32 %v1655, %v1625
      %v1657 = vadd.f32 %v1656, %v1626
      %v1658 = vadd.f32 %v1657, %v1627
      %v1659 = vadd.f32 %v1658, %v1628
      %v1660 = vadd.f32 %v1659, %v1629
      %v1661 = vadd.f32 %v1660, %v1630
      %v1662 = vadd.f32 %v1661, %v1631
      %v1663 = vrot.slane %v1662, 4
      %v1664 = vadd.f32 %v1662, %v1663
      %v1665 = vrot.slane %v1664, 2
      %v1666 = vadd.f32 %v1664, %v1665
      %v1667 = vrot.slane %v1666, 1
      %v1668 = vadd.f32 %v1666, %v1667
      %v1669 = vmul.f32 %v1668, 0.0078125
      %v1670 = vsub.f32 %v1616, %v1669
      %v1671 = vsub.f32 %v1617, %v1669
      %v1672 = vsub.f32 %v1618, %v1669
      %v1673 = vsub.f32 %v1619, %v1669
      %v1674 = vsub.f32 %v1620, %v1669
      %v1675 = vsub.f32 %v1621, %v1669
      %v1676 = vsub.f32 %v1622, %v1669
      %v1677 = vsub.f32 %v1623, %v1669
      %v1678 = vsub.f32 %v1624, %v1669
      %v1679 = vsub.f32 %v1625, %v1669
      %v1680 = vsub.f32 %v1626, %v1669
      %v1681 = vsub.f32 %v1627, %v1669
      %v1682 = vsub.f32 %v1628, %v1669
      %v1683 = vsub.f32 %v1629, %v1669
      %v1684 = vsub.f32 %v1630, %v1669
      %v1685 = vsub.f32 %v1631, %v1669
      %v1686 = vmul.f32 %v1670, %v1670
      %v1687 = vmul.f32 %v1671, %v1671
      %v1688 = vmul.f32 %v1672, %v1672
      %v1689 = vmul.f32 %v1673, %v1673
      %v1690 = vmul.f32 %v1674, %v1674
      %v1691 = vmul.f32 %v1675, %v1675
      %v1692 = vmul.f32 %v1676, %v1676
      %v1693 = vmul.f32 %v1677, %v1677
      %v1694 = vmul.f32 %v1678, %v1678
      %v1695 = vmul.f32 %v1679, %v1679
      %v1696 = vmul.f32 %v1680, %v1680
      %v1697 = vmul.f32 %v1681, %v1681
      %v1698 = vmul.f32 %v1682, %v1682
      %v1699 = vmul.f32 %v1683, %v1683
      %v1700 = vmul.f32 %v1684, %v1684
      %v1701 = vmul.f32 %v1685, %v1685
      %v1702 = vadd.f32 %v1686, %v1687
      %v1703 = vadd.f32 %v1702, %v1688
      %v1704 = vadd.f32 %v1703, %v1689
      %v1705 = vadd.f32 %v1704, %v1690
      %v1706 = vadd.f32 %v1705, %v1691
      %v1707 = vadd.f32 %v1706, %v1692
      %v1708 = vadd.f32 %v1707, %v1693
      %v1709 = vadd.f32 %v1708, %v1694
      %v1710 = vadd.f32 %v1709, %v1695
      %v1711 = vadd.f32 %v1710, %v1696
      %v1712 = vadd.f32 %v1711, %v1697
      %v1713 = vadd.f32 %v1712, %v1698
      %v1714 = vadd.f32 %v1713, %v1699
      %v1715 = vadd.f32 %v1714, %v1700
      %v1716 = vadd.f32 %v1715, %v1701
      %v1717 = vrot.slane %v1716, 4
      %v1718 = vadd.f32 %v1716, %v1717
      %v1719 = vrot.slane %v1718, 2
      %v1720 = vadd.f32 %v1718, %v1719
      %v1721 = vrot.slane %v1720, 1
      %v1722 = vadd.f32 %v1720, %v1721
      %vm1723 = vcmask 1040384
      %v1724 = vsel %vm1723, %v1668, %v1722
      %vm1725 = vcmask 1041408
      %v1726 = vsel %vm1725, %v1724, 0.0
      %1727 = vst [vmem:[%s224] sm:$0xff] %v1726
      %s1728 = smul.u32 8, %s22
      %p1729 = scmp.lt.s32.totalorder %s21, 1
      %s1730 = scalar_select %p1729, %s21, 1
      %p1731 = scmp.lt.s32.totalorder %s1728, 15
      %s1732 = scalar_select %p1731, %s1728, 15
      %s1733 = smul.addr %s1732, 2
      %s1734 = smul.addr %s1730, 32
      %s1735 = sadd.s32 %s1733, %s1734
      %s1736 = smul.addr %s1735, 8
      %s1737 = scalar_lea.vmem %s4, %s1736
      %p1738 = scmp.lt.s32.totalorder %s21, 1
      %s1739 = scalar_select %p1738, %s21, 1
      %p1740 = scmp.lt.s32.totalorder %s22, 1
      %s1741 = scalar_select %p1740, %s22, 1
      %s1742 = smul.addr %s1739, 2
      %s1743 = sadd.s32 %s1741, %s1742
      %s1744 = smul.addr %s1743, 8
      %s1745 = scalar_lea.vmem %s5, %s1744
      // Predicated region
      $region85: #{double_conv.3} parent=31 // pred_check
        %p1746 = pneg %p112
      $region86: #{double_conv.3} parent=31 // pred_check_branch
        %1748 = sbr.rel (%p1746) target = $region88
      $region87: #{double_conv.3} parent=31 // pred_region
        %s1749 = smul.u32 8, %s22
      $region88: #{double_conv.3} parent=31 // pred_fallthru
        _
      // Predicated region
      $region89: #{double_conv.3} parent=31 // pred_check
        %p1750 = pneg %p140
      $region90: #{double_conv.3} parent=31 // pred_check_branch
        %1752 = sbr.rel (%p1750) target = $region92
      $region91: #{double_conv.3} parent=31 // pred_region
        _
      $region92: #{double_conv.3} parent=31 // pred_fallthru
        _
    $region32: #{double_conv.3} parent=5 // pred_fallthru
      _
    %p1753 = scmp.le.s32.totalorder 2, %s12
    // Predicated region
    $region93: #{double_conv.3} parent=5 // pred_check
      %p1754 = pneg %p1753
    $region94: #{double_conv.3} parent=5 // pred_check_branch
      %1756 = sbr.rel (%p1754) target = $region96
    $region95: #{double_conv.3} parent=5 // pred_region
      %s1757 = ssub.s32 %s12, 2
      // Predicated region
      $region97: #{double_conv.3} parent=95 // pred_check
        %p1758 = pneg %p118
      $region98: #{double_conv.3} parent=95 // pred_check_branch
        %1760 = sbr.rel (%p1758) target = $region100
      $region99: #{double_conv.3} parent=95 // pred_region
        %s1761 = smul.u32 8, %s24
        %p1762 = scmp.lt.s32.totalorder %s23, 1
        %s1763 = scalar_select %p1762, %s23, 1
        %p1764 = scmp.lt.s32.totalorder %s1761, 15
        %s1765 = scalar_select %p1764, %s1761, 15
        %s1766 = smul.addr %s1765, 2
        %s1767 = smul.addr %s1763, 32
        %s1768 = sadd.s32 %s1766, %s1767
        %s1769 = smul.addr %s1768, 8
        %s1770 = scalar_lea.vmem %s4, %s1769
      $region100: #{double_conv.3} parent=95 // pred_fallthru
        _
      // Predicated region
      $region101: #{double_conv.3} parent=95 // pred_check
        %p1771 = pneg %p146
      $region102: #{double_conv.3} parent=95 // pred_check_branch
        %1773 = sbr.rel (%p1771) target = $region104
      $region103: #{double_conv.3} parent=95 // pred_region
        %p1774 = scmp.lt.s32.totalorder %s23, 1
        %s1775 = scalar_select %p1774, %s23, 1
        %p1776 = scmp.lt.s32.totalorder %s24, 1
        %s1777 = scalar_select %p1776, %s24, 1
        %s1778 = smul.addr %s1775, 2
        %s1779 = sadd.s32 %s1777, %s1778
        %s1780 = smul.addr %s1779, 8
        %s1781 = scalar_lea.vmem %s5, %s1780
      $region104: #{double_conv.3} parent=95 // pred_fallthru
        _
    $region96: #{double_conv.3} parent=5 // pred_fallthru
      _
  $region6: #{double_conv.3} parent=0 // loop_footer
    %s16 = sadd.s32 1, %s12
  $region7: #{double_conv.3} parent=0 // loop_footer_branch
    %11 = sbr.rel target = $region3
  $region8: #{double_conv.3} parent=0 // loop_exit
    _
  %1782 = vsyncmov [#allocation3]
  %s1783 = vpop.sfrf %1782
  %p1784 = scmp.eq.s32.totalorder %s1783, 0
  %p1785 = pneg %p1784
  %1787 = shalt.err (%p1785)
  %s1788 = scalar_lea.sflag [#allocation3], 1
  %1789 = vsyncmov %s1788
  %s1790 = vpop.sfrf %1789
  %p1791 = scmp.eq.s32.totalorder %s1790, 0
  %p1792 = pneg %p1791
  %1794 = shalt.err (%p1792)

</llo_original>
